<compile_context>
chip_gen: v7x
topology: tpu7x:2x2x1
jax: 0.10.0
libtpu: 0.0.40
codegen_flags: <defaults>
</compile_context>

<pallas_src>
import functools

import jax
import jax.numpy as jnp
from jax.experimental import pallas as pl
from jax.experimental.pallas import tpu as pltpu


def _round_up(x, m):
    return ((x + m - 1) // m) * m


def _leaky_relu(v, slope=0.01):
    # max(v, slope*v) == LeakyReLU(v) for 0 < slope < 1; one vmax per element.
    return jnp.maximum(v, slope * v)


def _affine(a, w_ref, b_ref):
    w = w_ref[...]
    return (
        jnp.dot(a.astype(w.dtype), w, preferred_element_type=jnp.float32)
        + b_ref[...]
    )


# ----------------------------------------------------------------------------
# Pallas kernel: fused VAE forward for one batch tile
# ----------------------------------------------------------------------------
def _vae_kernel(
    # per-tile inputs
    x_ref, eps_ref,
    # encoder
    w_e1_ref, b_e1_ref, w_e2_ref, b_e2_ref, w_e3_ref, b_e3_ref,
    # fused (and lane-padded) mu|logvar heads
    w_hd_ref, b_hd_ref,
    # decoder (last layer lane-padded)
    w_d1_ref, b_d1_ref, w_d2_ref, b_d2_ref, w_d3_ref, b_d3_ref,
    # per-tile outputs (lane-dense)
    recon_ref, mulv_ref,
    *, latent_dim: int,
):
    x = x_ref[...]

    # ---- encoder: Linear -> LeakyReLU -> Linear -> LeakyReLU -> Linear ----
    h = _leaky_relu(_affine(x, w_e1_ref, b_e1_ref))
    h = _leaky_relu(_affine(h, w_e2_ref, b_e2_ref))
    enc = _affine(h, w_e3_ref, b_e3_ref)

    # ---- fused mu/logvar heads: one (L, HP) matmul, lane-dense result ----
    heads = _affine(enc, w_hd_ref, b_hd_ref)           # (TB, HP)
    mu = heads[:, :latent_dim]
    logvar = heads[:, latent_dim:2 * latent_dim]

    # ---- reparameterization: z = mu + eps * exp(0.5 * logvar) (f32) ----
    z = mu + eps_ref[...] * jnp.exp(0.5 * logvar)

    # ---- decoder: Linear -> LeakyReLU -> Linear -> LeakyReLU -> Linear ----
    d = _leaky_relu(_affine(z, w_d1_ref, b_d1_ref))
    d = _leaky_relu(_affine(d, w_d2_ref, b_d2_ref))
    recon = _affine(d, w_d3_ref, b_d3_ref)             # (TB, D_pad)

    recon_ref[...] = recon.astype(recon_ref.dtype)     # lane-dense store
    mulv_ref[...] = heads.astype(mulv_ref.dtype)       # lane-dense store


# ----------------------------------------------------------------------------
# Wrapper
# ----------------------------------------------------------------------------
@functools.partial(
    jax.jit,
    static_argnames=("tile_b", "compute_dtype", "single_buffer_weights"),
)
def contrast_vae_forward(
    x, eps, params, *, tile_b=128,
    compute_dtype=jnp.float32, single_buffer_weights=True,
):
    """Returns (recon, mu, logvar), matching ContrastVAE_2D.forward."""
    B, D = x.shape
    L = eps.shape[1]
    H1 = params["w_e1"].shape[1]
    H2 = params["w_e2"].shape[1]

    # Lane-dense output widths (multiples of 128) -> unmasked output stores.
    d_pad = _round_up(D, 128)
    hp = _round_up(2 * L, 128)

    # Fuse the two latent heads (same K-reduction order, numerically identical
    # to separate dots) and zero-pad their output columns to hp lanes.
    w_hd = jnp.concatenate([params["w_mu"], params["w_lv"]], axis=1)  # (L, 2L)
    b_hd = jnp.concatenate([params["b_mu"], params["b_lv"]], axis=1)  # (1, 2L)
    w_hd = jnp.pad(w_hd, ((0, 0), (0, hp - 2 * L)))
    b_hd = jnp.pad(b_hd, ((0, 0), (0, hp - 2 * L)))

    # Zero-pad the decoder output layer to d_pad lanes.
    w_d3 = jnp.pad(params["w_d3"], ((0, 0), (0, d_pad - D)))
    b_d3 = jnp.pad(params["b_d3"], ((0, 0), (0, d_pad - D)))

    cast_w = lambda w: w.astype(compute_dtype)   # weights only; biases stay f32
    weight_args = (
        cast_w(params["w_e1"]), params["b_e1"],
        cast_w(params["w_e2"]), params["b_e2"],
        cast_w(params["w_e3"]), params["b_e3"],
        cast_w(w_hd), b_hd,
        cast_w(params["w_d1"]), params["b_d1"],
        cast_w(params["w_d2"]), params["b_d2"],
        cast_w(w_d3), b_d3,
    )

    # Batch tile: fill the MXU M dim, but never exceed the (8-rounded) batch.
    tb = max(8, min(_round_up(tile_b, 8), _round_up(B, 8)))
    grid = (pl.cdiv(B, tb),)   # ragged last block is masked by Pallas

    def batch_map(i):
        return (i, 0)

    def const_map(i):
        return (0, 0)

    # Constant-index weights: request single buffering (halves their VMEM
    # footprint); caller falls back to default double-buffering if rejected.
    w_kwargs = (
        dict(pipeline_mode=pl.Buffered(1)) if single_buffer_weights else {}
    )

    in_specs = [
        pl.BlockSpec((tb, D), batch_map),   # x tile
        pl.BlockSpec((tb, L), batch_map),   # eps tile
    ] + [
        pl.BlockSpec(w.shape, const_map, **w_kwargs) for w in weight_args
    ]

    out_specs = (
        pl.BlockSpec((tb, d_pad), batch_map),   # recon tile (lane-dense)
        pl.BlockSpec((tb, hp), batch_map),      # fused mu|logvar tile (lane-dense)
    )
    out_shape = (
        jax.ShapeDtypeStruct((B, d_pad), jnp.float32),
        jax.ShapeDtypeStruct((B, hp), jnp.float32),
    )

    # Advisory cost estimate: 7 matmuls + the exp in the reparameterization.
    flops = 2 * B * (
        D * H1 + H1 * H2 + H2 * L + L * hp + L * H2 + H2 * H1 + H1 * d_pad
    )
    bytes_accessed = int(
        x.size * x.dtype.itemsize
        + eps.size * eps.dtype.itemsize
        + sum(int(w.size) * w.dtype.itemsize for w in weight_args)
        + (B * d_pad + B * hp) * 4
    )
    cost = pl.CostEstimate(
        flops=int(flops), transcendentals=int(B * L),
        bytes_accessed=bytes_accessed,
    )

    recon_p, mulv_p = pl.pallas_call(
        functools.partial(_vae_kernel, latent_dim=L),
        grid=grid,
        in_specs=in_specs,
        out_specs=out_specs,
        out_shape=out_shape,
        compiler_params=pltpu.CompilerParams(
            dimension_semantics=("parallel",),    # megacore-shard batch tiles
            vmem_limit_bytes=32 * 1024 * 1024,    # safe on v5e/v6e/v7x
        ),
        cost_estimate=cost,
    )(x, eps, *weight_args)

    recon = recon_p[:, :D]
    mu = mulv_p[:, :L]
    logvar = mulv_p[:, L:2 * L]
    return recon, mu, logvar


# ----------------------------------------------------------------------------
# Deterministic parameter init (xavier_uniform_ weights, zero biases),
# mirroring the module's weights_init for nn.Linear layers.
# ----------------------------------------------------------------------------
def xavier_uniform(key, fan_in, fan_out):
    limit = jnp.sqrt(6.0 / (fan_in + fan_out))
    # stored as (in, out) so the kernel does x @ W
    return jax.random.uniform(
        key, (fan_in, fan_out), dtype=jnp.float32, minval=-limit, maxval=limit
    )


def init_params(key, input_dim, hidden_dim_1, hidden_dim_2, latent_dim):
    keys = jax.random.split(key, 8)
    p = {}
    p["w_e1"] = xavier_uniform(keys[0], input_dim, hidden_dim_1)
    p["b_e1"] = jnp.zeros((1, hidden_dim_1), jnp.float32)
    p["w_e2"] = xavier_uniform(keys[1], hidden_dim_1, hidden_dim_2)
    p["b_e2"] = jnp.zeros((1, hidden_dim_2), jnp.float32)
    p["w_e3"] = xavier_uniform(keys[2], hidden_dim_2, latent_dim)
    p["b_e3"] = jnp.zeros((1, latent_dim), jnp.float32)
    p["w_mu"] = xavier_uniform(keys[3], latent_dim, latent_dim)
    p["b_mu"] = jnp.zeros((1, latent_dim), jnp.float32)
    p["w_lv"] = xavier_uniform(keys[4], latent_dim, latent_dim)
    p["b_lv"] = jnp.zeros((1, latent_dim), jnp.float32)
    p["w_d1"] = xavier_uniform(keys[5], latent_dim, hidden_dim_2)
    p["b_d1"] = jnp.zeros((1, hidden_dim_2), jnp.float32)
    p["w_d2"] = xavier_uniform(keys[6], hidden_dim_2, hidden_dim_1)
    p["b_d2"] = jnp.zeros((1, hidden_dim_1), jnp.float32)
    p["w_d3"] = xavier_uniform(keys[7], hidden_dim_1, input_dim)
    p["b_d3"] = jnp.zeros((1, input_dim), jnp.float32)
    return p


# ----------------------------------------------------------------------------
# Pure-JAX reference for sanity checking
# ----------------------------------------------------------------------------
def reference_forward(x, eps, p):
    lrelu = lambda v: jnp.where(v > 0, v, 0.01 * v)
    h = lrelu(x @ p["w_e1"] + p["b_e1"])
    h = lrelu(h @ p["w_e2"] + p["b_e2"])
    enc = h @ p["w_e3"] + p["b_e3"]
    mu = enc @ p["w_mu"] + p["b_mu"]
    logvar = enc @ p["w_lv"] + p["b_lv"]
    z = mu + eps * jnp.exp(0.5 * logvar)
    d = lrelu(z @ p["w_d1"] + p["b_d1"])
    d = lrelu(d @ p["w_d2"] + p["b_d2"])
    recon = d @ p["w_d3"] + p["b_d3"]
    return recon, mu, logvar


if __name__ == "__main__":
    # Small, module-consistent shapes; batch=200 gives 2 grid steps at the
    # 128-row tile (pipeline + megacore exercised) and a ragged last block.
    batch = 200
    input_dim = 128
    hidden_dim_1 = 64
    hidden_dim_2 = 64
    latent_dim = 32

    key = jax.random.PRNGKey(0)
    k_x, k_eps, k_p = jax.random.split(key, 3)

    x = jax.random.normal(k_x, (batch, input_dim), dtype=jnp.float32)
    eps = jax.random.normal(k_eps, (batch, latent_dim), dtype=jnp.float32)
    params = init_params(k_p, input_dim, hidden_dim_1, hidden_dim_2, latent_dim)

    r_ref, mu_ref, lv_ref = reference_forward(x, eps, params)

    def run(compute_dtype, single_buffer):
        out = contrast_vae_forward(
            x, eps, params, tile_b=128,
            compute_dtype=compute_dtype,
            single_buffer_weights=single_buffer,
        )
        jax.block_until_ready(out)
        return out

    def check_f32(outs):
        recon, mu, logvar = outs
        ok = (
            recon.shape == (batch, input_dim)
            and mu.shape == (batch, latent_dim)
            and logvar.shape == (batch, latent_dim)
            and bool(jnp.allclose(recon, r_ref, atol=1e-3, rtol=1e-3))
            and bool(jnp.allclose(mu, mu_ref, atol=1e-3, rtol=1e-3))
            and bool(jnp.allclose(logvar, lv_ref, atol=1e-3, rtol=1e-3))
        )
        return ok

    # f32 path; try single-buffered resident weights first, fall back to
    # default double-buffering if the installed JAX rejects / mishandles it.
    single_buffer = True
    try:
        outs = run(jnp.float32, True)
        if not check_f32(outs):
            raise ValueError("single-buffered weight path mismatch")
    except Exception:
        single_buffer = False
        outs = run(jnp.float32, False)

    assert check_f32(outs), "f32 Pallas forward does not match reference"

    # bf16 MXU-input variant (v6e/v7x recommendation): f32 accumulation,
    # looser tolerance vs the f32 reference.
    recon_b, mu_b, logvar_b = run(jnp.bfloat16, single_buffer)
    assert jnp.allclose(recon_b, r_ref, atol=2e-1, rtol=0.0)
    assert jnp.allclose(mu_b, mu_ref, atol=2e-1, rtol=0.0)
    assert jnp.allclose(logvar_b, lv_ref, atol=2e-1, rtol=0.0)

    print("KERNEL_OK")
</pallas_src>

<mosaic_0001>
module attributes {stable_mosaic.version = 11 : i64} {
  func.func @_vae_kernel(%arg0: i32, %arg1: memref<128x128xf32, #tpu.memory_space<vmem>>, %arg2: memref<128x32xf32, #tpu.memory_space<vmem>>, %arg3: memref<128x64xf32, #tpu.memory_space<vmem>>, %arg4: memref<1x64xf32, #tpu.memory_space<vmem>>, %arg5: memref<64x64xf32, #tpu.memory_space<vmem>>, %arg6: memref<1x64xf32, #tpu.memory_space<vmem>>, %arg7: memref<64x32xf32, #tpu.memory_space<vmem>>, %arg8: memref<1x32xf32, #tpu.memory_space<vmem>>, %arg9: memref<32x128xf32, #tpu.memory_space<vmem>>, %arg10: memref<1x128xf32, #tpu.memory_space<vmem>>, %arg11: memref<32x64xf32, #tpu.memory_space<vmem>>, %arg12: memref<1x64xf32, #tpu.memory_space<vmem>>, %arg13: memref<64x64xf32, #tpu.memory_space<vmem>>, %arg14: memref<1x64xf32, #tpu.memory_space<vmem>>, %arg15: memref<64x128xf32, #tpu.memory_space<vmem>>, %arg16: memref<1x128xf32, #tpu.memory_space<vmem>>, %arg17: memref<128x128xf32, #tpu.memory_space<vmem>>, %arg18: memref<128x128xf32, #tpu.memory_space<vmem>>) attributes {dimension_semantics = [#tpu.dimension_semantics<parallel>], iteration_bounds = array<i64: 2>, scalar_prefetch = 0 : i64, scratch_operands = 0 : i64, tpu.core_type = #tpu.core_type<tc>, window_params = [{transform_indices = @transform_0, window_bounds = array<i64: 128, 128>}, {transform_indices = @transform_1, window_bounds = array<i64: 128, 32>}, {pipeline_mode = #tpu.pipeline_mode<synchronous>, transform_indices = @transform_2, window_bounds = array<i64: 128, 64>}, {pipeline_mode = #tpu.pipeline_mode<synchronous>, transform_indices = @transform_3, window_bounds = array<i64: 1, 64>}, {pipeline_mode = #tpu.pipeline_mode<synchronous>, transform_indices = @transform_4, window_bounds = array<i64: 64, 64>}, {pipeline_mode = #tpu.pipeline_mode<synchronous>, transform_indices = @transform_5, window_bounds = array<i64: 1, 64>}, {pipeline_mode = #tpu.pipeline_mode<synchronous>, transform_indices = @transform_6, window_bounds = array<i64: 64, 32>}, {pipeline_mode = #tpu.pipeline_mode<synchronous>, transform_indices = @transform_7, window_bounds = array<i64: 1, 32>}, {pipeline_mode = #tpu.pipeline_mode<synchronous>, transform_indices = @transform_8, window_bounds = array<i64: 32, 128>}, {pipeline_mode = #tpu.pipeline_mode<synchronous>, transform_indices = @transform_9, window_bounds = array<i64: 1, 128>}, {pipeline_mode = #tpu.pipeline_mode<synchronous>, transform_indices = @transform_10, window_bounds = array<i64: 32, 64>}, {pipeline_mode = #tpu.pipeline_mode<synchronous>, transform_indices = @transform_11, window_bounds = array<i64: 1, 64>}, {pipeline_mode = #tpu.pipeline_mode<synchronous>, transform_indices = @transform_12, window_bounds = array<i64: 64, 64>}, {pipeline_mode = #tpu.pipeline_mode<synchronous>, transform_indices = @transform_13, window_bounds = array<i64: 1, 64>}, {pipeline_mode = #tpu.pipeline_mode<synchronous>, transform_indices = @transform_14, window_bounds = array<i64: 64, 128>}, {pipeline_mode = #tpu.pipeline_mode<synchronous>, transform_indices = @transform_15, window_bounds = array<i64: 1, 128>}, {transform_indices = @transform_16, window_bounds = array<i64: 128, 128>}, {transform_indices = @transform_17, window_bounds = array<i64: 128, 128>}]} {
    %c0 = arith.constant 0 : index
    %c0_0 = arith.constant 0 : index
    %0 = vector.load %arg1[%c0, %c0_0] : memref<128x128xf32, #tpu.memory_space<vmem>>, vector<128x128xf32>
    %c0_1 = arith.constant 0 : index
    %c0_2 = arith.constant 0 : index
    %1 = vector.load %arg3[%c0_1, %c0_2] : memref<128x64xf32, #tpu.memory_space<vmem>>, vector<128x64xf32>
    %cst = arith.constant dense<0.000000e+00> : vector<128x64xf32>
    %2 = tpu.matmul %0, %1, %cst {dimension_numbers = #tpu.dot_dimension_numbers<[1], [0], [0], [1], [0, 0, 1, 1], [], []>} : vector<128x128xf32>, vector<128x64xf32>, vector<128x64xf32> -> vector<128x64xf32>
    %c0_3 = arith.constant 0 : index
    %c0_4 = arith.constant 0 : index
    %3 = vector.load %arg4[%c0_3, %c0_4] : memref<1x64xf32, #tpu.memory_space<vmem>>, vector<1x64xf32>
    %4 = vector.broadcast %3 : vector<1x64xf32> to vector<128x64xf32>
    %5 = arith.addf %2, %4 : vector<128x64xf32>
    %cst_5 = arith.constant 0.00999999977 : f32
    %6 = vector.broadcast %cst_5 : f32 to vector<128x64xf32>
    %7 = arith.mulf %6, %5 : vector<128x64xf32>
    %8 = arith.maximumf %5, %7 : vector<128x64xf32>
    %c0_6 = arith.constant 0 : index
    %c0_7 = arith.constant 0 : index
    %9 = vector.load %arg5[%c0_6, %c0_7] : memref<64x64xf32, #tpu.memory_space<vmem>>, vector<64x64xf32>
    %cst_8 = arith.constant dense<0.000000e+00> : vector<128x64xf32>
    %10 = tpu.matmul %8, %9, %cst_8 {dimension_numbers = #tpu.dot_dimension_numbers<[1], [0], [0], [1], [0, 0, 1, 1], [], []>} : vector<128x64xf32>, vector<64x64xf32>, vector<128x64xf32> -> vector<128x64xf32>
    %c0_9 = arith.constant 0 : index
    %c0_10 = arith.constant 0 : index
    %11 = vector.load %arg6[%c0_9, %c0_10] : memref<1x64xf32, #tpu.memory_space<vmem>>, vector<1x64xf32>
    %12 = vector.broadcast %11 : vector<1x64xf32> to vector<128x64xf32>
    %13 = arith.addf %10, %12 : vector<128x64xf32>
    %cst_11 = arith.constant 0.00999999977 : f32
    %14 = vector.broadcast %cst_11 : f32 to vector<128x64xf32>
    %15 = arith.mulf %14, %13 : vector<128x64xf32>
    %16 = arith.maximumf %13, %15 : vector<128x64xf32>
    %c0_12 = arith.constant 0 : index
    %c0_13 = arith.constant 0 : index
    %17 = vector.load %arg7[%c0_12, %c0_13] : memref<64x32xf32, #tpu.memory_space<vmem>>, vector<64x32xf32>
    %cst_14 = arith.constant dense<0.000000e+00> : vector<128x32xf32>
    %18 = tpu.matmul %16, %17, %cst_14 {dimension_numbers = #tpu.dot_dimension_numbers<[1], [0], [0], [1], [0, 0, 1, 1], [], []>} : vector<128x64xf32>, vector<64x32xf32>, vector<128x32xf32> -> vector<128x32xf32>
    %c0_15 = arith.constant 0 : index
    %c0_16 = arith.constant 0 : index
    %19 = vector.load %arg8[%c0_15, %c0_16] : memref<1x32xf32, #tpu.memory_space<vmem>>, vector<1x32xf32>
    %20 = vector.broadcast %19 : vector<1x32xf32> to vector<128x32xf32>
    %21 = arith.addf %18, %20 : vector<128x32xf32>
    %c0_17 = arith.constant 0 : index
    %c0_18 = arith.constant 0 : index
    %22 = vector.load %arg9[%c0_17, %c0_18] : memref<32x128xf32, #tpu.memory_space<vmem>>, vector<32x128xf32>
    %cst_19 = arith.constant dense<0.000000e+00> : vector<128x128xf32>
    %23 = tpu.matmul %21, %22, %cst_19 {dimension_numbers = #tpu.dot_dimension_numbers<[1], [0], [0], [1], [0, 0, 1, 1], [], []>} : vector<128x32xf32>, vector<32x128xf32>, vector<128x128xf32> -> vector<128x128xf32>
    %c0_20 = arith.constant 0 : index
    %c0_21 = arith.constant 0 : index
    %24 = vector.load %arg10[%c0_20, %c0_21] : memref<1x128xf32, #tpu.memory_space<vmem>>, vector<1x128xf32>
    %25 = vector.broadcast %24 : vector<1x128xf32> to vector<128x128xf32>
    %26 = arith.addf %23, %25 : vector<128x128xf32>
    %27 = vector.extract_strided_slice %26 {offsets = [0, 0], sizes = [128, 32], strides = [1, 1]} : vector<128x128xf32> to vector<128x32xf32>
    %28 = vector.extract_strided_slice %26 {offsets = [0, 32], sizes = [128, 32], strides = [1, 1]} : vector<128x128xf32> to vector<128x32xf32>
    %c0_22 = arith.constant 0 : index
    %c0_23 = arith.constant 0 : index
    %29 = vector.load %arg2[%c0_22, %c0_23] : memref<128x32xf32, #tpu.memory_space<vmem>>, vector<128x32xf32>
    %cst_24 = arith.constant 5.000000e-01 : f32
    %30 = vector.broadcast %cst_24 : f32 to vector<128x32xf32>
    %31 = arith.mulf %30, %28 : vector<128x32xf32>
    %32 = math.exp %31 : vector<128x32xf32>
    %33 = arith.mulf %29, %32 : vector<128x32xf32>
    %34 = arith.addf %27, %33 : vector<128x32xf32>
    %c0_25 = arith.constant 0 : index
    %c0_26 = arith.constant 0 : index
    %35 = vector.load %arg11[%c0_25, %c0_26] : memref<32x64xf32, #tpu.memory_space<vmem>>, vector<32x64xf32>
    %cst_27 = arith.constant dense<0.000000e+00> : vector<128x64xf32>
    %36 = tpu.matmul %34, %35, %cst_27 {dimension_numbers = #tpu.dot_dimension_numbers<[1], [0], [0], [1], [0, 0, 1, 1], [], []>} : vector<128x32xf32>, vector<32x64xf32>, vector<128x64xf32> -> vector<128x64xf32>
    %c0_28 = arith.constant 0 : index
    %c0_29 = arith.constant 0 : index
    %37 = vector.load %arg12[%c0_28, %c0_29] : memref<1x64xf32, #tpu.memory_space<vmem>>, vector<1x64xf32>
    %38 = vector.broadcast %37 : vector<1x64xf32> to vector<128x64xf32>
    %39 = arith.addf %36, %38 : vector<128x64xf32>
    %cst_30 = arith.constant 0.00999999977 : f32
    %40 = vector.broadcast %cst_30 : f32 to vector<128x64xf32>
    %41 = arith.mulf %40, %39 : vector<128x64xf32>
    %42 = arith.maximumf %39, %41 : vector<128x64xf32>
    %c0_31 = arith.constant 0 : index
    %c0_32 = arith.constant 0 : index
    %43 = vector.load %arg13[%c0_31, %c0_32] : memref<64x64xf32, #tpu.memory_space<vmem>>, vector<64x64xf32>
    %cst_33 = arith.constant dense<0.000000e+00> : vector<128x64xf32>
    %44 = tpu.matmul %42, %43, %cst_33 {dimension_numbers = #tpu.dot_dimension_numbers<[1], [0], [0], [1], [0, 0, 1, 1], [], []>} : vector<128x64xf32>, vector<64x64xf32>, vector<128x64xf32> -> vector<128x64xf32>
    %c0_34 = arith.constant 0 : index
    %c0_35 = arith.constant 0 : index
    %45 = vector.load %arg14[%c0_34, %c0_35] : memref<1x64xf32, #tpu.memory_space<vmem>>, vector<1x64xf32>
    %46 = vector.broadcast %45 : vector<1x64xf32> to vector<128x64xf32>
    %47 = arith.addf %44, %46 : vector<128x64xf32>
    %cst_36 = arith.constant 0.00999999977 : f32
    %48 = vector.broadcast %cst_36 : f32 to vector<128x64xf32>
    %49 = arith.mulf %48, %47 : vector<128x64xf32>
    %50 = arith.maximumf %47, %49 : vector<128x64xf32>
    %c0_37 = arith.constant 0 : index
    %c0_38 = arith.constant 0 : index
    %51 = vector.load %arg15[%c0_37, %c0_38] : memref<64x128xf32, #tpu.memory_space<vmem>>, vector<64x128xf32>
    %cst_39 = arith.constant dense<0.000000e+00> : vector<128x128xf32>
    %52 = tpu.matmul %50, %51, %cst_39 {dimension_numbers = #tpu.dot_dimension_numbers<[1], [0], [0], [1], [0, 0, 1, 1], [], []>} : vector<128x64xf32>, vector<64x128xf32>, vector<128x128xf32> -> vector<128x128xf32>
    %c0_40 = arith.constant 0 : index
    %c0_41 = arith.constant 0 : index
    %53 = vector.load %arg16[%c0_40, %c0_41] : memref<1x128xf32, #tpu.memory_space<vmem>>, vector<1x128xf32>
    %54 = vector.broadcast %53 : vector<1x128xf32> to vector<128x128xf32>
    %55 = arith.addf %52, %54 : vector<128x128xf32>
    %c0_42 = arith.constant 0 : index
    %c0_43 = arith.constant 0 : index
    %56 = vector.load %arg17[%c0_42, %c0_43] : memref<128x128xf32, #tpu.memory_space<vmem>>, vector<128x128xf32>
    tpu.vector_store %arg17[%c0_42, %c0_43], %55 {strides = array<i32>} : memref<128x128xf32, #tpu.memory_space<vmem>>, vector<128x128xf32>,
    %c0_44 = arith.constant 0 : index
    %c0_45 = arith.constant 0 : index
    %57 = vector.load %arg18[%c0_44, %c0_45] : memref<128x128xf32, #tpu.memory_space<vmem>>, vector<128x128xf32>
    tpu.vector_store %arg18[%c0_44, %c0_45], %26 {strides = array<i32>} : memref<128x128xf32, #tpu.memory_space<vmem>>, vector<128x128xf32>,
    return
  }
  func.func @transform_0(%arg0: i32) -> (i32, i32) {
    %c0_i32 = arith.constant 0 : i32
    %c0_i32_0 = arith.constant 0 : i32
    return %arg0, %c0_i32 : i32, i32
  }
  func.func @transform_1(%arg0: i32) -> (i32, i32) {
    %c0_i32 = arith.constant 0 : i32
    %c0_i32_0 = arith.constant 0 : i32
    return %arg0, %c0_i32 : i32, i32
  }
  func.func @transform_2(%arg0: i32) -> (i32, i32) {
    %c0_i32 = arith.constant 0 : i32
    %c0_i32_0 = arith.constant 0 : i32
    %c0_i32_1 = arith.constant 0 : i32
    return %c0_i32, %c0_i32_0 : i32, i32
  }
  func.func @transform_3(%arg0: i32) -> (i32, i32) {
    %c0_i32 = arith.constant 0 : i32
    %c0_i32_0 = arith.constant 0 : i32
    %c0_i32_1 = arith.constant 0 : i32
    return %c0_i32, %c0_i32_0 : i32, i32
  }
  func.func @transform_4(%arg0: i32) -> (i32, i32) {
    %c0_i32 = arith.constant 0 : i32
    %c0_i32_0 = arith.constant 0 : i32
    %c0_i32_1 = arith.constant 0 : i32
    return %c0_i32, %c0_i32_0 : i32, i32
  }
  func.func @transform_5(%arg0: i32) -> (i32, i32) {
    %c0_i32 = arith.constant 0 : i32
    %c0_i32_0 = arith.constant 0 : i32
    %c0_i32_1 = arith.constant 0 : i32
    return %c0_i32, %c0_i32_0 : i32, i32
  }
  func.func @transform_6(%arg0: i32) -> (i32, i32) {
    %c0_i32 = arith.constant 0 : i32
    %c0_i32_0 = arith.constant 0 : i32
    %c0_i32_1 = arith.constant 0 : i32
    return %c0_i32, %c0_i32_0 : i32, i32
  }
  func.func @transform_7(%arg0: i32) -> (i32, i32) {
    %c0_i32 = arith.constant 0 : i32
    %c0_i32_0 = arith.constant 0 : i32
    %c0_i32_1 = arith.constant 0 : i32
    return %c0_i32, %c0_i32_0 : i32, i32
  }
  func.func @transform_8(%arg0: i32) -> (i32, i32) {
    %c0_i32 = arith.constant 0 : i32
    %c0_i32_0 = arith.constant 0 : i32
    %c0_i32_1 = arith.constant 0 : i32
    return %c0_i32, %c0_i32_0 : i32, i32
  }
  func.func @transform_9(%arg0: i32) -> (i32, i32) {
    %c0_i32 = arith.constant 0 : i32
    %c0_i32_0 = arith.constant 0 : i32
    %c0_i32_1 = arith.constant 0 : i32
    return %c0_i32, %c0_i32_0 : i32, i32
  }
  func.func @transform_10(%arg0: i32) -> (i32, i32) {
    %c0_i32 = arith.constant 0 : i32
    %c0_i32_0 = arith.constant 0 : i32
    %c0_i32_1 = arith.constant 0 : i32
    return %c0_i32, %c0_i32_0 : i32, i32
  }
  func.func @transform_11(%arg0: i32) -> (i32, i32) {
    %c0_i32 = arith.constant 0 : i32
    %c0_i32_0 = arith.constant 0 : i32
    %c0_i32_1 = arith.constant 0 : i32
    return %c0_i32, %c0_i32_0 : i32, i32
  }
  func.func @transform_12(%arg0: i32) -> (i32, i32) {
    %c0_i32 = arith.constant 0 : i32
    %c0_i32_0 = arith.constant 0 : i32
    %c0_i32_1 = arith.constant 0 : i32
    return %c0_i32, %c0_i32_0 : i32, i32
  }
  func.func @transform_13(%arg0: i32) -> (i32, i32) {
    %c0_i32 = arith.constant 0 : i32
    %c0_i32_0 = arith.constant 0 : i32
    %c0_i32_1 = arith.constant 0 : i32
    return %c0_i32, %c0_i32_0 : i32, i32
  }
  func.func @transform_14(%arg0: i32) -> (i32, i32) {
    %c0_i32 = arith.constant 0 : i32
    %c0_i32_0 = arith.constant 0 : i32
    %c0_i32_1 = arith.constant 0 : i32
    return %c0_i32, %c0_i32_0 : i32, i32
  }
  func.func @transform_15(%arg0: i32) -> (i32, i32) {
    %c0_i32 = arith.constant 0 : i32
    %c0_i32_0 = arith.constant 0 : i32
    %c0_i32_1 = arith.constant 0 : i32
    return %c0_i32, %c0_i32_0 : i32, i32
  }
  func.func @transform_16(%arg0: i32) -> (i32, i32) {
    %c0_i32 = arith.constant 0 : i32
    %c0_i32_0 = arith.constant 0 : i32
    return %arg0, %c0_i32 : i32, i32
  }
  func.func @transform_17(%arg0: i32) -> (i32, i32) {
    %c0_i32 = arith.constant 0 : i32
    %c0_i32_0 = arith.constant 0 : i32
    return %arg0, %c0_i32 : i32, i32
  }
}

module attributes {stable_mosaic.version = 11 : i64} {
  func.func @_vae_kernel(%arg0: i32, %arg1: memref<128x128xf32, #tpu.memory_space<vmem>>, %arg2: memref<128x32xf32, #tpu.memory_space<vmem>>, %arg3: memref<128x64xf32, #tpu.memory_space<vmem>>, %arg4: memref<1x64xf32, #tpu.memory_space<vmem>>, %arg5: memref<64x64xf32, #tpu.memory_space<vmem>>, %arg6: memref<1x64xf32, #tpu.memory_space<vmem>>, %arg7: memref<64x32xf32, #tpu.memory_space<vmem>>, %arg8: memref<1x32xf32, #tpu.memory_space<vmem>>, %arg9: memref<32x128xf32, #tpu.memory_space<vmem>>, %arg10: memref<1x128xf32, #tpu.memory_space<vmem>>, %arg11: memref<32x64xf32, #tpu.memory_space<vmem>>, %arg12: memref<1x64xf32, #tpu.memory_space<vmem>>, %arg13: memref<64x64xf32, #tpu.memory_space<vmem>>, %arg14: memref<1x64xf32, #tpu.memory_space<vmem>>, %arg15: memref<64x128xf32, #tpu.memory_space<vmem>>, %arg16: memref<1x128xf32, #tpu.memory_space<vmem>>, %arg17: memref<128x128xf32, #tpu.memory_space<vmem>>, %arg18: memref<128x128xf32, #tpu.memory_space<vmem>>) attributes {dimension_semantics = [#tpu.dimension_semantics<parallel>], iteration_bounds = array<i64: 2>, scalar_prefetch = 0 : i64, scratch_operands = 0 : i64, tpu.core_type = #tpu.core_type<tc>, window_params = [{transform_indices = @transform_0, window_bounds = array<i64: 128, 128>}, {transform_indices = @transform_1, window_bounds = array<i64: 128, 32>}, {pipeline_mode = #tpu.pipeline_mode<synchronous>, transform_indices = @transform_2, window_bounds = array<i64: 128, 64>}, {pipeline_mode = #tpu.pipeline_mode<synchronous>, transform_indices = @transform_3, window_bounds = array<i64: 1, 64>}, {pipeline_mode = #tpu.pipeline_mode<synchronous>, transform_indices = @transform_4, window_bounds = array<i64: 64, 64>}, {pipeline_mode = #tpu.pipeline_mode<synchronous>, transform_indices = @transform_5, window_bounds = array<i64: 1, 64>}, {pipeline_mode = #tpu.pipeline_mode<synchronous>, transform_indices = @transform_6, window_bounds = array<i64: 64, 32>}, {pipeline_mode = #tpu.pipeline_mode<synchronous>, transform_indices = @transform_7, window_bounds = array<i64: 1, 32>}, {pipeline_mode = #tpu.pipeline_mode<synchronous>, transform_indices = @transform_8, window_bounds = array<i64: 32, 128>}, {pipeline_mode = #tpu.pipeline_mode<synchronous>, transform_indices = @transform_9, window_bounds = array<i64: 1, 128>}, {pipeline_mode = #tpu.pipeline_mode<synchronous>, transform_indices = @transform_10, window_bounds = array<i64: 32, 64>}, {pipeline_mode = #tpu.pipeline_mode<synchronous>, transform_indices = @transform_11, window_bounds = array<i64: 1, 64>}, {pipeline_mode = #tpu.pipeline_mode<synchronous>, transform_indices = @transform_12, window_bounds = array<i64: 64, 64>}, {pipeline_mode = #tpu.pipeline_mode<synchronous>, transform_indices = @transform_13, window_bounds = array<i64: 1, 64>}, {pipeline_mode = #tpu.pipeline_mode<synchronous>, transform_indices = @transform_14, window_bounds = array<i64: 64, 128>}, {pipeline_mode = #tpu.pipeline_mode<synchronous>, transform_indices = @transform_15, window_bounds = array<i64: 1, 128>}, {transform_indices = @transform_16, window_bounds = array<i64: 128, 128>}, {transform_indices = @transform_17, window_bounds = array<i64: 128, 128>}]} {
    %c0 = arith.constant 0 : index
    %c0_0 = arith.constant 0 : index
    %0 = vector.load %arg1[%c0, %c0_0] : memref<128x128xf32, #tpu.memory_space<vmem>>, vector<128x128xf32>
    %c0_1 = arith.constant 0 : index
    %c0_2 = arith.constant 0 : index
    %1 = vector.load %arg3[%c0_1, %c0_2] : memref<128x64xf32, #tpu.memory_space<vmem>>, vector<128x64xf32>
    %cst = arith.constant dense<0.000000e+00> : vector<128x64xf32>
    %2 = tpu.matmul %0, %1, %cst {dimension_numbers = #tpu.dot_dimension_numbers<[1], [0], [0], [1], [0, 0, 1, 1], [], []>} : vector<128x128xf32>, vector<128x64xf32>, vector<128x64xf32> -> vector<128x64xf32>
    %c0_3 = arith.constant 0 : index
    %c0_4 = arith.constant 0 : index
    %3 = vector.load %arg4[%c0_3, %c0_4] : memref<1x64xf32, #tpu.memory_space<vmem>>, vector<1x64xf32>
    %4 = vector.broadcast %3 : vector<1x64xf32> to vector<128x64xf32>
    %5 = arith.addf %2, %4 : vector<128x64xf32>
    %cst_5 = arith.constant 0.00999999977 : f32
    %6 = vector.broadcast %cst_5 : f32 to vector<128x64xf32>
    %7 = arith.mulf %6, %5 : vector<128x64xf32>
    %8 = arith.maximumf %5, %7 : vector<128x64xf32>
    %c0_6 = arith.constant 0 : index
    %c0_7 = arith.constant 0 : index
    %9 = vector.load %arg5[%c0_6, %c0_7] : memref<64x64xf32, #tpu.memory_space<vmem>>, vector<64x64xf32>
    %cst_8 = arith.constant dense<0.000000e+00> : vector<128x64xf32>
    %10 = tpu.matmul %8, %9, %cst_8 {dimension_numbers = #tpu.dot_dimension_numbers<[1], [0], [0], [1], [0, 0, 1, 1], [], []>} : vector<128x64xf32>, vector<64x64xf32>, vector<128x64xf32> -> vector<128x64xf32>
    %c0_9 = arith.constant 0 : index
    %c0_10 = arith.constant 0 : index
    %11 = vector.load %arg6[%c0_9, %c0_10] : memref<1x64xf32, #tpu.memory_space<vmem>>, vector<1x64xf32>
    %12 = vector.broadcast %11 : vector<1x64xf32> to vector<128x64xf32>
    %13 = arith.addf %10, %12 : vector<128x64xf32>
    %cst_11 = arith.constant 0.00999999977 : f32
    %14 = vector.broadcast %cst_11 : f32 to vector<128x64xf32>
    %15 = arith.mulf %14, %13 : vector<128x64xf32>
    %16 = arith.maximumf %13, %15 : vector<128x64xf32>
    %c0_12 = arith.constant 0 : index
    %c0_13 = arith.constant 0 : index
    %17 = vector.load %arg7[%c0_12, %c0_13] : memref<64x32xf32, #tpu.memory_space<vmem>>, vector<64x32xf32>
    %cst_14 = arith.constant dense<0.000000e+00> : vector<128x32xf32>
    %18 = tpu.matmul %16, %17, %cst_14 {dimension_numbers = #tpu.dot_dimension_numbers<[1], [0], [0], [1], [0, 0, 1, 1], [], []>} : vector<128x64xf32>, vector<64x32xf32>, vector<128x32xf32> -> vector<128x32xf32>
    %c0_15 = arith.constant 0 : index
    %c0_16 = arith.constant 0 : index
    %19 = vector.load %arg8[%c0_15, %c0_16] : memref<1x32xf32, #tpu.memory_space<vmem>>, vector<1x32xf32>
    %20 = vector.broadcast %19 : vector<1x32xf32> to vector<128x32xf32>
    %21 = arith.addf %18, %20 : vector<128x32xf32>
    %c0_17 = arith.constant 0 : index
    %c0_18 = arith.constant 0 : index
    %22 = vector.load %arg9[%c0_17, %c0_18] : memref<32x128xf32, #tpu.memory_space<vmem>>, vector<32x128xf32>
    %cst_19 = arith.constant dense<0.000000e+00> : vector<128x128xf32>
    %23 = tpu.matmul %21, %22, %cst_19 {dimension_numbers = #tpu.dot_dimension_numbers<[1], [0], [0], [1], [0, 0, 1, 1], [], []>} : vector<128x32xf32>, vector<32x128xf32>, vector<128x128xf32> -> vector<128x128xf32>
    %c0_20 = arith.constant 0 : index
    %c0_21 = arith.constant 0 : index
    %24 = vector.load %arg10[%c0_20, %c0_21] : memref<1x128xf32, #tpu.memory_space<vmem>>, vector<1x128xf32>
    %25 = vector.broadcast %24 : vector<1x128xf32> to vector<128x128xf32>
    %26 = arith.addf %23, %25 : vector<128x128xf32>
    %27 = vector.extract_strided_slice %26 {offsets = [0, 0], sizes = [128, 32], strides = [1, 1]} : vector<128x128xf32> to vector<128x32xf32>
    %28 = vector.extract_strided_slice %26 {offsets = [0, 32], sizes = [128, 32], strides = [1, 1]} : vector<128x128xf32> to vector<128x32xf32>
    %c0_22 = arith.constant 0 : index
    %c0_23 = arith.constant 0 : index
    %29 = vector.load %arg2[%c0_22, %c0_23] : memref<128x32xf32, #tpu.memory_space<vmem>>, vector<128x32xf32>
    %cst_24 = arith.constant 5.000000e-01 : f32
    %30 = vector.broadcast %cst_24 : f32 to vector<128x32xf32>
    %31 = arith.mulf %30, %28 : vector<128x32xf32>
    %32 = math.exp %31 : vector<128x32xf32>
    %33 = arith.mulf %29, %32 : vector<128x32xf32>
    %34 = arith.addf %27, %33 : vector<128x32xf32>
    %c0_25 = arith.constant 0 : index
    %c0_26 = arith.constant 0 : index
    %35 = vector.load %arg11[%c0_25, %c0_26] : memref<32x64xf32, #tpu.memory_space<vmem>>, vector<32x64xf32>
    %cst_27 = arith.constant dense<0.000000e+00> : vector<128x64xf32>
    %36 = tpu.matmul %34, %35, %cst_27 {dimension_numbers = #tpu.dot_dimension_numbers<[1], [0], [0], [1], [0, 0, 1, 1], [], []>} : vector<128x32xf32>, vector<32x64xf32>, vector<128x64xf32> -> vector<128x64xf32>
    %c0_28 = arith.constant 0 : index
    %c0_29 = arith.constant 0 : index
    %37 = vector.load %arg12[%c0_28, %c0_29] : memref<1x64xf32, #tpu.memory_space<vmem>>, vector<1x64xf32>
    %38 = vector.broadcast %37 : vector<1x64xf32> to vector<128x64xf32>
    %39 = arith.addf %36, %38 : vector<128x64xf32>
    %cst_30 = arith.constant 0.00999999977 : f32
    %40 = vector.broadcast %cst_30 : f32 to vector<128x64xf32>
    %41 = arith.mulf %40, %39 : vector<128x64xf32>
    %42 = arith.maximumf %39, %41 : vector<128x64xf32>
    %c0_31 = arith.constant 0 : index
    %c0_32 = arith.constant 0 : index
    %43 = vector.load %arg13[%c0_31, %c0_32] : memref<64x64xf32, #tpu.memory_space<vmem>>, vector<64x64xf32>
    %cst_33 = arith.constant dense<0.000000e+00> : vector<128x64xf32>
    %44 = tpu.matmul %42, %43, %cst_33 {dimension_numbers = #tpu.dot_dimension_numbers<[1], [0], [0], [1], [0, 0, 1, 1], [], []>} : vector<128x64xf32>, vector<64x64xf32>, vector<128x64xf32> -> vector<128x64xf32>
    %c0_34 = arith.constant 0 : index
    %c0_35 = arith.constant 0 : index
    %45 = vector.load %arg14[%c0_34, %c0_35] : memref<1x64xf32, #tpu.memory_space<vmem>>, vector<1x64xf32>
    %46 = vector.broadcast %45 : vector<1x64xf32> to vector<128x64xf32>
    %47 = arith.addf %44, %46 : vector<128x64xf32>
    %cst_36 = arith.constant 0.00999999977 : f32
    %48 = vector.broadcast %cst_36 : f32 to vector<128x64xf32>
    %49 = arith.mulf %48, %47 : vector<128x64xf32>
    %50 = arith.maximumf %47, %49 : vector<128x64xf32>
    %c0_37 = arith.constant 0 : index
    %c0_38 = arith.constant 0 : index
    %51 = vector.load %arg15[%c0_37, %c0_38] : memref<64x128xf32, #tpu.memory_space<vmem>>, vector<64x128xf32>
    %cst_39 = arith.constant dense<0.000000e+00> : vector<128x128xf32>
    %52 = tpu.matmul %50, %51, %cst_39 {dimension_numbers = #tpu.dot_dimension_numbers<[1], [0], [0], [1], [0, 0, 1, 1], [], []>} : vector<128x64xf32>, vector<64x128xf32>, vector<128x128xf32> -> vector<128x128xf32>
    %c0_40 = arith.constant 0 : index
    %c0_41 = arith.constant 0 : index
    %53 = vector.load %arg16[%c0_40, %c0_41] : memref<1x128xf32, #tpu.memory_space<vmem>>, vector<1x128xf32>
    %54 = vector.broadcast %53 : vector<1x128xf32> to vector<128x128xf32>
    %55 = arith.addf %52, %54 : vector<128x128xf32>
    %c0_42 = arith.constant 0 : index
    %c0_43 = arith.constant 0 : index
    %56 = vector.load %arg17[%c0_42, %c0_43] : memref<128x128xf32, #tpu.memory_space<vmem>>, vector<128x128xf32>
    tpu.vector_store %arg17[%c0_42, %c0_43], %55 {strides = array<i32>} : memref<128x128xf32, #tpu.memory_space<vmem>>, vector<128x128xf32>,
    %c0_44 = arith.constant 0 : index
    %c0_45 = arith.constant 0 : index
    %57 = vector.load %arg18[%c0_44, %c0_45] : memref<128x128xf32, #tpu.memory_space<vmem>>, vector<128x128xf32>
    tpu.vector_store %arg18[%c0_44, %c0_45], %26 {strides = array<i32>} : memref<128x128xf32, #tpu.memory_space<vmem>>, vector<128x128xf32>,
    return
  }
  func.func @transform_0(%arg0: i32) -> (i32, i32) {
    %c0_i32 = arith.constant 0 : i32
    %c0_i32_0 = arith.constant 0 : i32
    return %arg0, %c0_i32 : i32, i32
  }
  func.func @transform_1(%arg0: i32) -> (i32, i32) {
    %c0_i32 = arith.constant 0 : i32
    %c0_i32_0 = arith.constant 0 : i32
    return %arg0, %c0_i32 : i32, i32
  }
  func.func @transform_2(%arg0: i32) -> (i32, i32) {
    %c0_i32 = arith.constant 0 : i32
    %c0_i32_0 = arith.constant 0 : i32
    %c0_i32_1 = arith.constant 0 : i32
    return %c0_i32, %c0_i32_0 : i32, i32
  }
  func.func @transform_3(%arg0: i32) -> (i32, i32) {
    %c0_i32 = arith.constant 0 : i32
    %c0_i32_0 = arith.constant 0 : i32
    %c0_i32_1 = arith.constant 0 : i32
    return %c0_i32, %c0_i32_0 : i32, i32
  }
  func.func @transform_4(%arg0: i32) -> (i32, i32) {
    %c0_i32 = arith.constant 0 : i32
    %c0_i32_0 = arith.constant 0 : i32
    %c0_i32_1 = arith.constant 0 : i32
    return %c0_i32, %c0_i32_0 : i32, i32
  }
  func.func @transform_5(%arg0: i32) -> (i32, i32) {
    %c0_i32 = arith.constant 0 : i32
    %c0_i32_0 = arith.constant 0 : i32
    %c0_i32_1 = arith.constant 0 : i32
    return %c0_i32, %c0_i32_0 : i32, i32
  }
  func.func @transform_6(%arg0: i32) -> (i32, i32) {
    %c0_i32 = arith.constant 0 : i32
    %c0_i32_0 = arith.constant 0 : i32
    %c0_i32_1 = arith.constant 0 : i32
    return %c0_i32, %c0_i32_0 : i32, i32
  }
  func.func @transform_7(%arg0: i32) -> (i32, i32) {
    %c0_i32 = arith.constant 0 : i32
    %c0_i32_0 = arith.constant 0 : i32
    %c0_i32_1 = arith.constant 0 : i32
    return %c0_i32, %c0_i32_0 : i32, i32
  }
  func.func @transform_8(%arg0: i32) -> (i32, i32) {
    %c0_i32 = arith.constant 0 : i32
    %c0_i32_0 = arith.constant 0 : i32
    %c0_i32_1 = arith.constant 0 : i32
    return %c0_i32, %c0_i32_0 : i32, i32
  }
  func.func @transform_9(%arg0: i32) -> (i32, i32) {
    %c0_i32 = arith.constant 0 : i32
    %c0_i32_0 = arith.constant 0 : i32
    %c0_i32_1 = arith.constant 0 : i32
    return %c0_i32, %c0_i32_0 : i32, i32
  }
  func.func @transform_10(%arg0: i32) -> (i32, i32) {
    %c0_i32 = arith.constant 0 : i32
    %c0_i32_0 = arith.constant 0 : i32
    %c0_i32_1 = arith.constant 0 : i32
    return %c0_i32, %c0_i32_0 : i32, i32
  }
  func.func @transform_11(%arg0: i32) -> (i32, i32) {
    %c0_i32 = arith.constant 0 : i32
    %c0_i32_0 = arith.constant 0 : i32
    %c0_i32_1 = arith.constant 0 : i32
    return %c0_i32, %c0_i32_0 : i32, i32
  }
  func.func @transform_12(%arg0: i32) -> (i32, i32) {
    %c0_i32 = arith.constant 0 : i32
    %c0_i32_0 = arith.constant 0 : i32
    %c0_i32_1 = arith.constant 0 : i32
    return %c0_i32, %c0_i32_0 : i32, i32
  }
  func.func @transform_13(%arg0: i32) -> (i32, i32) {
    %c0_i32 = arith.constant 0 : i32
    %c0_i32_0 = arith.constant 0 : i32
    %c0_i32_1 = arith.constant 0 : i32
    return %c0_i32, %c0_i32_0 : i32, i32
  }
  func.func @transform_14(%arg0: i32) -> (i32, i32) {
    %c0_i32 = arith.constant 0 : i32
    %c0_i32_0 = arith.constant 0 : i32
    %c0_i32_1 = arith.constant 0 : i32
    return %c0_i32, %c0_i32_0 : i32, i32
  }
  func.func @transform_15(%arg0: i32) -> (i32, i32) {
    %c0_i32 = arith.constant 0 : i32
    %c0_i32_0 = arith.constant 0 : i32
    %c0_i32_1 = arith.constant 0 : i32
    return %c0_i32, %c0_i32_0 : i32, i32
  }
  func.func @transform_16(%arg0: i32) -> (i32, i32) {
    %c0_i32 = arith.constant 0 : i32
    %c0_i32_0 = arith.constant 0 : i32
    return %arg0, %c0_i32 : i32, i32
  }
  func.func @transform_17(%arg0: i32) -> (i32, i32) {
    %c0_i32 = arith.constant 0 : i32
    %c0_i32_0 = arith.constant 0 : i32
    return %arg0, %c0_i32 : i32, i32
  }
}

</mosaic_0001>

<llo_original>
// kernel: contrast_vae_forward.1
$region0: #{contrast_vae_forward.1}
  #allocation0 [shape = 'u32[]', space=smem, size = 0x4, offset = 0x4, fixed_abs, tag = 'smem constant byte address 0x4 - core index']
  #allocation1 [shape = 'u32[144,128]{1,0:T(1,128)}', space=vmem, size = 0x12000, scoped, tag = 'internal scratch']
  %s0 = inlined_call_operand.vmem [shape: f32[200,128], index: 0, kind: input, shape index: {}]
  %s1 = inlined_call_operand.vmem [shape: f32[200,32], index: 1, kind: input, shape index: {}]
  %s2 = inlined_call_operand.vmem [shape: f32[128,64], index: 2, kind: input, shape index: {}]
  %s3 = inlined_call_operand.vmem [shape: f32[1,64], index: 3, kind: input, shape index: {}]
  %s4 = inlined_call_operand.vmem [shape: f32[64,64], index: 4, kind: input, shape index: {}]
  %s5 = inlined_call_operand.vmem [shape: f32[1,64], index: 5, kind: input, shape index: {}]
  %s6 = inlined_call_operand.vmem [shape: f32[64,32], index: 6, kind: input, shape index: {}]
  %s7 = inlined_call_operand.vmem [shape: f32[1,32], index: 7, kind: input, shape index: {}]
  %s8 = inlined_call_operand.vmem [shape: f32[32,128], index: 8, kind: input, shape index: {}]
  %s9 = inlined_call_operand.vmem [shape: f32[1,128], index: 9, kind: input, shape index: {}]
  %s10 = inlined_call_operand.vmem [shape: f32[32,64], index: 10, kind: input, shape index: {}]
  %s11 = inlined_call_operand.vmem [shape: f32[1,64], index: 11, kind: input, shape index: {}]
  %s12 = inlined_call_operand.vmem [shape: f32[64,64], index: 12, kind: input, shape index: {}]
  %s13 = inlined_call_operand.vmem [shape: f32[1,64], index: 13, kind: input, shape index: {}]
  %s14 = inlined_call_operand.vmem [shape: f32[64,128], index: 14, kind: input, shape index: {}]
  %s15 = inlined_call_operand.vmem [shape: f32[1,128], index: 15, kind: input, shape index: {}]
  %s16 = inlined_call_operand.hbm [shape: f32[200,128], index: 16, kind: output, shape index: {0}]
  %s17 = inlined_call_operand.vmem [shape: f32[200,128], index: 17, kind: output, shape index: {1}]
  %18 = xla_tuple %s16, %s17
  %s19 = sld [smem:[#allocation0]]
  $region153: #{contrast_vae_forward.1} parent=0
    _
  %s21 = ssub.s32 1, %s19
  %s22 = scalar_select 0, %s21, %s19
  $region1: #{contrast_vae_forward.1} parent=0
    #allocation2 [shape = 'u8[131072]{0}', space=vmem, size = 0x20000, scoped, tag = 'output window, operand 0']
    #allocation3 [shape = 's32[2]{0}', space=sflag, size = 0x8, scoped, tag = 'scoped memory for contrast_vae_forward.1']
    #allocation4 [shape = 'u8[131072]{0}', space=vmem, size = 0x20000, scoped, tag = 'output window, operand 1']
    %23 = vsyncpa [#allocation3], 0
    %s24 = scalar_lea.sflag [#allocation3], 1
    %25 = vsyncpa %s24, 0
    loop: start=0, step=1, limit=4
    $region2: #{contrast_vae_forward.1} parent=1 // loop_pre_header
      _
    $region3: #{contrast_vae_forward.1} parent=1 // loop_header
      %s27 = sphi 0, %s31
      %p28 = scmp.ge.s32.totalorder %s27, 4
      %s37 = sphi 0, %s39
      %s40 = sphi 0, %s37
      %s41 = sphi 0, %s40
      %s57 = sphi 0, %s41
      %s63 = sphi 0, %s65
      %s66 = sphi 0, %s63
      %s67 = sphi 0, %s66
      %s83 = sphi 0, %s67
      %s87 = sphi 0, %s87
      %s89 = sphi 0, %s87
      %s90 = sphi 0, %s89
      %s104 = sphi 0, %s90
      %s108 = sphi 0, %s108
      %s110 = sphi 0, %s108
      %s111 = sphi 0, %s110
      %s125 = sphi 0, %s111
      %s129 = sphi 0, %s129
      %s131 = sphi 0, %s129
      %s132 = sphi 0, %s131
      %s146 = sphi 0, %s132
      %s150 = sphi 0, %s150
      %s152 = sphi 0, %s150
      %s153 = sphi 0, %s152
      %s167 = sphi 0, %s153
      %s171 = sphi 0, %s171
      %s173 = sphi 0, %s171
      %s174 = sphi 0, %s173
      %s188 = sphi 0, %s174
      %s192 = sphi 0, %s192
      %s194 = sphi 0, %s192
      %s195 = sphi 0, %s194
      %s209 = sphi 0, %s195
      %s213 = sphi 0, %s213
      %s215 = sphi 0, %s213
      %s216 = sphi 0, %s215
      %s230 = sphi 0, %s216
      %s234 = sphi 0, %s234
      %s236 = sphi 0, %s234
      %s237 = sphi 0, %s236
      %s251 = sphi 0, %s237
      %s255 = sphi 0, %s255
      %s257 = sphi 0, %s255
      %s258 = sphi 0, %s257
      %s272 = sphi 0, %s258
      %s276 = sphi 0, %s276
      %s278 = sphi 0, %s276
      %s279 = sphi 0, %s278
      %s293 = sphi 0, %s279
      %s297 = sphi 0, %s297
      %s299 = sphi 0, %s297
      %s300 = sphi 0, %s299
      %s314 = sphi 0, %s300
      %s318 = sphi 0, %s318
      %s320 = sphi 0, %s318
      %s321 = sphi 0, %s320
      %s335 = sphi 0, %s321
      %s339 = sphi 0, %s339
      %s341 = sphi 0, %s339
      %s342 = sphi 0, %s341
      %s356 = sphi 0, %s342
      %s360 = sphi 0, %s360
      %s362 = sphi 0, %s360
      %s363 = sphi 0, %s362
      %s377 = sphi 0, %s363
      %s383 = sphi 0, %s385
      %s386 = sphi 0, %s383
      %s387 = sphi 0, %s386
      %s403 = sphi 0, %s387
      %s409 = sphi 0, %s411
      %s412 = sphi 0, %s409
      %s413 = sphi 0, %s412
      %s429 = sphi 0, %s413
    $region4: #{contrast_vae_forward.1} parent=1 // loop_header_branch
      %30 = sbr.rel (%p28) target = $region8
    $region5: #{contrast_vae_forward.1} parent=1 // loop_body
      %s32 = ssub.s32 %s27, 1
      %s33 = ssub.s32 %s27, 2
      %s34 = sadd.s32 %s27, 1
      %s35 = ssub.s32 %s27, %s34
      %p36 = scmp.eq.s32.totalorder %s35, 0
      %s38 = sadd.s32 %s37, 1
      %s39 = scalar_select %p36, %s37, %s38
      %p42 = pneg %p36
      %p43 = scmp.eq.s32.totalorder %s27, 1
      %p44 = por %p42, %p43
      %p45 = scmp.ne.s32.totalorder %s37, %s40
      %p46 = scmp.eq.s32.totalorder %s27, 0
      %p47 = por %p45, %p46
      %p48 = scmp.ne.s32.totalorder %s37, %s40
      %p49 = scmp.eq.s32.totalorder %s32, 1
      %p50 = por %p48, %p49
      %p51 = scmp.ne.s32.totalorder %s40, %s41
      %p52 = scmp.eq.s32.totalorder %s32, 0
      %p53 = por %p51, %p52
      %p54 = scmp.ne.s32.totalorder %s40, %s41
      %p55 = scmp.eq.s32.totalorder %s33, 1
      %p56 = por %p54, %p55
      %p58 = scmp.ne.s32.totalorder %s41, %s57
      %p59 = scmp.eq.s32.totalorder %s33, 0
      %p60 = por %p58, %p59
      %s61 = ssub.s32 %s27, %s34
      %p62 = scmp.eq.s32.totalorder %s61, 0
      %s64 = sadd.s32 %s63, 1
      %s65 = scalar_select %p62, %s63, %s64
      %p68 = pneg %p62
      %p69 = scmp.eq.s32.totalorder %s27, 1
      %p70 = por %p68, %p69
      %p71 = scmp.ne.s32.totalorder %s63, %s66
      %p72 = scmp.eq.s32.totalorder %s27, 0
      %p73 = por %p71, %p72
      %p74 = scmp.ne.s32.totalorder %s63, %s66
      %p75 = scmp.eq.s32.totalorder %s32, 1
      %p76 = por %p74, %p75
      %p77 = scmp.ne.s32.totalorder %s66, %s67
      %p78 = scmp.eq.s32.totalorder %s32, 0
      %p79 = por %p77, %p78
      %p80 = scmp.ne.s32.totalorder %s66, %s67
      %p81 = scmp.eq.s32.totalorder %s33, 1
      %p82 = por %p80, %p81
      %p84 = scmp.ne.s32.totalorder %s67, %s83
      %p85 = scmp.eq.s32.totalorder %s33, 0
      %p86 = por %p84, %p85
      %s88 = sadd.s32 %s87, 1
      %p91 = scmp.eq.s32.totalorder %s27, 1
      %p92 = scmp.ne.s32.totalorder %s87, %s89
      %p93 = scmp.eq.s32.totalorder %s27, 0
      %p94 = por %p92, %p93
      %p95 = scmp.ne.s32.totalorder %s87, %s89
      %p96 = scmp.eq.s32.totalorder %s32, 1
      %p97 = por %p95, %p96
      %p98 = scmp.ne.s32.totalorder %s89, %s90
      %p99 = scmp.eq.s32.totalorder %s32, 0
      %p100 = por %p98, %p99
      %p101 = scmp.ne.s32.totalorder %s89, %s90
      %p102 = scmp.eq.s32.totalorder %s33, 1
      %p103 = por %p101, %p102
      %p105 = scmp.ne.s32.totalorder %s90, %s104
      %p106 = scmp.eq.s32.totalorder %s33, 0
      %p107 = por %p105, %p106
      %s109 = sadd.s32 %s108, 1
      %p112 = scmp.eq.s32.totalorder %s27, 1
      %p113 = scmp.ne.s32.totalorder %s108, %s110
      %p114 = scmp.eq.s32.totalorder %s27, 0
      %p115 = por %p113, %p114
      %p116 = scmp.ne.s32.totalorder %s108, %s110
      %p117 = scmp.eq.s32.totalorder %s32, 1
      %p118 = por %p116, %p117
      %p119 = scmp.ne.s32.totalorder %s110, %s111
      %p120 = scmp.eq.s32.totalorder %s32, 0
      %p121 = por %p119, %p120
      %p122 = scmp.ne.s32.totalorder %s110, %s111
      %p123 = scmp.eq.s32.totalorder %s33, 1
      %p124 = por %p122, %p123
      %p126 = scmp.ne.s32.totalorder %s111, %s125
      %p127 = scmp.eq.s32.totalorder %s33, 0
      %p128 = por %p126, %p127
      %s130 = sadd.s32 %s129, 1
      %p133 = scmp.eq.s32.totalorder %s27, 1
      %p134 = scmp.ne.s32.totalorder %s129, %s131
      %p135 = scmp.eq.s32.totalorder %s27, 0
      %p136 = por %p134, %p135
      %p137 = scmp.ne.s32.totalorder %s129, %s131
      %p138 = scmp.eq.s32.totalorder %s32, 1
      %p139 = por %p137, %p138
      %p140 = scmp.ne.s32.totalorder %s131, %s132
      %p141 = scmp.eq.s32.totalorder %s32, 0
      %p142 = por %p140, %p141
      %p143 = scmp.ne.s32.totalorder %s131, %s132
      %p144 = scmp.eq.s32.totalorder %s33, 1
      %p145 = por %p143, %p144
      %p147 = scmp.ne.s32.totalorder %s132, %s146
      %p148 = scmp.eq.s32.totalorder %s33, 0
      %p149 = por %p147, %p148
      %s151 = sadd.s32 %s150, 1
      %p154 = scmp.eq.s32.totalorder %s27, 1
      %p155 = scmp.ne.s32.totalorder %s150, %s152
      %p156 = scmp.eq.s32.totalorder %s27, 0
      %p157 = por %p155, %p156
      %p158 = scmp.ne.s32.totalorder %s150, %s152
      %p159 = scmp.eq.s32.totalorder %s32, 1
      %p160 = por %p158, %p159
      %p161 = scmp.ne.s32.totalorder %s152, %s153
      %p162 = scmp.eq.s32.totalorder %s32, 0
      %p163 = por %p161, %p162
      %p164 = scmp.ne.s32.totalorder %s152, %s153
      %p165 = scmp.eq.s32.totalorder %s33, 1
      %p166 = por %p164, %p165
      %p168 = scmp.ne.s32.totalorder %s153, %s167
      %p169 = scmp.eq.s32.totalorder %s33, 0
      %p170 = por %p168, %p169
      %s172 = sadd.s32 %s171, 1
      %p175 = scmp.eq.s32.totalorder %s27, 1
      %p176 = scmp.ne.s32.totalorder %s171, %s173
      %p177 = scmp.eq.s32.totalorder %s27, 0
      %p178 = por %p176, %p177
      %p179 = scmp.ne.s32.totalorder %s171, %s173
      %p180 = scmp.eq.s32.totalorder %s32, 1
      %p181 = por %p179, %p180
      %p182 = scmp.ne.s32.totalorder %s173, %s174
      %p183 = scmp.eq.s32.totalorder %s32, 0
      %p184 = por %p182, %p183
      %p185 = scmp.ne.s32.totalorder %s173, %s174
      %p186 = scmp.eq.s32.totalorder %s33, 1
      %p187 = por %p185, %p186
      %p189 = scmp.ne.s32.totalorder %s174, %s188
      %p190 = scmp.eq.s32.totalorder %s33, 0
      %p191 = por %p189, %p190
      %s193 = sadd.s32 %s192, 1
      %p196 = scmp.eq.s32.totalorder %s27, 1
      %p197 = scmp.ne.s32.totalorder %s192, %s194
      %p198 = scmp.eq.s32.totalorder %s27, 0
      %p199 = por %p197, %p198
      %p200 = scmp.ne.s32.totalorder %s192, %s194
      %p201 = scmp.eq.s32.totalorder %s32, 1
      %p202 = por %p200, %p201
      %p203 = scmp.ne.s32.totalorder %s194, %s195
      %p204 = scmp.eq.s32.totalorder %s32, 0
      %p205 = por %p203, %p204
      %p206 = scmp.ne.s32.totalorder %s194, %s195
      %p207 = scmp.eq.s32.totalorder %s33, 1
      %p208 = por %p206, %p207
      %p210 = scmp.ne.s32.totalorder %s195, %s209
      %p211 = scmp.eq.s32.totalorder %s33, 0
      %p212 = por %p210, %p211
      %s214 = sadd.s32 %s213, 1
      %p217 = scmp.eq.s32.totalorder %s27, 1
      %p218 = scmp.ne.s32.totalorder %s213, %s215
      %p219 = scmp.eq.s32.totalorder %s27, 0
      %p220 = por %p218, %p219
      %p221 = scmp.ne.s32.totalorder %s213, %s215
      %p222 = scmp.eq.s32.totalorder %s32, 1
      %p223 = por %p221, %p222
      %p224 = scmp.ne.s32.totalorder %s215, %s216
      %p225 = scmp.eq.s32.totalorder %s32, 0
      %p226 = por %p224, %p225
      %p227 = scmp.ne.s32.totalorder %s215, %s216
      %p228 = scmp.eq.s32.totalorder %s33, 1
      %p229 = por %p227, %p228
      %p231 = scmp.ne.s32.totalorder %s216, %s230
      %p232 = scmp.eq.s32.totalorder %s33, 0
      %p233 = por %p231, %p232
      %s235 = sadd.s32 %s234, 1
      %p238 = scmp.eq.s32.totalorder %s27, 1
      %p239 = scmp.ne.s32.totalorder %s234, %s236
      %p240 = scmp.eq.s32.totalorder %s27, 0
      %p241 = por %p239, %p240
      %p242 = scmp.ne.s32.totalorder %s234, %s236
      %p243 = scmp.eq.s32.totalorder %s32, 1
      %p244 = por %p242, %p243
      %p245 = scmp.ne.s32.totalorder %s236, %s237
      %p246 = scmp.eq.s32.totalorder %s32, 0
      %p247 = por %p245, %p246
      %p248 = scmp.ne.s32.totalorder %s236, %s237
      %p249 = scmp.eq.s32.totalorder %s33, 1
      %p250 = por %p248, %p249
      %p252 = scmp.ne.s32.totalorder %s237, %s251
      %p253 = scmp.eq.s32.totalorder %s33, 0
      %p254 = por %p252, %p253
      %s256 = sadd.s32 %s255, 1
      %p259 = scmp.eq.s32.totalorder %s27, 1
      %p260 = scmp.ne.s32.totalorder %s255, %s257
      %p261 = scmp.eq.s32.totalorder %s27, 0
      %p262 = por %p260, %p261
      %p263 = scmp.ne.s32.totalorder %s255, %s257
      %p264 = scmp.eq.s32.totalorder %s32, 1
      %p265 = por %p263, %p264
      %p266 = scmp.ne.s32.totalorder %s257, %s258
      %p267 = scmp.eq.s32.totalorder %s32, 0
      %p268 = por %p266, %p267
      %p269 = scmp.ne.s32.totalorder %s257, %s258
      %p270 = scmp.eq.s32.totalorder %s33, 1
      %p271 = por %p269, %p270
      %p273 = scmp.ne.s32.totalorder %s258, %s272
      %p274 = scmp.eq.s32.totalorder %s33, 0
      %p275 = por %p273, %p274
      %s277 = sadd.s32 %s276, 1
      %p280 = scmp.eq.s32.totalorder %s27, 1
      %p281 = scmp.ne.s32.totalorder %s276, %s278
      %p282 = scmp.eq.s32.totalorder %s27, 0
      %p283 = por %p281, %p282
      %p284 = scmp.ne.s32.totalorder %s276, %s278
      %p285 = scmp.eq.s32.totalorder %s32, 1
      %p286 = por %p284, %p285
      %p287 = scmp.ne.s32.totalorder %s278, %s279
      %p288 = scmp.eq.s32.totalorder %s32, 0
      %p289 = por %p287, %p288
      %p290 = scmp.ne.s32.totalorder %s278, %s279
      %p291 = scmp.eq.s32.totalorder %s33, 1
      %p292 = por %p290, %p291
      %p294 = scmp.ne.s32.totalorder %s279, %s293
      %p295 = scmp.eq.s32.totalorder %s33, 0
      %p296 = por %p294, %p295
      %s298 = sadd.s32 %s297, 1
      %p301 = scmp.eq.s32.totalorder %s27, 1
      %p302 = scmp.ne.s32.totalorder %s297, %s299
      %p303 = scmp.eq.s32.totalorder %s27, 0
      %p304 = por %p302, %p303
      %p305 = scmp.ne.s32.totalorder %s297, %s299
      %p306 = scmp.eq.s32.totalorder %s32, 1
      %p307 = por %p305, %p306
      %p308 = scmp.ne.s32.totalorder %s299, %s300
      %p309 = scmp.eq.s32.totalorder %s32, 0
      %p310 = por %p308, %p309
      %p311 = scmp.ne.s32.totalorder %s299, %s300
      %p312 = scmp.eq.s32.totalorder %s33, 1
      %p313 = por %p311, %p312
      %p315 = scmp.ne.s32.totalorder %s300, %s314
      %p316 = scmp.eq.s32.totalorder %s33, 0
      %p317 = por %p315, %p316
      %s319 = sadd.s32 %s318, 1
      %p322 = scmp.eq.s32.totalorder %s27, 1
      %p323 = scmp.ne.s32.totalorder %s318, %s320
      %p324 = scmp.eq.s32.totalorder %s27, 0
      %p325 = por %p323, %p324
      %p326 = scmp.ne.s32.totalorder %s318, %s320
      %p327 = scmp.eq.s32.totalorder %s32, 1
      %p328 = por %p326, %p327
      %p329 = scmp.ne.s32.totalorder %s320, %s321
      %p330 = scmp.eq.s32.totalorder %s32, 0
      %p331 = por %p329, %p330
      %p332 = scmp.ne.s32.totalorder %s320, %s321
      %p333 = scmp.eq.s32.totalorder %s33, 1
      %p334 = por %p332, %p333
      %p336 = scmp.ne.s32.totalorder %s321, %s335
      %p337 = scmp.eq.s32.totalorder %s33, 0
      %p338 = por %p336, %p337
      %s340 = sadd.s32 %s339, 1
      %p343 = scmp.eq.s32.totalorder %s27, 1
      %p344 = scmp.ne.s32.totalorder %s339, %s341
      %p345 = scmp.eq.s32.totalorder %s27, 0
      %p346 = por %p344, %p345
      %p347 = scmp.ne.s32.totalorder %s339, %s341
      %p348 = scmp.eq.s32.totalorder %s32, 1
      %p349 = por %p347, %p348
      %p350 = scmp.ne.s32.totalorder %s341, %s342
      %p351 = scmp.eq.s32.totalorder %s32, 0
      %p352 = por %p350, %p351
      %p353 = scmp.ne.s32.totalorder %s341, %s342
      %p354 = scmp.eq.s32.totalorder %s33, 1
      %p355 = por %p353, %p354
      %p357 = scmp.ne.s32.totalorder %s342, %s356
      %p358 = scmp.eq.s32.totalorder %s33, 0
      %p359 = por %p357, %p358
      %s361 = sadd.s32 %s360, 1
      %p364 = scmp.eq.s32.totalorder %s27, 1
      %p365 = scmp.ne.s32.totalorder %s360, %s362
      %p366 = scmp.eq.s32.totalorder %s27, 0
      %p367 = por %p365, %p366
      %p368 = scmp.ne.s32.totalorder %s360, %s362
      %p369 = scmp.eq.s32.totalorder %s32, 1
      %p370 = por %p368, %p369
      %p371 = scmp.ne.s32.totalorder %s362, %s363
      %p372 = scmp.eq.s32.totalorder %s32, 0
      %p373 = por %p371, %p372
      %p374 = scmp.ne.s32.totalorder %s362, %s363
      %p375 = scmp.eq.s32.totalorder %s33, 1
      %p376 = por %p374, %p375
      %p378 = scmp.ne.s32.totalorder %s363, %s377
      %p379 = scmp.eq.s32.totalorder %s33, 0
      %p380 = por %p378, %p379
      %s381 = ssub.s32 %s27, %s34
      %p382 = scmp.eq.s32.totalorder %s381, 0
      %s384 = sadd.s32 %s383, 1
      %s385 = scalar_select %p382, %s383, %s384
      %p388 = pneg %p382
      %p389 = scmp.eq.s32.totalorder %s27, 1
      %p390 = por %p388, %p389
      %p391 = scmp.ne.s32.totalorder %s383, %s386
      %p392 = scmp.eq.s32.totalorder %s27, 0
      %p393 = por %p391, %p392
      %p394 = scmp.ne.s32.totalorder %s383, %s386
      %p395 = scmp.eq.s32.totalorder %s32, 1
      %p396 = por %p394, %p395
      %p397 = scmp.ne.s32.totalorder %s386, %s387
      %p398 = scmp.eq.s32.totalorder %s32, 0
      %p399 = por %p397, %p398
      %p400 = scmp.ne.s32.totalorder %s386, %s387
      %p401 = scmp.eq.s32.totalorder %s33, 1
      %p402 = por %p400, %p401
      %p404 = scmp.ne.s32.totalorder %s387, %s403
      %p405 = scmp.eq.s32.totalorder %s33, 0
      %p406 = por %p404, %p405
      %s407 = ssub.s32 %s27, %s34
      %p408 = scmp.eq.s32.totalorder %s407, 0
      %s410 = sadd.s32 %s409, 1
      %s411 = scalar_select %p408, %s409, %s410
      %p414 = pneg %p408
      %p415 = scmp.eq.s32.totalorder %s27, 1
      %p416 = por %p414, %p415
      %p417 = scmp.ne.s32.totalorder %s409, %s412
      %p418 = scmp.eq.s32.totalorder %s27, 0
      %p419 = por %p417, %p418
      %p420 = scmp.ne.s32.totalorder %s409, %s412
      %p421 = scmp.eq.s32.totalorder %s32, 1
      %p422 = por %p420, %p421
      %p423 = scmp.ne.s32.totalorder %s412, %s413
      %p424 = scmp.eq.s32.totalorder %s32, 0
      %p425 = por %p423, %p424
      %p426 = scmp.ne.s32.totalorder %s412, %s413
      %p427 = scmp.eq.s32.totalorder %s33, 1
      %p428 = por %p426, %p427
      %p430 = scmp.ne.s32.totalorder %s413, %s429
      %p431 = scmp.eq.s32.totalorder %s33, 0
      %p432 = por %p430, %p431
      %p433 = scmp.le.s32.totalorder 1, %s27
      %p434 = scmp.lt.s32.totalorder %s27, 3
      %p435 = pnand %p433, %p434
      %p436 = pneg %p435
      // Predicated region
      $region9: #{contrast_vae_forward.1} parent=5 // pred_check
        _
      $region10: #{contrast_vae_forward.1} parent=5 // pred_check_branch
        %438 = sbr.rel (%p435) target = $region12
      $region11: #{contrast_vae_forward.1} parent=5 // pred_region
        %s439 = ssub.s32 %s27, 1
        // Predicated region
        $region13: #{contrast_vae_forward.1} parent=11 // pred_check
          %p440 = pneg %p100
        $region14: #{contrast_vae_forward.1} parent=11 // pred_check_branch
          %442 = sbr.rel (%p440) target = $region16
        $region15: #{contrast_vae_forward.1} parent=11 // pred_region
          _
        $region16: #{contrast_vae_forward.1} parent=11 // pred_fallthru
          _
        // Predicated region
        $region17: #{contrast_vae_forward.1} parent=11 // pred_check
          %p443 = pneg %p121
        $region18: #{contrast_vae_forward.1} parent=11 // pred_check_branch
          %445 = sbr.rel (%p443) target = $region20
        $region19: #{contrast_vae_forward.1} parent=11 // pred_region
          _
        $region20: #{contrast_vae_forward.1} parent=11 // pred_fallthru
          _
        // Predicated region
        $region21: #{contrast_vae_forward.1} parent=11 // pred_check
          %p446 = pneg %p142
        $region22: #{contrast_vae_forward.1} parent=11 // pred_check_branch
          %448 = sbr.rel (%p446) target = $region24
        $region23: #{contrast_vae_forward.1} parent=11 // pred_region
          _
        $region24: #{contrast_vae_forward.1} parent=11 // pred_fallthru
          _
        // Predicated region
        $region25: #{contrast_vae_forward.1} parent=11 // pred_check
          %p449 = pneg %p163
        $region26: #{contrast_vae_forward.1} parent=11 // pred_check_branch
          %451 = sbr.rel (%p449) target = $region28
        $region27: #{contrast_vae_forward.1} parent=11 // pred_region
          _
        $region28: #{contrast_vae_forward.1} parent=11 // pred_fallthru
          _
        // Predicated region
        $region29: #{contrast_vae_forward.1} parent=11 // pred_check
          %p452 = pneg %p184
        $region30: #{contrast_vae_forward.1} parent=11 // pred_check_branch
          %454 = sbr.rel (%p452) target = $region32
        $region31: #{contrast_vae_forward.1} parent=11 // pred_region
          _
        $region32: #{contrast_vae_forward.1} parent=11 // pred_fallthru
          _
        // Predicated region
        $region33: #{contrast_vae_forward.1} parent=11 // pred_check
          %p455 = pneg %p205
        $region34: #{contrast_vae_forward.1} parent=11 // pred_check_branch
          %457 = sbr.rel (%p455) target = $region36
        $region35: #{contrast_vae_forward.1} parent=11 // pred_region
          _
        $region36: #{contrast_vae_forward.1} parent=11 // pred_fallthru
          _
        // Predicated region
        $region37: #{contrast_vae_forward.1} parent=11 // pred_check
          %p458 = pneg %p226
        $region38: #{contrast_vae_forward.1} parent=11 // pred_check_branch
          %460 = sbr.rel (%p458) target = $region40
        $region39: #{contrast_vae_forward.1} parent=11 // pred_region
          _
        $region40: #{contrast_vae_forward.1} parent=11 // pred_fallthru
          _
        // Predicated region
        $region41: #{contrast_vae_forward.1} parent=11 // pred_check
          %p461 = pneg %p247
        $region42: #{contrast_vae_forward.1} parent=11 // pred_check_branch
          %463 = sbr.rel (%p461) target = $region44
        $region43: #{contrast_vae_forward.1} parent=11 // pred_region
          _
        $region44: #{contrast_vae_forward.1} parent=11 // pred_fallthru
          _
        // Predicated region
        $region45: #{contrast_vae_forward.1} parent=11 // pred_check
          %p464 = pneg %p268
        $region46: #{contrast_vae_forward.1} parent=11 // pred_check_branch
          %466 = sbr.rel (%p464) target = $region48
        $region47: #{contrast_vae_forward.1} parent=11 // pred_region
          _
        $region48: #{contrast_vae_forward.1} parent=11 // pred_fallthru
          _
        // Predicated region
        $region49: #{contrast_vae_forward.1} parent=11 // pred_check
          %p467 = pneg %p289
        $region50: #{contrast_vae_forward.1} parent=11 // pred_check_branch
          %469 = sbr.rel (%p467) target = $region52
        $region51: #{contrast_vae_forward.1} parent=11 // pred_region
          _
        $region52: #{contrast_vae_forward.1} parent=11 // pred_fallthru
          _
        // Predicated region
        $region53: #{contrast_vae_forward.1} parent=11 // pred_check
          %p470 = pneg %p310
        $region54: #{contrast_vae_forward.1} parent=11 // pred_check_branch
          %472 = sbr.rel (%p470) target = $region56
        $region55: #{contrast_vae_forward.1} parent=11 // pred_region
          _
        $region56: #{contrast_vae_forward.1} parent=11 // pred_fallthru
          _
        // Predicated region
        $region57: #{contrast_vae_forward.1} parent=11 // pred_check
          %p473 = pneg %p331
        $region58: #{contrast_vae_forward.1} parent=11 // pred_check_branch
          %475 = sbr.rel (%p473) target = $region60
        $region59: #{contrast_vae_forward.1} parent=11 // pred_region
          _
        $region60: #{contrast_vae_forward.1} parent=11 // pred_fallthru
          _
        // Predicated region
        $region61: #{contrast_vae_forward.1} parent=11 // pred_check
          %p476 = pneg %p352
        $region62: #{contrast_vae_forward.1} parent=11 // pred_check_branch
          %478 = sbr.rel (%p476) target = $region64
        $region63: #{contrast_vae_forward.1} parent=11 // pred_region
          _
        $region64: #{contrast_vae_forward.1} parent=11 // pred_fallthru
          _
        // Predicated region
        $region65: #{contrast_vae_forward.1} parent=11 // pred_check
          %p479 = pneg %p373
        $region66: #{contrast_vae_forward.1} parent=11 // pred_check_branch
          %481 = sbr.rel (%p479) target = $region68
        $region67: #{contrast_vae_forward.1} parent=11 // pred_region
          _
        $region68: #{contrast_vae_forward.1} parent=11 // pred_fallthru
          _
      $region12: #{contrast_vae_forward.1} parent=5 // pred_fallthru
        _
      %p482 = scmp.lt.s32.totalorder %s27, 2
      // Predicated region
      $region69: #{contrast_vae_forward.1} parent=5 // pred_check
        %p483 = pneg %p482
      $region70: #{contrast_vae_forward.1} parent=5 // pred_check_branch
        %485 = sbr.rel (%p483) target = $region72
      $region71: #{contrast_vae_forward.1} parent=5 // pred_region
        // Predicated region
        $region73: #{contrast_vae_forward.1} parent=71 // pred_check
          %p486 = pneg %p47
        $region74: #{contrast_vae_forward.1} parent=71 // pred_check_branch
          %488 = sbr.rel (%p486) target = $region76
        $region75: #{contrast_vae_forward.1} parent=71 // pred_region
          %s489 = smul.u32 16, %s27
          %s490 = ssub.s32 25, %s489
          %p491 = scmp.lt.s32.totalorder %s490, 16
          %s492 = scalar_select %p491, %s490, 16
          %s493 = smul.u32 128, %s492
          %p494 = scmp.lt.s32.totalorder %s489, 24
          %s495 = scalar_select %p494, %s489, 24
          %s496 = smul.addr %s495, 8
          %s497 = scalar_lea.vmem %s0, %s496
          %s498 = smul.u32 16, %s27
          %s499 = ssub.s32 25, %s498
          %p500 = scmp.lt.s32.totalorder %s499, 16
          %s501 = scalar_select %p500, %s499, 16
          %s502 = smul.u32 128, %s501
        $region76: #{contrast_vae_forward.1} parent=71 // pred_fallthru
          _
        // Predicated region
        $region77: #{contrast_vae_forward.1} parent=71 // pred_check
          %p503 = pneg %p73
        $region78: #{contrast_vae_forward.1} parent=71 // pred_check_branch
          %505 = sbr.rel (%p503) target = $region80
        $region79: #{contrast_vae_forward.1} parent=71 // pred_region
          %s506 = smul.u32 16, %s27
          %s507 = ssub.s32 25, %s506
          %p508 = scmp.lt.s32.totalorder %s507, 16
          %s509 = scalar_select %p508, %s507, 16
          %s510 = smul.u32 128, %s509
          %p511 = scmp.lt.s32.totalorder %s506, 24
          %s512 = scalar_select %p511, %s506, 24
          %s513 = smul.addr %s512, 8
          %s514 = scalar_lea.vmem %s1, %s513
          %s515 = smul.u32 16, %s27
          %s516 = ssub.s32 25, %s515
          %p517 = scmp.lt.s32.totalorder %s516, 16
          %s518 = scalar_select %p517, %s516, 16
          %s519 = smul.u32 128, %s518
        $region80: #{contrast_vae_forward.1} parent=71 // pred_fallthru
          _
      $region72: #{contrast_vae_forward.1} parent=5 // pred_fallthru
        _
      %p520 = scmp.le.s32.totalorder 1, %s27
      %p521 = scmp.lt.s32.totalorder %s27, 3
      %p522 = pnand %p520, %p521
      %p523 = pneg %p522
      // Predicated region
      $region81: #{contrast_vae_forward.1} parent=5 // pred_check
        _
      $region82: #{contrast_vae_forward.1} parent=5 // pred_check_branch
        %525 = sbr.rel (%p522) target = $region84
      $region83: #{contrast_vae_forward.1} parent=5 // pred_region
        %s526 = ssub.s32 %s27, 1
        %s527 = smul.u32 16, %s32
        %s528 = ssub.s32 25, %s527
        %p529 = scmp.lt.s32.totalorder %s528, 16
        %s530 = scalar_select %p529, %s528, 16
        %s531 = smul.u32 128, %s530
        %p532 = scmp.lt.s32.totalorder %s527, 24
        %s533 = scalar_select %p532, %s527, 24
        %s534 = smul.addr %s533, 8
        %s535 = scalar_lea.vmem %s0, %s534
        %p536 = pneg %p53
        %p537 = pneg %p50
        %s538 = smul.u32 16, %s32
        %s539 = ssub.s32 25, %s538
        %p540 = scmp.lt.s32.totalorder %s539, 16
        %s541 = scalar_select %p540, %s539, 16
        %s542 = smul.u32 128, %s541
        %p543 = scmp.lt.s32.totalorder %s538, 24
        %s544 = scalar_select %p543, %s538, 24
        %s545 = smul.addr %s544, 8
        %s546 = scalar_lea.vmem %s1, %s545
        %p547 = pneg %p79
        %p548 = pneg %p76
        %p549 = pneg %p100
        %p550 = pneg %p97
        %p551 = pneg %p121
        %p552 = pneg %p118
        %p553 = pneg %p142
        %p554 = pneg %p139
        %p555 = pneg %p163
        %p556 = pneg %p160
        %p557 = pneg %p184
        %p558 = pneg %p181
        %p559 = pneg %p205
        %p560 = pneg %p202
        %p561 = pneg %p226
        %p562 = pneg %p223
        %p563 = pneg %p247
        %p564 = pneg %p244
        %p565 = pneg %p268
        %p566 = pneg %p265
        %p567 = pneg %p289
        %p568 = pneg %p286
        %p569 = pneg %p310
        %p570 = pneg %p307
        %p571 = pneg %p331
        %p572 = pneg %p328
        %p573 = pneg %p352
        %p574 = pneg %p349
        %p575 = pneg %p373
        %p576 = pneg %p370
        %p577 = pneg %p399
        %p578 = pneg %p396
        %s579 = sand.u32 %s386, 1
        %s580 = scalar_lea.sflag [#allocation3], %s579
        %s581 = sand.u32 %s386, 1
        %s582 = smul.addr %s581, 128
        %s583 = scalar_lea.vmem [#allocation2], %s582
        %p584 = pneg %p425
        %p585 = pneg %p422
        %s586 = sand.u32 %s412, 1
        %s587 = sand.u32 %s412, 1
        %s588 = smul.addr %s587, 128
        %s589 = scalar_lea.vmem [#allocation4], %s588
        %s590 = smul.u32 16, %s32
        %s591 = ssub.s32 25, %s590
        %p592 = scmp.lt.s32.totalorder %s591, 16
        %s593 = scalar_select %p592, %s591, 16
        %s594 = smul.u32 128, %s593
        %p595 = scmp.lt.s32.totalorder %s590, 24
        %s596 = scalar_select %p595, %s590, 24
        %s597 = smul.addr %s596, 8
        %s598 = scalar_lea.vmem %s0, %s597
        %s599 = smul.u32 16, %s32
        %s600 = ssub.s32 25, %s599
        %p601 = scmp.lt.s32.totalorder %s600, 16
        %s602 = scalar_select %p601, %s600, 16
        %s603 = smul.u32 128, %s602
        %s604 = smul.u32 16, %s32
        %s605 = ssub.s32 25, %s604
        %p606 = scmp.lt.s32.totalorder %s605, 16
        %s607 = scalar_select %p606, %s605, 16
        %s608 = smul.u32 128, %s607
        %p609 = scmp.lt.s32.totalorder %s604, 24
        %s610 = scalar_select %p609, %s604, 24
        %s611 = smul.addr %s610, 8
        %s612 = scalar_lea.vmem %s1, %s611
        %s613 = smul.u32 16, %s32
        %s614 = ssub.s32 25, %s613
        %p615 = scmp.lt.s32.totalorder %s614, 16
        %s616 = scalar_select %p615, %s614, 16
        %s617 = smul.u32 128, %s616
        %s618 = smul.u32 16, %s32
        %s619 = ssub.s32 25, %s618
        %p620 = scmp.lt.s32.totalorder %s619, 16
        %s621 = scalar_select %p620, %s619, 16
        %s622 = smul.u32 128, %s621
        %s623 = smul.u32 16, %s32
        %s624 = ssub.s32 25, %s623
        %p625 = scmp.lt.s32.totalorder %s624, 16
        %s626 = scalar_select %p625, %s624, 16
        %s627 = smul.u32 128, %s626
        %v628 = vld [vmem:[%s598] sm:$0xff]
        %v629 = vld [vmem:[%s598 + $0x8] sm:$0xff]
        %v630 = vld [vmem:[%s598 + $0x10] sm:$0xff]
        %v631 = vld [vmem:[%s598 + $0x18] sm:$0xff]
        %v632 = vld [vmem:[%s598 + $0x20] sm:$0xff]
        %v633 = vld [vmem:[%s598 + $0x28] sm:$0xff]
        %v634 = vld [vmem:[%s598 + $0x30] sm:$0xff]
        %v635 = vld [vmem:[%s598 + $0x38] sm:$0xff]
        %v636 = vld [vmem:[%s598 + $0x40] sm:$0xff]
        %v637 = vld [vmem:[%s598 + $0x48] sm:$0xff]
        %v638 = vld [vmem:[%s598 + $0x50] sm:$0xff]
        %v639 = vld [vmem:[%s598 + $0x58] sm:$0xff]
        %v640 = vld [vmem:[%s598 + $0x60] sm:$0xff]
        %v641 = vld [vmem:[%s598 + $0x68] sm:$0xff]
        %v642 = vld [vmem:[%s598 + $0x70] sm:$0xff]
        %v643 = vld [vmem:[%s598 + $0x78] sm:$0xff]
        %v644 = vld [vmem:[%s2] sm:$0xff]
        %v645 = vld [vmem:[%s2 + $0x8] sm:$0xff]
        %v646 = vld [vmem:[%s2 + $0x10] sm:$0xff]
        %v647 = vld [vmem:[%s2 + $0x18] sm:$0xff]
        %v648 = vld [vmem:[%s2 + $0x20] sm:$0xff]
        %v649 = vld [vmem:[%s2 + $0x28] sm:$0xff]
        %v650 = vld [vmem:[%s2 + $0x30] sm:$0xff]
        %v651 = vld [vmem:[%s2 + $0x38] sm:$0xff]
        %v652 = vld [vmem:[%s2 + $0x40] sm:$0xff]
        %v653 = vld [vmem:[%s2 + $0x48] sm:$0xff]
        %v654 = vld [vmem:[%s2 + $0x50] sm:$0xff]
        %v655 = vld [vmem:[%s2 + $0x58] sm:$0xff]
        %v656 = vld [vmem:[%s2 + $0x60] sm:$0xff]
        %v657 = vld [vmem:[%s2 + $0x68] sm:$0xff]
        %v658 = vld [vmem:[%s2 + $0x70] sm:$0xff]
        %v659 = vld [vmem:[%s2 + $0x78] sm:$0xff]
        %v660 = vld [vmem:[%s3] sm:$0x1]
        %v662 = vlaneseq
        %v663 = vshrl.u32 %v662, 7
        %v664 = vsub.s32 0, %v663
        %v665 = vrot.slane %v660, %v664
        %667 = vmatprep.subr.mxu0 0.0
        %668 = vmatpush1.msra.mxu0 %v644
        %669 = vmatprep.subr.mxu0 0.0
        %670 = vmatpush1.msra.mxu0 %v645
        %671 = vmatprep.subr.mxu0 0.0
        %672 = vmatpush1.msra.mxu0 %v646
        %673 = vmatprep.subr.mxu0 0.0
        %674 = vmatpush1.msra.mxu0 %v647
        %675 = vmatprep.subr.mxu0 0.0
        %676 = vmatpush1.msra.mxu0 %v648
        %677 = vmatprep.subr.mxu0 0.0
        %678 = vmatpush1.msra.mxu0 %v649
        %679 = vmatprep.subr.mxu0 0.0
        %680 = vmatpush1.msra.mxu0 %v650
        %681 = vmatprep.subr.mxu0 0.0
        %682 = vmatpush1.msra.mxu0 %v651
        %683 = vmatprep.subr.mxu0 0.0
        %684 = vmatpush1.msra.mxu0 %v652
        %685 = vmatprep.subr.mxu0 0.0
        %686 = vmatpush1.msra.mxu0 %v653
        %687 = vmatprep.subr.mxu0 0.0
        %688 = vmatpush1.msra.mxu0 %v654
        %689 = vmatprep.subr.mxu0 0.0
        %690 = vmatpush1.msra.mxu0 %v655
        %691 = vmatprep.subr.mxu0 0.0
        %692 = vmatpush1.msra.mxu0 %v656
        %693 = vmatprep.subr.mxu0 0.0
        %694 = vmatpush1.msra.mxu0 %v657
        %695 = vmatprep.subr.mxu0 0.0
        %696 = vmatpush1.msra.mxu0 %v658
        %697 = vmatprep.subr.mxu0 0.0
        %698 = vmatpush1.msra.mxu0 %v659
        %699 = vmatprep.subr.mxu0 0.0
        %700 = vmatpush1.msra.mxu0 0.0
        %701 = vmatprep.subr.mxu0 0.0
        %702 = vmatpush1.msra.mxu0 0.0
        %703 = vmatprep.subr.mxu0 0.0
        %704 = vmatpush1.msra.mxu0 0.0
        %705 = vmatprep.subr.mxu0 0.0
        %706 = vmatpush1.msra.mxu0 0.0
        %707 = vmatprep.subr.mxu0 0.0
        %708 = vmatpush1.msra.mxu0 0.0
        %709 = vmatprep.subr.mxu0 0.0
        %710 = vmatpush1.msra.mxu0 0.0
        %711 = vmatprep.subr.mxu0 0.0
        %712 = vmatpush1.msra.mxu0 0.0
        %713 = vmatprep.subr.mxu0 0.0
        %714 = vmatpush1.msra.mxu0 0.0
        %715 = vmatprep.subr.mxu0 0.0
        %716 = vmatpush1.msra.mxu0 0.0
        %717 = vmatprep.subr.mxu0 0.0
        %718 = vmatpush1.msra.mxu0 0.0
        %719 = vmatprep.subr.mxu0 0.0
        %720 = vmatpush1.msra.mxu0 0.0
        %721 = vmatprep.subr.mxu0 0.0
        %722 = vmatpush1.msra.mxu0 0.0
        %723 = vmatprep.subr.mxu0 0.0
        %724 = vmatpush1.msra.mxu0 0.0
        %725 = vmatprep.subr.mxu0 0.0
        %726 = vmatpush1.msra.mxu0 0.0
        %727 = vmatprep.subr.mxu0 0.0
        %728 = vmatpush1.msra.mxu0 0.0
        %729 = vmatprep.subr.mxu0 0.0
        %730 = vmatpush1.msra.mxu0 0.0
        %731 = vmatprep.mubr.f32.mxu0 0.0
        %732 = vmatmul.mubr.f32.gmra.mrb[0].mxu0 %v628
        %v733 = vpop.f32.mrb[0].mxu0
        %v734 = vadd.f32 %v665, %v733
        %v735 = vpop.f32.mrb[0].mxu0
        %736 = vmatprep.mubr.f32.mxu0 0.0
        %737 = vmatmul.mubr.f32.gmra.mrb[0].mxu0 %v629
        %v738 = vpop.f32.mrb[0].mxu0
        %v739 = vadd.f32 %v665, %v738
        %v740 = vpop.f32.mrb[0].mxu0
        %741 = vmatprep.mubr.f32.mxu0 0.0
        %742 = vmatmul.mubr.f32.gmra.mrb[0].mxu0 %v630
        %v743 = vpop.f32.mrb[0].mxu0
        %v744 = vadd.f32 %v665, %v743
        %v745 = vpop.f32.mrb[0].mxu0
        %746 = vmatprep.mubr.f32.mxu0 0.0
        %747 = vmatmul.mubr.f32.gmra.mrb[0].mxu0 %v631
        %v748 = vpop.f32.mrb[0].mxu0
        %v749 = vadd.f32 %v665, %v748
        %v750 = vpop.f32.mrb[0].mxu0
        %751 = vmatprep.mubr.f32.mxu0 0.0
        %752 = vmatmul.mubr.f32.gmra.mrb[0].mxu0 %v632
        %v753 = vpop.f32.mrb[0].mxu0
        %v754 = vadd.f32 %v665, %v753
        %v755 = vpop.f32.mrb[0].mxu0
        %756 = vmatprep.mubr.f32.mxu0 0.0
        %757 = vmatmul.mubr.f32.gmra.mrb[0].mxu0 %v633
        %v758 = vpop.f32.mrb[0].mxu0
        %v759 = vadd.f32 %v665, %v758
        %v760 = vpop.f32.mrb[0].mxu0
        %761 = vmatprep.mubr.f32.mxu0 0.0
        %762 = vmatmul.mubr.f32.gmra.mrb[0].mxu0 %v634
        %v763 = vpop.f32.mrb[0].mxu0
        %v764 = vadd.f32 %v665, %v763
        %v765 = vpop.f32.mrb[0].mxu0
        %766 = vmatprep.mubr.f32.mxu0 0.0
        %767 = vmatmul.mubr.f32.gmra.mrb[0].mxu0 %v635
        %v768 = vpop.f32.mrb[0].mxu0
        %v769 = vadd.f32 %v665, %v768
        %v770 = vpop.f32.mrb[0].mxu0
        %771 = vmatprep.mubr.f32.mxu0 0.0
        %772 = vmatmul.mubr.f32.gmra.mrb[0].mxu0 %v636
        %v773 = vpop.f32.mrb[0].mxu0
        %v774 = vadd.f32 %v665, %v773
        %v775 = vpop.f32.mrb[0].mxu0
        %776 = vmatprep.mubr.f32.mxu0 0.0
        %777 = vmatmul.mubr.f32.gmra.mrb[0].mxu0 %v637
        %v778 = vpop.f32.mrb[0].mxu0
        %v779 = vadd.f32 %v665, %v778
        %v780 = vpop.f32.mrb[0].mxu0
        %781 = vmatprep.mubr.f32.mxu0 0.0
        %782 = vmatmul.mubr.f32.gmra.mrb[0].mxu0 %v638
        %v783 = vpop.f32.mrb[0].mxu0
        %v784 = vadd.f32 %v665, %v783
        %v785 = vpop.f32.mrb[0].mxu0
        %786 = vmatprep.mubr.f32.mxu0 0.0
        %787 = vmatmul.mubr.f32.gmra.mrb[0].mxu0 %v639
        %v788 = vpop.f32.mrb[0].mxu0
        %v789 = vadd.f32 %v665, %v788
        %v790 = vpop.f32.mrb[0].mxu0
        %791 = vmatprep.mubr.f32.mxu0 0.0
        %792 = vmatmul.mubr.f32.gmra.mrb[0].mxu0 %v640
        %v793 = vpop.f32.mrb[0].mxu0
        %v794 = vadd.f32 %v665, %v793
        %v795 = vpop.f32.mrb[0].mxu0
        %796 = vmatprep.mubr.f32.mxu0 0.0
        %797 = vmatmul.mubr.f32.gmra.mrb[0].mxu0 %v641
        %v798 = vpop.f32.mrb[0].mxu0
        %v799 = vadd.f32 %v665, %v798
        %v800 = vpop.f32.mrb[0].mxu0
        %801 = vmatprep.mubr.f32.mxu0 0.0
        %802 = vmatmul.mubr.f32.gmra.mrb[0].mxu0 %v642
        %v803 = vpop.f32.mrb[0].mxu0
        %v804 = vadd.f32 %v665, %v803
        %v805 = vpop.f32.mrb[0].mxu0
        %806 = vmatprep.mubr.f32.mxu0 0.0
        %807 = vmatmul.mubr.f32.gmra.mrb[0].mxu0 %v643
        %v808 = vpop.f32.mrb[0].mxu0
        %v809 = vadd.f32 %v665, %v808
        %v810 = vpop.f32.mrb[0].mxu0
        %811 = vdwg.mxu0
        %v812 = vmul.f32 %v734, 0.01
        %v813 = vmul.f32 %v739, 0.01
        %v814 = vmul.f32 %v744, 0.01
        %v815 = vmul.f32 %v749, 0.01
        %v816 = vmul.f32 %v754, 0.01
        %v817 = vmul.f32 %v759, 0.01
        %v818 = vmul.f32 %v764, 0.01
        %v819 = vmul.f32 %v769, 0.01
        %v820 = vmul.f32 %v774, 0.01
        %v821 = vmul.f32 %v779, 0.01
        %v822 = vmul.f32 %v784, 0.01
        %v823 = vmul.f32 %v789, 0.01
        %v824 = vmul.f32 %v794, 0.01
        %v825 = vmul.f32 %v799, 0.01
        %v826 = vmul.f32 %v804, 0.01
        %v827 = vmul.f32 %v809, 0.01
        %v828 = vmax.f32 %v734, %v812
        %v829 = vmax.f32 %v739, %v813
        %v830 = vmax.f32 %v744, %v814
        %v831 = vmax.f32 %v749, %v815
        %v832 = vmax.f32 %v754, %v816
        %v833 = vmax.f32 %v759, %v817
        %v834 = vmax.f32 %v764, %v818
        %v835 = vmax.f32 %v769, %v819
        %v836 = vmax.f32 %v774, %v820
        %v837 = vmax.f32 %v779, %v821
        %v838 = vmax.f32 %v784, %v822
        %v839 = vmax.f32 %v789, %v823
        %v840 = vmax.f32 %v794, %v824
        %v841 = vmax.f32 %v799, %v825
        %v842 = vmax.f32 %v804, %v826
        %v843 = vmax.f32 %v809, %v827
        %v844 = vld [vmem:[%s4] sm:$0xff]
        %v845 = vld [vmem:[%s4 + $0x8] sm:$0xff]
        %v846 = vld [vmem:[%s4 + $0x10] sm:$0xff]
        %v847 = vld [vmem:[%s4 + $0x18] sm:$0xff]
        %v848 = vld [vmem:[%s4 + $0x20] sm:$0xff]
        %v849 = vld [vmem:[%s4 + $0x28] sm:$0xff]
        %v850 = vld [vmem:[%s4 + $0x30] sm:$0xff]
        %v851 = vld [vmem:[%s4 + $0x38] sm:$0xff]
        %v852 = vld [vmem:[%s5] sm:$0x1]
        %v854 = vlaneseq
        %v855 = vshrl.u32 %v854, 7
        %v856 = vsub.s32 0, %v855
        %v857 = vrot.slane %v852, %v856
        %vm859 = vcmask 523264
        %v861 = vsel %vm859, %v828, 0
        %v864 = vsel %vm859, %v829, 0
        %v867 = vsel %vm859, %v830, 0
        %v870 = vsel %vm859, %v831, 0
        %v873 = vsel %vm859, %v832, 0
        %v876 = vsel %vm859, %v833, 0
        %v879 = vsel %vm859, %v834, 0
        %v882 = vsel %vm859, %v835, 0
        %v885 = vsel %vm859, %v836, 0
        %v888 = vsel %vm859, %v837, 0
        %v891 = vsel %vm859, %v838, 0
        %v894 = vsel %vm859, %v839, 0
        %v897 = vsel %vm859, %v840, 0
        %v900 = vsel %vm859, %v841, 0
        %v903 = vsel %vm859, %v842, 0
        %v906 = vsel %vm859, %v843, 0
        %908 = vmatprep.subr.mxu0 0.0
        %909 = vmatpush1.msra.mxu0 %v844
        %910 = vmatprep.subr.mxu0 0.0
        %911 = vmatpush1.msra.mxu0 %v845
        %912 = vmatprep.subr.mxu0 0.0
        %913 = vmatpush1.msra.mxu0 %v846
        %914 = vmatprep.subr.mxu0 0.0
        %915 = vmatpush1.msra.mxu0 %v847
        %916 = vmatprep.subr.mxu0 0.0
        %917 = vmatpush1.msra.mxu0 %v848
        %918 = vmatprep.subr.mxu0 0.0
        %919 = vmatpush1.msra.mxu0 %v849
        %920 = vmatprep.subr.mxu0 0.0
        %921 = vmatpush1.msra.mxu0 %v850
        %922 = vmatprep.subr.mxu0 0.0
        %923 = vmatpush1.msra.mxu0 %v851
        %924 = vmatprep.subr.mxu0 0.0
        %925 = vmatpush1.msra.mxu0 0.0
        %926 = vmatprep.subr.mxu0 0.0
        %927 = vmatpush1.msra.mxu0 0.0
        %928 = vmatprep.subr.mxu0 0.0
        %929 = vmatpush1.msra.mxu0 0.0
        %930 = vmatprep.subr.mxu0 0.0
        %931 = vmatpush1.msra.mxu0 0.0
        %932 = vmatprep.subr.mxu0 0.0
        %933 = vmatpush1.msra.mxu0 0.0
        %934 = vmatprep.subr.mxu0 0.0
        %935 = vmatpush1.msra.mxu0 0.0
        %936 = vmatprep.subr.mxu0 0.0
        %937 = vmatpush1.msra.mxu0 0.0
        %938 = vmatprep.subr.mxu0 0.0
        %939 = vmatpush1.msra.mxu0 0.0
        %940 = vmatprep.subr.mxu0 0.0
        %941 = vmatpush1.msra.mxu0 0.0
        %942 = vmatprep.subr.mxu0 0.0
        %943 = vmatpush1.msra.mxu0 0.0
        %944 = vmatprep.subr.mxu0 0.0
        %945 = vmatpush1.msra.mxu0 0.0
        %946 = vmatprep.subr.mxu0 0.0
        %947 = vmatpush1.msra.mxu0 0.0
        %948 = vmatprep.subr.mxu0 0.0
        %949 = vmatpush1.msra.mxu0 0.0
        %950 = vmatprep.subr.mxu0 0.0
        %951 = vmatpush1.msra.mxu0 0.0
        %952 = vmatprep.subr.mxu0 0.0
        %953 = vmatpush1.msra.mxu0 0.0
        %954 = vmatprep.subr.mxu0 0.0
        %955 = vmatpush1.msra.mxu0 0.0
        %956 = vmatprep.subr.mxu0 0.0
        %957 = vmatpush1.msra.mxu0 0.0
        %958 = vmatprep.subr.mxu0 0.0
        %959 = vmatpush1.msra.mxu0 0.0
        %960 = vmatprep.subr.mxu0 0.0
        %961 = vmatpush1.msra.mxu0 0.0
        %962 = vmatprep.subr.mxu0 0.0
        %963 = vmatpush1.msra.mxu0 0.0
        %964 = vmatprep.subr.mxu0 0.0
        %965 = vmatpush1.msra.mxu0 0.0
        %966 = vmatprep.subr.mxu0 0.0
        %967 = vmatpush1.msra.mxu0 0.0
        %968 = vmatprep.subr.mxu0 0.0
        %969 = vmatpush1.msra.mxu0 0.0
        %970 = vmatprep.subr.mxu0 0.0
        %971 = vmatpush1.msra.mxu0 0.0
        %972 = vmatprep.mubr.f32.mxu0 0.0
        %973 = vmatmul.mubr.f32.gmra.mrb[0].mxu0 %v861
        %v974 = vpop.f32.mrb[0].mxu0
        %v975 = vadd.f32 %v857, %v974
        %v976 = vpop.f32.mrb[0].mxu0
        %977 = vmatprep.mubr.f32.mxu0 0.0
        %978 = vmatmul.mubr.f32.gmra.mrb[0].mxu0 %v864
        %v979 = vpop.f32.mrb[0].mxu0
        %v980 = vadd.f32 %v857, %v979
        %v981 = vpop.f32.mrb[0].mxu0
        %982 = vmatprep.mubr.f32.mxu0 0.0
        %983 = vmatmul.mubr.f32.gmra.mrb[0].mxu0 %v867
        %v984 = vpop.f32.mrb[0].mxu0
        %v985 = vadd.f32 %v857, %v984
        %v986 = vpop.f32.mrb[0].mxu0
        %987 = vmatprep.mubr.f32.mxu0 0.0
        %988 = vmatmul.mubr.f32.gmra.mrb[0].mxu0 %v870
        %v989 = vpop.f32.mrb[0].mxu0
        %v990 = vadd.f32 %v857, %v989
        %v991 = vpop.f32.mrb[0].mxu0
        %992 = vmatprep.mubr.f32.mxu0 0.0
        %993 = vmatmul.mubr.f32.gmra.mrb[0].mxu0 %v873
        %v994 = vpop.f32.mrb[0].mxu0
        %v995 = vadd.f32 %v857, %v994
        %v996 = vpop.f32.mrb[0].mxu0
        %997 = vmatprep.mubr.f32.mxu0 0.0
        %998 = vmatmul.mubr.f32.gmra.mrb[0].mxu0 %v876
        %v999 = vpop.f32.mrb[0].mxu0
        %v1000 = vadd.f32 %v857, %v999
        %v1001 = vpop.f32.mrb[0].mxu0
        %1002 = vmatprep.mubr.f32.mxu0 0.0
        %1003 = vmatmul.mubr.f32.gmra.mrb[0].mxu0 %v879
        %v1004 = vpop.f32.mrb[0].mxu0
        %v1005 = vadd.f32 %v857, %v1004
        %v1006 = vpop.f32.mrb[0].mxu0
        %1007 = vmatprep.mubr.f32.mxu0 0.0
        %1008 = vmatmul.mubr.f32.gmra.mrb[0].mxu0 %v882
        %v1009 = vpop.f32.mrb[0].mxu0
        %v1010 = vadd.f32 %v857, %v1009
        %v1011 = vpop.f32.mrb[0].mxu0
        %1012 = vmatprep.mubr.f32.mxu0 0.0
        %1013 = vmatmul.mubr.f32.gmra.mrb[0].mxu0 %v885
        %v1014 = vpop.f32.mrb[0].mxu0
        %v1015 = vadd.f32 %v857, %v1014
        %v1016 = vpop.f32.mrb[0].mxu0
        %1017 = vmatprep.mubr.f32.mxu0 0.0
        %1018 = vmatmul.mubr.f32.gmra.mrb[0].mxu0 %v888
        %v1019 = vpop.f32.mrb[0].mxu0
        %v1020 = vadd.f32 %v857, %v1019
        %v1021 = vpop.f32.mrb[0].mxu0
        %1022 = vmatprep.mubr.f32.mxu0 0.0
        %1023 = vmatmul.mubr.f32.gmra.mrb[0].mxu0 %v891
        %v1024 = vpop.f32.mrb[0].mxu0
        %v1025 = vadd.f32 %v857, %v1024
        %v1026 = vpop.f32.mrb[0].mxu0
        %1027 = vmatprep.mubr.f32.mxu0 0.0
        %1028 = vmatmul.mubr.f32.gmra.mrb[0].mxu0 %v894
        %v1029 = vpop.f32.mrb[0].mxu0
        %v1030 = vadd.f32 %v857, %v1029
        %v1031 = vpop.f32.mrb[0].mxu0
        %1032 = vmatprep.mubr.f32.mxu0 0.0
        %1033 = vmatmul.mubr.f32.gmra.mrb[0].mxu0 %v897
        %v1034 = vpop.f32.mrb[0].mxu0
        %v1035 = vadd.f32 %v857, %v1034
        %v1036 = vpop.f32.mrb[0].mxu0
        %1037 = vmatprep.mubr.f32.mxu0 0.0
        %1038 = vmatmul.mubr.f32.gmra.mrb[0].mxu0 %v900
        %v1039 = vpop.f32.mrb[0].mxu0
        %v1040 = vadd.f32 %v857, %v1039
        %v1041 = vpop.f32.mrb[0].mxu0
        %1042 = vmatprep.mubr.f32.mxu0 0.0
        %1043 = vmatmul.mubr.f32.gmra.mrb[0].mxu0 %v903
        %v1044 = vpop.f32.mrb[0].mxu0
        %v1045 = vadd.f32 %v857, %v1044
        %v1046 = vpop.f32.mrb[0].mxu0
        %1047 = vmatprep.mubr.f32.mxu0 0.0
        %1048 = vmatmul.mubr.f32.gmra.mrb[0].mxu0 %v906
        %v1049 = vpop.f32.mrb[0].mxu0
        %v1050 = vadd.f32 %v857, %v1049
        %v1051 = vpop.f32.mrb[0].mxu0
        %1052 = vdwg.mxu0
        %v1053 = vmul.f32 %v975, 0.01
        %v1054 = vmul.f32 %v980, 0.01
        %v1055 = vmul.f32 %v985, 0.01
        %v1056 = vmul.f32 %v990, 0.01
        %v1057 = vmul.f32 %v995, 0.01
        %v1058 = vmul.f32 %v1000, 0.01
        %v1059 = vmul.f32 %v1005, 0.01
        %v1060 = vmul.f32 %v1010, 0.01
        %v1061 = vmul.f32 %v1015, 0.01
        %v1062 = vmul.f32 %v1020, 0.01
        %v1063 = vmul.f32 %v1025, 0.01
        %v1064 = vmul.f32 %v1030, 0.01
        %v1065 = vmul.f32 %v1035, 0.01
        %v1066 = vmul.f32 %v1040, 0.01
        %v1067 = vmul.f32 %v1045, 0.01
        %v1068 = vmul.f32 %v1050, 0.01
        %v1069 = vmax.f32 %v975, %v1053
        %v1070 = vmax.f32 %v980, %v1054
        %v1071 = vmax.f32 %v985, %v1055
        %v1072 = vmax.f32 %v990, %v1056
        %v1073 = vmax.f32 %v995, %v1057
        %v1074 = vmax.f32 %v1000, %v1058
        %v1075 = vmax.f32 %v1005, %v1059
        %v1076 = vmax.f32 %v1010, %v1060
        %v1077 = vmax.f32 %v1015, %v1061
        %v1078 = vmax.f32 %v1020, %v1062
        %v1079 = vmax.f32 %v1025, %v1063
        %v1080 = vmax.f32 %v1030, %v1064
        %v1081 = vmax.f32 %v1035, %v1065
        %v1082 = vmax.f32 %v1040, %v1066
        %v1083 = vmax.f32 %v1045, %v1067
        %v1084 = vmax.f32 %v1050, %v1068
        %v1085 = vld [vmem:[%s6] sm:$0xff]
        %v1086 = vld [vmem:[%s6 + $0x8] sm:$0xff]
        %v1087 = vld [vmem:[%s6 + $0x10] sm:$0xff]
        %v1088 = vld [vmem:[%s6 + $0x18] sm:$0xff]
        %v1089 = vld [vmem:[%s6 + $0x20] sm:$0xff]
        %v1090 = vld [vmem:[%s6 + $0x28] sm:$0xff]
        %v1091 = vld [vmem:[%s6 + $0x30] sm:$0xff]
        %v1092 = vld [vmem:[%s6 + $0x38] sm:$0xff]
        %v1093 = vld [vmem:[%s7] sm:$0x1]
        %v1095 = vlaneseq
        %v1096 = vshrl.u32 %v1095, 7
        %v1097 = vsub.s32 0, %v1096
        %v1098 = vrot.slane %v1093, %v1097
        %v1101 = vsel %vm859, %v1069, 0
        %v1104 = vsel %vm859, %v1070, 0
        %v1107 = vsel %vm859, %v1071, 0
        %v1110 = vsel %vm859, %v1072, 0
        %v1113 = vsel %vm859, %v1073, 0
        %v1116 = vsel %vm859, %v1074, 0
        %v1119 = vsel %vm859, %v1075, 0
        %v1122 = vsel %vm859, %v1076, 0
        %v1125 = vsel %vm859, %v1077, 0
        %v1128 = vsel %vm859, %v1078, 0
        %v1131 = vsel %vm859, %v1079, 0
        %v1134 = vsel %vm859, %v1080, 0
        %v1137 = vsel %vm859, %v1081, 0
        %v1140 = vsel %vm859, %v1082, 0
        %v1143 = vsel %vm859, %v1083, 0
        %v1146 = vsel %vm859, %v1084, 0
        %1148 = vmatprep.subr.mxu0 0.0
        %1149 = vmatpush1.msra.mxu0 %v1085
        %1150 = vmatprep.subr.mxu0 0.0
        %1151 = vmatpush1.msra.mxu0 %v1086
        %1152 = vmatprep.subr.mxu0 0.0
        %1153 = vmatpush1.msra.mxu0 %v1087
        %1154 = vmatprep.subr.mxu0 0.0
        %1155 = vmatpush1.msra.mxu0 %v1088
        %1156 = vmatprep.subr.mxu0 0.0
        %1157 = vmatpush1.msra.mxu0 %v1089
        %1158 = vmatprep.subr.mxu0 0.0
        %1159 = vmatpush1.msra.mxu0 %v1090
        %1160 = vmatprep.subr.mxu0 0.0
        %1161 = vmatpush1.msra.mxu0 %v1091
        %1162 = vmatprep.subr.mxu0 0.0
        %1163 = vmatpush1.msra.mxu0 %v1092
        %1164 = vmatprep.subr.mxu0 0.0
        %1165 = vmatpush1.msra.mxu0 0.0
        %1166 = vmatprep.subr.mxu0 0.0
        %1167 = vmatpush1.msra.mxu0 0.0
        %1168 = vmatprep.subr.mxu0 0.0
        %1169 = vmatpush1.msra.mxu0 0.0
        %1170 = vmatprep.subr.mxu0 0.0
        %1171 = vmatpush1.msra.mxu0 0.0
        %1172 = vmatprep.subr.mxu0 0.0
        %1173 = vmatpush1.msra.mxu0 0.0
        %1174 = vmatprep.subr.mxu0 0.0
        %1175 = vmatpush1.msra.mxu0 0.0
        %1176 = vmatprep.subr.mxu0 0.0
        %1177 = vmatpush1.msra.mxu0 0.0
        %1178 = vmatprep.subr.mxu0 0.0
        %1179 = vmatpush1.msra.mxu0 0.0
        %1180 = vmatprep.subr.mxu0 0.0
        %1181 = vmatpush1.msra.mxu0 0.0
        %1182 = vmatprep.subr.mxu0 0.0
        %1183 = vmatpush1.msra.mxu0 0.0
        %1184 = vmatprep.subr.mxu0 0.0
        %1185 = vmatpush1.msra.mxu0 0.0
        %1186 = vmatprep.subr.mxu0 0.0
        %1187 = vmatpush1.msra.mxu0 0.0
        %1188 = vmatprep.subr.mxu0 0.0
        %1189 = vmatpush1.msra.mxu0 0.0
        %1190 = vmatprep.subr.mxu0 0.0
        %1191 = vmatpush1.msra.mxu0 0.0
        %1192 = vmatprep.subr.mxu0 0.0
        %1193 = vmatpush1.msra.mxu0 0.0
        %1194 = vmatprep.subr.mxu0 0.0
        %1195 = vmatpush1.msra.mxu0 0.0
        %1196 = vmatprep.subr.mxu0 0.0
        %1197 = vmatpush1.msra.mxu0 0.0
        %1198 = vmatprep.subr.mxu0 0.0
        %1199 = vmatpush1.msra.mxu0 0.0
        %1200 = vmatprep.subr.mxu0 0.0
        %1201 = vmatpush1.msra.mxu0 0.0
        %1202 = vmatprep.subr.mxu0 0.0
        %1203 = vmatpush1.msra.mxu0 0.0
        %1204 = vmatprep.subr.mxu0 0.0
        %1205 = vmatpush1.msra.mxu0 0.0
        %1206 = vmatprep.subr.mxu0 0.0
        %1207 = vmatpush1.msra.mxu0 0.0
        %1208 = vmatprep.subr.mxu0 0.0
        %1209 = vmatpush1.msra.mxu0 0.0
        %1210 = vmatprep.subr.mxu0 0.0
        %1211 = vmatpush1.msra.mxu0 0.0
        %1212 = vmatprep.mubr.f32.mxu0 0.0
        %1213 = vmatmul.mubr.f32.gmra.mrb[0].mxu0 %v1101
        %v1214 = vpop.f32.mrb[0].mxu0
        %v1215 = vadd.f32 %v1098, %v1214
        %v1216 = vpop.f32.mrb[0].mxu0
        %1217 = vmatprep.mubr.f32.mxu0 0.0
        %1218 = vmatmul.mubr.f32.gmra.mrb[0].mxu0 %v1104
        %v1219 = vpop.f32.mrb[0].mxu0
        %v1220 = vadd.f32 %v1098, %v1219
        %v1221 = vpop.f32.mrb[0].mxu0
        %1222 = vmatprep.mubr.f32.mxu0 0.0
        %1223 = vmatmul.mubr.f32.gmra.mrb[0].mxu0 %v1107
        %v1224 = vpop.f32.mrb[0].mxu0
        %v1225 = vadd.f32 %v1098, %v1224
        %v1226 = vpop.f32.mrb[0].mxu0
        %1227 = vmatprep.mubr.f32.mxu0 0.0
        %1228 = vmatmul.mubr.f32.gmra.mrb[0].mxu0 %v1110
        %v1229 = vpop.f32.mrb[0].mxu0
        %v1230 = vadd.f32 %v1098, %v1229
        %v1231 = vpop.f32.mrb[0].mxu0
        %1232 = vmatprep.mubr.f32.mxu0 0.0
        %1233 = vmatmul.mubr.f32.gmra.mrb[0].mxu0 %v1113
        %v1234 = vpop.f32.mrb[0].mxu0
        %v1235 = vadd.f32 %v1098, %v1234
        %v1236 = vpop.f32.mrb[0].mxu0
        %1237 = vmatprep.mubr.f32.mxu0 0.0
        %1238 = vmatmul.mubr.f32.gmra.mrb[0].mxu0 %v1116
        %v1239 = vpop.f32.mrb[0].mxu0
        %v1240 = vadd.f32 %v1098, %v1239
        %v1241 = vpop.f32.mrb[0].mxu0
        %1242 = vmatprep.mubr.f32.mxu0 0.0
        %1243 = vmatmul.mubr.f32.gmra.mrb[0].mxu0 %v1119
        %v1244 = vpop.f32.mrb[0].mxu0
        %v1245 = vadd.f32 %v1098, %v1244
        %v1246 = vpop.f32.mrb[0].mxu0
        %1247 = vmatprep.mubr.f32.mxu0 0.0
        %1248 = vmatmul.mubr.f32.gmra.mrb[0].mxu0 %v1122
        %v1249 = vpop.f32.mrb[0].mxu0
        %v1250 = vadd.f32 %v1098, %v1249
        %v1251 = vpop.f32.mrb[0].mxu0
        %1252 = vmatprep.mubr.f32.mxu0 0.0
        %1253 = vmatmul.mubr.f32.gmra.mrb[0].mxu0 %v1125
        %v1254 = vpop.f32.mrb[0].mxu0
        %v1255 = vadd.f32 %v1098, %v1254
        %v1256 = vpop.f32.mrb[0].mxu0
        %1257 = vmatprep.mubr.f32.mxu0 0.0
        %1258 = vmatmul.mubr.f32.gmra.mrb[0].mxu0 %v1128
        %v1259 = vpop.f32.mrb[0].mxu0
        %v1260 = vadd.f32 %v1098, %v1259
        %v1261 = vpop.f32.mrb[0].mxu0
        %1262 = vmatprep.mubr.f32.mxu0 0.0
        %1263 = vmatmul.mubr.f32.gmra.mrb[0].mxu0 %v1131
        %v1264 = vpop.f32.mrb[0].mxu0
        %v1265 = vadd.f32 %v1098, %v1264
        %v1266 = vpop.f32.mrb[0].mxu0
        %1267 = vmatprep.mubr.f32.mxu0 0.0
        %1268 = vmatmul.mubr.f32.gmra.mrb[0].mxu0 %v1134
        %v1269 = vpop.f32.mrb[0].mxu0
        %v1270 = vadd.f32 %v1098, %v1269
        %v1271 = vpop.f32.mrb[0].mxu0
        %1272 = vmatprep.mubr.f32.mxu0 0.0
        %1273 = vmatmul.mubr.f32.gmra.mrb[0].mxu0 %v1137
        %v1274 = vpop.f32.mrb[0].mxu0
        %v1275 = vadd.f32 %v1098, %v1274
        %v1276 = vpop.f32.mrb[0].mxu0
        %1277 = vmatprep.mubr.f32.mxu0 0.0
        %1278 = vmatmul.mubr.f32.gmra.mrb[0].mxu0 %v1140
        %v1279 = vpop.f32.mrb[0].mxu0
        %v1280 = vadd.f32 %v1098, %v1279
        %v1281 = vpop.f32.mrb[0].mxu0
        %1282 = vmatprep.mubr.f32.mxu0 0.0
        %1283 = vmatmul.mubr.f32.gmra.mrb[0].mxu0 %v1143
        %v1284 = vpop.f32.mrb[0].mxu0
        %v1285 = vadd.f32 %v1098, %v1284
        %v1286 = vpop.f32.mrb[0].mxu0
        %1287 = vmatprep.mubr.f32.mxu0 0.0
        %1288 = vmatmul.mubr.f32.gmra.mrb[0].mxu0 %v1146
        %v1289 = vpop.f32.mrb[0].mxu0
        %v1290 = vadd.f32 %v1098, %v1289
        %v1291 = vpop.f32.mrb[0].mxu0
        %1292 = vdwg.mxu0
        %v1293 = vld [vmem:[%s8] sm:$0xff]
        %v1294 = vld [vmem:[%s8 + $0x8] sm:$0xff]
        %v1295 = vld [vmem:[%s8 + $0x10] sm:$0xff]
        %v1296 = vld [vmem:[%s8 + $0x18] sm:$0xff]
        %v1297 = vld [vmem:[%s9] sm:$0x1]
        %v1299 = vlaneseq
        %v1300 = vshrl.u32 %v1299, 7
        %v1301 = vsub.s32 0, %v1300
        %v1302 = vrot.slane %v1297, %v1301
        %vm1304 = vcmask 261120
        %v1306 = vsel %vm1304, %v1215, 0
        %v1309 = vsel %vm1304, %v1220, 0
        %v1312 = vsel %vm1304, %v1225, 0
        %v1315 = vsel %vm1304, %v1230, 0
        %v1318 = vsel %vm1304, %v1235, 0
        %v1321 = vsel %vm1304, %v1240, 0
        %v1324 = vsel %vm1304, %v1245, 0
        %v1327 = vsel %vm1304, %v1250, 0
        %v1330 = vsel %vm1304, %v1255, 0
        %v1333 = vsel %vm1304, %v1260, 0
        %v1336 = vsel %vm1304, %v1265, 0
        %v1339 = vsel %vm1304, %v1270, 0
        %v1342 = vsel %vm1304, %v1275, 0
        %v1345 = vsel %vm1304, %v1280, 0
        %v1348 = vsel %vm1304, %v1285, 0
        %v1351 = vsel %vm1304, %v1290, 0
        %1353 = vmatprep.subr.mxu0 0.0
        %1354 = vmatpush1.msra.mxu0 %v1293
        %1355 = vmatprep.subr.mxu0 0.0
        %1356 = vmatpush1.msra.mxu0 %v1294
        %1357 = vmatprep.subr.mxu0 0.0
        %1358 = vmatpush1.msra.mxu0 %v1295
        %1359 = vmatprep.subr.mxu0 0.0
        %1360 = vmatpush1.msra.mxu0 %v1296
        %1361 = vmatprep.subr.mxu0 0.0
        %1362 = vmatpush1.msra.mxu0 0.0
        %1363 = vmatprep.subr.mxu0 0.0
        %1364 = vmatpush1.msra.mxu0 0.0
        %1365 = vmatprep.subr.mxu0 0.0
        %1366 = vmatpush1.msra.mxu0 0.0
        %1367 = vmatprep.subr.mxu0 0.0
        %1368 = vmatpush1.msra.mxu0 0.0
        %1369 = vmatprep.subr.mxu0 0.0
        %1370 = vmatpush1.msra.mxu0 0.0
        %1371 = vmatprep.subr.mxu0 0.0
        %1372 = vmatpush1.msra.mxu0 0.0
        %1373 = vmatprep.subr.mxu0 0.0
        %1374 = vmatpush1.msra.mxu0 0.0
        %1375 = vmatprep.subr.mxu0 0.0
        %1376 = vmatpush1.msra.mxu0 0.0
        %1377 = vmatprep.subr.mxu0 0.0
        %1378 = vmatpush1.msra.mxu0 0.0
        %1379 = vmatprep.subr.mxu0 0.0
        %1380 = vmatpush1.msra.mxu0 0.0
        %1381 = vmatprep.subr.mxu0 0.0
        %1382 = vmatpush1.msra.mxu0 0.0
        %1383 = vmatprep.subr.mxu0 0.0
        %1384 = vmatpush1.msra.mxu0 0.0
        %1385 = vmatprep.subr.mxu0 0.0
        %1386 = vmatpush1.msra.mxu0 0.0
        %1387 = vmatprep.subr.mxu0 0.0
        %1388 = vmatpush1.msra.mxu0 0.0
        %1389 = vmatprep.subr.mxu0 0.0
        %1390 = vmatpush1.msra.mxu0 0.0
        %1391 = vmatprep.subr.mxu0 0.0
        %1392 = vmatpush1.msra.mxu0 0.0
        %1393 = vmatprep.subr.mxu0 0.0
        %1394 = vmatpush1.msra.mxu0 0.0
        %1395 = vmatprep.subr.mxu0 0.0
        %1396 = vmatpush1.msra.mxu0 0.0
        %1397 = vmatprep.subr.mxu0 0.0
        %1398 = vmatpush1.msra.mxu0 0.0
        %1399 = vmatprep.subr.mxu0 0.0
        %1400 = vmatpush1.msra.mxu0 0.0
        %1401 = vmatprep.subr.mxu0 0.0
        %1402 = vmatpush1.msra.mxu0 0.0
        %1403 = vmatprep.subr.mxu0 0.0
        %1404 = vmatpush1.msra.mxu0 0.0
        %1405 = vmatprep.subr.mxu0 0.0
        %1406 = vmatpush1.msra.mxu0 0.0
        %1407 = vmatprep.subr.mxu0 0.0
        %1408 = vmatpush1.msra.mxu0 0.0
        %1409 = vmatprep.subr.mxu0 0.0
        %1410 = vmatpush1.msra.mxu0 0.0
        %1411 = vmatprep.subr.mxu0 0.0
        %1412 = vmatpush1.msra.mxu0 0.0
        %1413 = vmatprep.subr.mxu0 0.0
        %1414 = vmatpush1.msra.mxu0 0.0
        %1415 = vmatprep.subr.mxu0 0.0
        %1416 = vmatpush1.msra.mxu0 0.0
        %1417 = vmatprep.mubr.f32.mxu0 0.0
        %1418 = vmatmul.mubr.f32.gmra.mrb[0].mxu0 %v1306
        %v1419 = vpop.f32.mrb[0].mxu0
        %v1420 = vadd.f32 %v1302, %v1419
        %v1421 = vpop.f32.mrb[0].mxu0
        %1422 = vmatprep.mubr.f32.mxu0 0.0
        %1423 = vmatmul.mubr.f32.gmra.mrb[0].mxu0 %v1309
        %v1424 = vpop.f32.mrb[0].mxu0
        %v1425 = vadd.f32 %v1302, %v1424
        %v1426 = vpop.f32.mrb[0].mxu0
        %1427 = vmatprep.mubr.f32.mxu0 0.0
        %1428 = vmatmul.mubr.f32.gmra.mrb[0].mxu0 %v1312
        %v1429 = vpop.f32.mrb[0].mxu0
        %v1430 = vadd.f32 %v1302, %v1429
        %v1431 = vpop.f32.mrb[0].mxu0
        %1432 = vmatprep.mubr.f32.mxu0 0.0
        %1433 = vmatmul.mubr.f32.gmra.mrb[0].mxu0 %v1315
        %v1434 = vpop.f32.mrb[0].mxu0
        %v1435 = vadd.f32 %v1302, %v1434
        %v1436 = vpop.f32.mrb[0].mxu0
        %1437 = vmatprep.mubr.f32.mxu0 0.0
        %1438 = vmatmul.mubr.f32.gmra.mrb[0].mxu0 %v1318
        %v1439 = vpop.f32.mrb[0].mxu0
        %v1440 = vadd.f32 %v1302, %v1439
        %v1441 = vpop.f32.mrb[0].mxu0
        %1442 = vmatprep.mubr.f32.mxu0 0.0
        %1443 = vmatmul.mubr.f32.gmra.mrb[0].mxu0 %v1321
        %v1444 = vpop.f32.mrb[0].mxu0
        %v1445 = vadd.f32 %v1302, %v1444
        %v1446 = vpop.f32.mrb[0].mxu0
        %1447 = vmatprep.mubr.f32.mxu0 0.0
        %1448 = vmatmul.mubr.f32.gmra.mrb[0].mxu0 %v1324
        %v1449 = vpop.f32.mrb[0].mxu0
        %v1450 = vadd.f32 %v1302, %v1449
        %v1451 = vpop.f32.mrb[0].mxu0
        %1452 = vmatprep.mubr.f32.mxu0 0.0
        %1453 = vmatmul.mubr.f32.gmra.mrb[0].mxu0 %v1327
        %v1454 = vpop.f32.mrb[0].mxu0
        %v1455 = vadd.f32 %v1302, %v1454
        %v1456 = vpop.f32.mrb[0].mxu0
        %1457 = vmatprep.mubr.f32.mxu0 0.0
        %1458 = vmatmul.mubr.f32.gmra.mrb[0].mxu0 %v1330
        %v1459 = vpop.f32.mrb[0].mxu0
        %v1460 = vadd.f32 %v1302, %v1459
        %v1461 = vpop.f32.mrb[0].mxu0
        %1462 = vmatprep.mubr.f32.mxu0 0.0
        %1463 = vmatmul.mubr.f32.gmra.mrb[0].mxu0 %v1333
        %v1464 = vpop.f32.mrb[0].mxu0
        %v1465 = vadd.f32 %v1302, %v1464
        %v1466 = vpop.f32.mrb[0].mxu0
        %1467 = vmatprep.mubr.f32.mxu0 0.0
        %1468 = vmatmul.mubr.f32.gmra.mrb[0].mxu0 %v1336
        %v1469 = vpop.f32.mrb[0].mxu0
        %v1470 = vadd.f32 %v1302, %v1469
        %v1471 = vpop.f32.mrb[0].mxu0
        %1472 = vmatprep.mubr.f32.mxu0 0.0
        %1473 = vmatmul.mubr.f32.gmra.mrb[0].mxu0 %v1339
        %v1474 = vpop.f32.mrb[0].mxu0
        %v1475 = vadd.f32 %v1302, %v1474
        %v1476 = vpop.f32.mrb[0].mxu0
        %1477 = vmatprep.mubr.f32.mxu0 0.0
        %1478 = vmatmul.mubr.f32.gmra.mrb[0].mxu0 %v1342
        %v1479 = vpop.f32.mrb[0].mxu0
        %v1480 = vadd.f32 %v1302, %v1479
        %v1481 = vpop.f32.mrb[0].mxu0
        %1482 = vmatprep.mubr.f32.mxu0 0.0
        %1483 = vmatmul.mubr.f32.gmra.mrb[0].mxu0 %v1345
        %v1484 = vpop.f32.mrb[0].mxu0
        %v1485 = vadd.f32 %v1302, %v1484
        %v1486 = vpop.f32.mrb[0].mxu0
        %1487 = vmatprep.mubr.f32.mxu0 0.0
        %1488 = vmatmul.mubr.f32.gmra.mrb[0].mxu0 %v1348
        %v1489 = vpop.f32.mrb[0].mxu0
        %v1490 = vadd.f32 %v1302, %v1489
        %v1491 = vpop.f32.mrb[0].mxu0
        %1492 = vmatprep.mubr.f32.mxu0 0.0
        %1493 = vmatmul.mubr.f32.gmra.mrb[0].mxu0 %v1351
        %v1494 = vpop.f32.mrb[0].mxu0
        %v1495 = vadd.f32 %v1302, %v1494
        %v1496 = vpop.f32.mrb[0].mxu0
        %1497 = vdwg.mxu0
        %v1498 = vld [vmem:[%s612] sm:$0xff]
        %v1499 = vld [vmem:[%s612 + $0x8] sm:$0xff]
        %v1500 = vld [vmem:[%s612 + $0x10] sm:$0xff]
        %v1501 = vld [vmem:[%s612 + $0x18] sm:$0xff]
        %v1502 = vld [vmem:[%s612 + $0x20] sm:$0xff]
        %v1503 = vld [vmem:[%s612 + $0x28] sm:$0xff]
        %v1504 = vld [vmem:[%s612 + $0x30] sm:$0xff]
        %v1505 = vld [vmem:[%s612 + $0x38] sm:$0xff]
        %v1506 = vld [vmem:[%s612 + $0x40] sm:$0xff]
        %v1507 = vld [vmem:[%s612 + $0x48] sm:$0xff]
        %v1508 = vld [vmem:[%s612 + $0x50] sm:$0xff]
        %v1509 = vld [vmem:[%s612 + $0x58] sm:$0xff]
        %v1510 = vld [vmem:[%s612 + $0x60] sm:$0xff]
        %v1511 = vld [vmem:[%s612 + $0x68] sm:$0xff]
        %v1512 = vld [vmem:[%s612 + $0x70] sm:$0xff]
        %v1513 = vld [vmem:[%s612 + $0x78] sm:$0xff]
        %v1514 = vmul.f32 %v1420, 0.5
        %v1515 = vmul.f32 %v1425, 0.5
        %v1516 = vmul.f32 %v1430, 0.5
        %v1517 = vmul.f32 %v1435, 0.5
        %v1518 = vmul.f32 %v1440, 0.5
        %v1519 = vmul.f32 %v1445, 0.5
        %v1520 = vmul.f32 %v1450, 0.5
        %v1521 = vmul.f32 %v1455, 0.5
        %v1522 = vmul.f32 %v1460, 0.5
        %v1523 = vmul.f32 %v1465, 0.5
        %v1524 = vmul.f32 %v1470, 0.5
        %v1525 = vmul.f32 %v1475, 0.5
        %v1526 = vmul.f32 %v1480, 0.5
        %v1527 = vmul.f32 %v1485, 0.5
        %v1528 = vmul.f32 %v1490, 0.5
        %v1529 = vmul.f32 %v1495, 0.5
        %v1530 = vmul.f32 %v1514, 1.442695
        %v1531 = vpow.pop %v1530
        %v1532 = vmul.f32 %v1515, 1.442695
        %v1533 = vpow.pop %v1532
        %v1534 = vmul.f32 %v1516, 1.442695
        %v1535 = vpow.pop %v1534
        %v1536 = vmul.f32 %v1517, 1.442695
        %v1537 = vpow.pop %v1536
        %v1538 = vmul.f32 %v1518, 1.442695
        %v1539 = vpow.pop %v1538
        %v1540 = vmul.f32 %v1519, 1.442695
        %v1541 = vpow.pop %v1540
        %v1542 = vmul.f32 %v1520, 1.442695
        %v1543 = vpow.pop %v1542
        %v1544 = vmul.f32 %v1521, 1.442695
        %v1545 = vpow.pop %v1544
        %v1546 = vmul.f32 %v1522, 1.442695
        %v1547 = vpow.pop %v1546
        %v1548 = vmul.f32 %v1523, 1.442695
        %v1549 = vpow.pop %v1548
        %v1550 = vmul.f32 %v1524, 1.442695
        %v1551 = vpow.pop %v1550
        %v1552 = vmul.f32 %v1525, 1.442695
        %v1553 = vpow.pop %v1552
        %v1554 = vmul.f32 %v1526, 1.442695
        %v1555 = vpow.pop %v1554
        %v1556 = vmul.f32 %v1527, 1.442695
        %v1557 = vpow.pop %v1556
        %v1558 = vmul.f32 %v1528, 1.442695
        %v1559 = vpow.pop %v1558
        %v1560 = vmul.f32 %v1529, 1.442695
        %v1561 = vpow.pop %v1560
        %1578 = vrot.lane.b32.xlu0 %v1531, 96
        %v1579 = vpop.permute.xlu0 %1578
        %1580 = vrot.lane.b32.xlu0 %v1533, 96
        %v1581 = vpop.permute.xlu0 %1580
        %1582 = vrot.lane.b32.xlu0 %v1535, 96
        %v1583 = vpop.permute.xlu0 %1582
        %1584 = vrot.lane.b32.xlu0 %v1537, 96
        %v1585 = vpop.permute.xlu0 %1584
        %1586 = vrot.lane.b32.xlu0 %v1539, 96
        %v1587 = vpop.permute.xlu0 %1586
        %1588 = vrot.lane.b32.xlu0 %v1541, 96
        %v1589 = vpop.permute.xlu0 %1588
        %1590 = vrot.lane.b32.xlu0 %v1543, 96
        %v1591 = vpop.permute.xlu0 %1590
        %1592 = vrot.lane.b32.xlu0 %v1545, 96
        %v1593 = vpop.permute.xlu0 %1592
        %1594 = vrot.lane.b32.xlu0 %v1547, 96
        %v1595 = vpop.permute.xlu0 %1594
        %1596 = vrot.lane.b32.xlu0 %v1549, 96
        %v1597 = vpop.permute.xlu0 %1596
        %1598 = vrot.lane.b32.xlu0 %v1551, 96
        %v1599 = vpop.permute.xlu0 %1598
        %1600 = vrot.lane.b32.xlu0 %v1553, 96
        %v1601 = vpop.permute.xlu0 %1600
        %1602 = vrot.lane.b32.xlu0 %v1555, 96
        %v1603 = vpop.permute.xlu0 %1602
        %1604 = vrot.lane.b32.xlu0 %v1557, 96
        %v1605 = vpop.permute.xlu0 %1604
        %1606 = vrot.lane.b32.xlu0 %v1559, 96
        %v1607 = vpop.permute.xlu0 %1606
        %1608 = vrot.lane.b32.xlu0 %v1561, 96
        %v1609 = vpop.permute.xlu0 %1608
        %v1626 = vmul.f32 %v1498, %v1579
        %v1627 = vmul.f32 %v1499, %v1581
        %v1628 = vmul.f32 %v1500, %v1583
        %v1629 = vmul.f32 %v1501, %v1585
        %v1630 = vmul.f32 %v1502, %v1587
        %v1631 = vmul.f32 %v1503, %v1589
        %v1632 = vmul.f32 %v1504, %v1591
        %v1633 = vmul.f32 %v1505, %v1593
        %v1634 = vmul.f32 %v1506, %v1595
        %v1635 = vmul.f32 %v1507, %v1597
        %v1636 = vmul.f32 %v1508, %v1599
        %v1637 = vmul.f32 %v1509, %v1601
        %v1638 = vmul.f32 %v1510, %v1603
        %v1639 = vmul.f32 %v1511, %v1605
        %v1640 = vmul.f32 %v1512, %v1607
        %v1641 = vmul.f32 %v1513, %v1609
        %v1642 = vadd.f32 %v1420, %v1626
        %v1643 = vadd.f32 %v1425, %v1627
        %v1644 = vadd.f32 %v1430, %v1628
        %v1645 = vadd.f32 %v1435, %v1629
        %v1646 = vadd.f32 %v1440, %v1630
        %v1647 = vadd.f32 %v1445, %v1631
        %v1648 = vadd.f32 %v1450, %v1632
        %v1649 = vadd.f32 %v1455, %v1633
        %v1650 = vadd.f32 %v1460, %v1634
        %v1651 = vadd.f32 %v1465, %v1635
        %v1652 = vadd.f32 %v1470, %v1636
        %v1653 = vadd.f32 %v1475, %v1637
        %v1654 = vadd.f32 %v1480, %v1638
        %v1655 = vadd.f32 %v1485, %v1639
        %v1656 = vadd.f32 %v1490, %v1640
        %v1657 = vadd.f32 %v1495, %v1641
        %v1658 = vld [vmem:[%s10] sm:$0xff]
        %v1659 = vld [vmem:[%s10 + $0x8] sm:$0xff]
        %v1660 = vld [vmem:[%s10 + $0x10] sm:$0xff]
        %v1661 = vld [vmem:[%s10 + $0x18] sm:$0xff]
        %v1662 = vld [vmem:[%s11] sm:$0x1]
        %v1664 = vlaneseq
        %v1665 = vshrl.u32 %v1664, 7
        %v1666 = vsub.s32 0, %v1665
        %v1667 = vrot.slane %v1662, %v1666
        %v1670 = vsel %vm1304, %v1642, 0
        %v1673 = vsel %vm1304, %v1643, 0
        %v1676 = vsel %vm1304, %v1644, 0
        %v1679 = vsel %vm1304, %v1645, 0
        %v1682 = vsel %vm1304, %v1646, 0
        %v1685 = vsel %vm1304, %v1647, 0
        %v1688 = vsel %vm1304, %v1648, 0
        %v1691 = vsel %vm1304, %v1649, 0
        %v1694 = vsel %vm1304, %v1650, 0
        %v1697 = vsel %vm1304, %v1651, 0
        %v1700 = vsel %vm1304, %v1652, 0
        %v1703 = vsel %vm1304, %v1653, 0
        %v1706 = vsel %vm1304, %v1654, 0
        %v1709 = vsel %vm1304, %v1655, 0
        %v1712 = vsel %vm1304, %v1656, 0
        %v1715 = vsel %vm1304, %v1657, 0
        %1717 = vmatprep.subr.mxu0 0.0
        %1718 = vmatpush1.msra.mxu0 %v1658
        %1719 = vmatprep.subr.mxu0 0.0
        %1720 = vmatpush1.msra.mxu0 %v1659
        %1721 = vmatprep.subr.mxu0 0.0
        %1722 = vmatpush1.msra.mxu0 %v1660
        %1723 = vmatprep.subr.mxu0 0.0
        %1724 = vmatpush1.msra.mxu0 %v1661
        %1725 = vmatprep.subr.mxu0 0.0
        %1726 = vmatpush1.msra.mxu0 0.0
        %1727 = vmatprep.subr.mxu0 0.0
        %1728 = vmatpush1.msra.mxu0 0.0
        %1729 = vmatprep.subr.mxu0 0.0
        %1730 = vmatpush1.msra.mxu0 0.0
        %1731 = vmatprep.subr.mxu0 0.0
        %1732 = vmatpush1.msra.mxu0 0.0
        %1733 = vmatprep.subr.mxu0 0.0
        %1734 = vmatpush1.msra.mxu0 0.0
        %1735 = vmatprep.subr.mxu0 0.0
        %1736 = vmatpush1.msra.mxu0 0.0
        %1737 = vmatprep.subr.mxu0 0.0
        %1738 = vmatpush1.msra.mxu0 0.0
        %1739 = vmatprep.subr.mxu0 0.0
        %1740 = vmatpush1.msra.mxu0 0.0
        %1741 = vmatprep.subr.mxu0 0.0
        %1742 = vmatpush1.msra.mxu0 0.0
        %1743 = vmatprep.subr.mxu0 0.0
        %1744 = vmatpush1.msra.mxu0 0.0
        %1745 = vmatprep.subr.mxu0 0.0
        %1746 = vmatpush1.msra.mxu0 0.0
        %1747 = vmatprep.subr.mxu0 0.0
        %1748 = vmatpush1.msra.mxu0 0.0
        %1749 = vmatprep.subr.mxu0 0.0
        %1750 = vmatpush1.msra.mxu0 0.0
        %1751 = vmatprep.subr.mxu0 0.0
        %1752 = vmatpush1.msra.mxu0 0.0
        %1753 = vmatprep.subr.mxu0 0.0
        %1754 = vmatpush1.msra.mxu0 0.0
        %1755 = vmatprep.subr.mxu0 0.0
        %1756 = vmatpush1.msra.mxu0 0.0
        %1757 = vmatprep.subr.mxu0 0.0
        %1758 = vmatpush1.msra.mxu0 0.0
        %1759 = vmatprep.subr.mxu0 0.0
        %1760 = vmatpush1.msra.mxu0 0.0
        %1761 = vmatprep.subr.mxu0 0.0
        %1762 = vmatpush1.msra.mxu0 0.0
        %1763 = vmatprep.subr.mxu0 0.0
        %1764 = vmatpush1.msra.mxu0 0.0
        %1765 = vmatprep.subr.mxu0 0.0
        %1766 = vmatpush1.msra.mxu0 0.0
        %1767 = vmatprep.subr.mxu0 0.0
        %1768 = vmatpush1.msra.mxu0 0.0
        %1769 = vmatprep.subr.mxu0 0.0
        %1770 = vmatpush1.msra.mxu0 0.0
        %1771 = vmatprep.subr.mxu0 0.0
        %1772 = vmatpush1.msra.mxu0 0.0
        %1773 = vmatprep.subr.mxu0 0.0
        %1774 = vmatpush1.msra.mxu0 0.0
        %1775 = vmatprep.subr.mxu0 0.0
        %1776 = vmatpush1.msra.mxu0 0.0
        %1777 = vmatprep.subr.mxu0 0.0
        %1778 = vmatpush1.msra.mxu0 0.0
        %1779 = vmatprep.subr.mxu0 0.0
        %1780 = vmatpush1.msra.mxu0 0.0
        %1781 = vmatprep.mubr.f32.mxu0 0.0
        %1782 = vmatmul.mubr.f32.gmra.mrb[0].mxu0 %v1670
        %v1783 = vpop.f32.mrb[0].mxu0
        %v1784 = vadd.f32 %v1667, %v1783
        %v1785 = vpop.f32.mrb[0].mxu0
        %1786 = vmatprep.mubr.f32.mxu0 0.0
        %1787 = vmatmul.mubr.f32.gmra.mrb[0].mxu0 %v1673
        %v1788 = vpop.f32.mrb[0].mxu0
        %v1789 = vadd.f32 %v1667, %v1788
        %v1790 = vpop.f32.mrb[0].mxu0
        %1791 = vmatprep.mubr.f32.mxu0 0.0
        %1792 = vmatmul.mubr.f32.gmra.mrb[0].mxu0 %v1676
        %v1793 = vpop.f32.mrb[0].mxu0
        %v1794 = vadd.f32 %v1667, %v1793
        %v1795 = vpop.f32.mrb[0].mxu0
        %1796 = vmatprep.mubr.f32.mxu0 0.0
        %1797 = vmatmul.mubr.f32.gmra.mrb[0].mxu0 %v1679
        %v1798 = vpop.f32.mrb[0].mxu0
        %v1799 = vadd.f32 %v1667, %v1798
        %v1800 = vpop.f32.mrb[0].mxu0
        %1801 = vmatprep.mubr.f32.mxu0 0.0
        %1802 = vmatmul.mubr.f32.gmra.mrb[0].mxu0 %v1682
        %v1803 = vpop.f32.mrb[0].mxu0
        %v1804 = vadd.f32 %v1667, %v1803
        %v1805 = vpop.f32.mrb[0].mxu0
        %1806 = vmatprep.mubr.f32.mxu0 0.0
        %1807 = vmatmul.mubr.f32.gmra.mrb[0].mxu0 %v1685
        %v1808 = vpop.f32.mrb[0].mxu0
        %v1809 = vadd.f32 %v1667, %v1808
        %v1810 = vpop.f32.mrb[0].mxu0
        %1811 = vmatprep.mubr.f32.mxu0 0.0
        %1812 = vmatmul.mubr.f32.gmra.mrb[0].mxu0 %v1688
        %v1813 = vpop.f32.mrb[0].mxu0
        %v1814 = vadd.f32 %v1667, %v1813
        %v1815 = vpop.f32.mrb[0].mxu0
        %1816 = vmatprep.mubr.f32.mxu0 0.0
        %1817 = vmatmul.mubr.f32.gmra.mrb[0].mxu0 %v1691
        %v1818 = vpop.f32.mrb[0].mxu0
        %v1819 = vadd.f32 %v1667, %v1818
        %v1820 = vpop.f32.mrb[0].mxu0
        %1821 = vmatprep.mubr.f32.mxu0 0.0
        %1822 = vmatmul.mubr.f32.gmra.mrb[0].mxu0 %v1694
        %v1823 = vpop.f32.mrb[0].mxu0
        %v1824 = vadd.f32 %v1667, %v1823
        %v1825 = vpop.f32.mrb[0].mxu0
        %1826 = vmatprep.mubr.f32.mxu0 0.0
        %1827 = vmatmul.mubr.f32.gmra.mrb[0].mxu0 %v1697
        %v1828 = vpop.f32.mrb[0].mxu0
        %v1829 = vadd.f32 %v1667, %v1828
        %v1830 = vpop.f32.mrb[0].mxu0
        %1831 = vmatprep.mubr.f32.mxu0 0.0
        %1832 = vmatmul.mubr.f32.gmra.mrb[0].mxu0 %v1700
        %v1833 = vpop.f32.mrb[0].mxu0
        %v1834 = vadd.f32 %v1667, %v1833
        %v1835 = vpop.f32.mrb[0].mxu0
        %1836 = vmatprep.mubr.f32.mxu0 0.0
        %1837 = vmatmul.mubr.f32.gmra.mrb[0].mxu0 %v1703
        %v1838 = vpop.f32.mrb[0].mxu0
        %v1839 = vadd.f32 %v1667, %v1838
        %v1840 = vpop.f32.mrb[0].mxu0
        %1841 = vmatprep.mubr.f32.mxu0 0.0
        %1842 = vmatmul.mubr.f32.gmra.mrb[0].mxu0 %v1706
        %v1843 = vpop.f32.mrb[0].mxu0
        %v1844 = vadd.f32 %v1667, %v1843
        %v1845 = vpop.f32.mrb[0].mxu0
        %1846 = vmatprep.mubr.f32.mxu0 0.0
        %1847 = vmatmul.mubr.f32.gmra.mrb[0].mxu0 %v1709
        %v1848 = vpop.f32.mrb[0].mxu0
        %v1849 = vadd.f32 %v1667, %v1848
        %v1850 = vpop.f32.mrb[0].mxu0
        %1851 = vmatprep.mubr.f32.mxu0 0.0
        %1852 = vmatmul.mubr.f32.gmra.mrb[0].mxu0 %v1712
        %v1853 = vpop.f32.mrb[0].mxu0
        %v1854 = vadd.f32 %v1667, %v1853
        %v1855 = vpop.f32.mrb[0].mxu0
        %1856 = vmatprep.mubr.f32.mxu0 0.0
        %1857 = vmatmul.mubr.f32.gmra.mrb[0].mxu0 %v1715
        %v1858 = vpop.f32.mrb[0].mxu0
        %v1859 = vadd.f32 %v1667, %v1858
        %v1860 = vpop.f32.mrb[0].mxu0
        %1861 = vdwg.mxu0
        %v1862 = vmul.f32 %v1784, 0.01
        %v1863 = vmul.f32 %v1789, 0.01
        %v1864 = vmul.f32 %v1794, 0.01
        %v1865 = vmul.f32 %v1799, 0.01
        %v1866 = vmul.f32 %v1804, 0.01
        %v1867 = vmul.f32 %v1809, 0.01
        %v1868 = vmul.f32 %v1814, 0.01
        %v1869 = vmul.f32 %v1819, 0.01
        %v1870 = vmul.f32 %v1824, 0.01
        %v1871 = vmul.f32 %v1829, 0.01
        %v1872 = vmul.f32 %v1834, 0.01
        %v1873 = vmul.f32 %v1839, 0.01
        %v1874 = vmul.f32 %v1844, 0.01
        %v1875 = vmul.f32 %v1849, 0.01
        %v1876 = vmul.f32 %v1854, 0.01
        %v1877 = vmul.f32 %v1859, 0.01
        %v1878 = vmax.f32 %v1784, %v1862
        %v1879 = vmax.f32 %v1789, %v1863
        %v1880 = vmax.f32 %v1794, %v1864
        %v1881 = vmax.f32 %v1799, %v1865
        %v1882 = vmax.f32 %v1804, %v1866
        %v1883 = vmax.f32 %v1809, %v1867
        %v1884 = vmax.f32 %v1814, %v1868
        %v1885 = vmax.f32 %v1819, %v1869
        %v1886 = vmax.f32 %v1824, %v1870
        %v1887 = vmax.f32 %v1829, %v1871
        %v1888 = vmax.f32 %v1834, %v1872
        %v1889 = vmax.f32 %v1839, %v1873
        %v1890 = vmax.f32 %v1844, %v1874
        %v1891 = vmax.f32 %v1849, %v1875
        %v1892 = vmax.f32 %v1854, %v1876
        %v1893 = vmax.f32 %v1859, %v1877
        %v1894 = vld [vmem:[%s12] sm:$0xff]
        %v1895 = vld [vmem:[%s12 + $0x8] sm:$0xff]
        %v1896 = vld [vmem:[%s12 + $0x10] sm:$0xff]
        %v1897 = vld [vmem:[%s12 + $0x18] sm:$0xff]
        %v1898 = vld [vmem:[%s12 + $0x20] sm:$0xff]
        %v1899 = vld [vmem:[%s12 + $0x28] sm:$0xff]
        %v1900 = vld [vmem:[%s12 + $0x30] sm:$0xff]
        %v1901 = vld [vmem:[%s12 + $0x38] sm:$0xff]
        %v1902 = vld [vmem:[%s13] sm:$0x1]
        %v1904 = vlaneseq
        %v1905 = vshrl.u32 %v1904, 7
        %v1906 = vsub.s32 0, %v1905
        %v1907 = vrot.slane %v1902, %v1906
        %v1910 = vsel %vm859, %v1878, 0
        %v1913 = vsel %vm859, %v1879, 0
        %v1916 = vsel %vm859, %v1880, 0
        %v1919 = vsel %vm859, %v1881, 0
        %v1922 = vsel %vm859, %v1882, 0
        %v1925 = vsel %vm859, %v1883, 0
        %v1928 = vsel %vm859, %v1884, 0
        %v1931 = vsel %vm859, %v1885, 0
        %v1934 = vsel %vm859, %v1886, 0
        %v1937 = vsel %vm859, %v1887, 0
        %v1940 = vsel %vm859, %v1888, 0
        %v1943 = vsel %vm859, %v1889, 0
        %v1946 = vsel %vm859, %v1890, 0
        %v1949 = vsel %vm859, %v1891, 0
        %v1952 = vsel %vm859, %v1892, 0
        %v1955 = vsel %vm859, %v1893, 0
        %1957 = vmatprep.subr.mxu0 0.0
        %1958 = vmatpush1.msra.mxu0 %v1894
        %1959 = vmatprep.subr.mxu0 0.0
        %1960 = vmatpush1.msra.mxu0 %v1895
        %1961 = vmatprep.subr.mxu0 0.0
        %1962 = vmatpush1.msra.mxu0 %v1896
        %1963 = vmatprep.subr.mxu0 0.0
        %1964 = vmatpush1.msra.mxu0 %v1897
        %1965 = vmatprep.subr.mxu0 0.0
        %1966 = vmatpush1.msra.mxu0 %v1898
        %1967 = vmatprep.subr.mxu0 0.0
        %1968 = vmatpush1.msra.mxu0 %v1899
        %1969 = vmatprep.subr.mxu0 0.0
        %1970 = vmatpush1.msra.mxu0 %v1900
        %1971 = vmatprep.subr.mxu0 0.0
        %1972 = vmatpush1.msra.mxu0 %v1901
        %1973 = vmatprep.subr.mxu0 0.0
        %1974 = vmatpush1.msra.mxu0 0.0
        %1975 = vmatprep.subr.mxu0 0.0
        %1976 = vmatpush1.msra.mxu0 0.0
        %1977 = vmatprep.subr.mxu0 0.0
        %1978 = vmatpush1.msra.mxu0 0.0
        %1979 = vmatprep.subr.mxu0 0.0
        %1980 = vmatpush1.msra.mxu0 0.0
        %1981 = vmatprep.subr.mxu0 0.0
        %1982 = vmatpush1.msra.mxu0 0.0
        %1983 = vmatprep.subr.mxu0 0.0
        %1984 = vmatpush1.msra.mxu0 0.0
        %1985 = vmatprep.subr.mxu0 0.0
        %1986 = vmatpush1.msra.mxu0 0.0
        %1987 = vmatprep.subr.mxu0 0.0
        %1988 = vmatpush1.msra.mxu0 0.0
        %1989 = vmatprep.subr.mxu0 0.0
        %1990 = vmatpush1.msra.mxu0 0.0
        %1991 = vmatprep.subr.mxu0 0.0
        %1992 = vmatpush1.msra.mxu0 0.0
        %1993 = vmatprep.subr.mxu0 0.0
        %1994 = vmatpush1.msra.mxu0 0.0
        %1995 = vmatprep.subr.mxu0 0.0
        %1996 = vmatpush1.msra.mxu0 0.0
        %1997 = vmatprep.subr.mxu0 0.0
        %1998 = vmatpush1.msra.mxu0 0.0
        %1999 = vmatprep.subr.mxu0 0.0
        %2000 = vmatpush1.msra.mxu0 0.0
        %2001 = vmatprep.subr.mxu0 0.0
        %2002 = vmatpush1.msra.mxu0 0.0
        %2003 = vmatprep.subr.mxu0 0.0
        %2004 = vmatpush1.msra.mxu0 0.0
        %2005 = vmatprep.subr.mxu0 0.0
        %2006 = vmatpush1.msra.mxu0 0.0
        %2007 = vmatprep.subr.mxu0 0.0
        %2008 = vmatpush1.msra.mxu0 0.0
        %2009 = vmatprep.subr.mxu0 0.0
        %2010 = vmatpush1.msra.mxu0 0.0
        %2011 = vmatprep.subr.mxu0 0.0
        %2012 = vmatpush1.msra.mxu0 0.0
        %2013 = vmatprep.subr.mxu0 0.0
        %2014 = vmatpush1.msra.mxu0 0.0
        %2015 = vmatprep.subr.mxu0 0.0
        %2016 = vmatpush1.msra.mxu0 0.0
        %2017 = vmatprep.subr.mxu0 0.0
        %2018 = vmatpush1.msra.mxu0 0.0
        %2019 = vmatprep.subr.mxu0 0.0
        %2020 = vmatpush1.msra.mxu0 0.0
        %2021 = vmatprep.mubr.f32.mxu0 0.0
        %2022 = vmatmul.mubr.f32.gmra.mrb[0].mxu0 %v1910
        %v2023 = vpop.f32.mrb[0].mxu0
        %v2024 = vadd.f32 %v1907, %v2023
        %v2025 = vpop.f32.mrb[0].mxu0
        %2026 = vmatprep.mubr.f32.mxu0 0.0
        %2027 = vmatmul.mubr.f32.gmra.mrb[0].mxu0 %v1913
        %v2028 = vpop.f32.mrb[0].mxu0
        %v2029 = vadd.f32 %v1907, %v2028
        %v2030 = vpop.f32.mrb[0].mxu0
        %2031 = vmatprep.mubr.f32.mxu0 0.0
        %2032 = vmatmul.mubr.f32.gmra.mrb[0].mxu0 %v1916
        %v2033 = vpop.f32.mrb[0].mxu0
        %v2034 = vadd.f32 %v1907, %v2033
        %v2035 = vpop.f32.mrb[0].mxu0
        %2036 = vmatprep.mubr.f32.mxu0 0.0
        %2037 = vmatmul.mubr.f32.gmra.mrb[0].mxu0 %v1919
        %v2038 = vpop.f32.mrb[0].mxu0
        %v2039 = vadd.f32 %v1907, %v2038
        %v2040 = vpop.f32.mrb[0].mxu0
        %2041 = vmatprep.mubr.f32.mxu0 0.0
        %2042 = vmatmul.mubr.f32.gmra.mrb[0].mxu0 %v1922
        %v2043 = vpop.f32.mrb[0].mxu0
        %v2044 = vadd.f32 %v1907, %v2043
        %v2045 = vpop.f32.mrb[0].mxu0
        %2046 = vmatprep.mubr.f32.mxu0 0.0
        %2047 = vmatmul.mubr.f32.gmra.mrb[0].mxu0 %v1925
        %v2048 = vpop.f32.mrb[0].mxu0
        %v2049 = vadd.f32 %v1907, %v2048
        %v2050 = vpop.f32.mrb[0].mxu0
        %2051 = vmatprep.mubr.f32.mxu0 0.0
        %2052 = vmatmul.mubr.f32.gmra.mrb[0].mxu0 %v1928
        %v2053 = vpop.f32.mrb[0].mxu0
        %v2054 = vadd.f32 %v1907, %v2053
        %v2055 = vpop.f32.mrb[0].mxu0
        %2056 = vmatprep.mubr.f32.mxu0 0.0
        %2057 = vmatmul.mubr.f32.gmra.mrb[0].mxu0 %v1931
        %v2058 = vpop.f32.mrb[0].mxu0
        %v2059 = vadd.f32 %v1907, %v2058
        %v2060 = vpop.f32.mrb[0].mxu0
        %2061 = vmatprep.mubr.f32.mxu0 0.0
        %2062 = vmatmul.mubr.f32.gmra.mrb[0].mxu0 %v1934
        %v2063 = vpop.f32.mrb[0].mxu0
        %v2064 = vadd.f32 %v1907, %v2063
        %v2065 = vpop.f32.mrb[0].mxu0
        %2066 = vmatprep.mubr.f32.mxu0 0.0
        %2067 = vmatmul.mubr.f32.gmra.mrb[0].mxu0 %v1937
        %v2068 = vpop.f32.mrb[0].mxu0
        %v2069 = vadd.f32 %v1907, %v2068
        %v2070 = vpop.f32.mrb[0].mxu0
        %2071 = vmatprep.mubr.f32.mxu0 0.0
        %2072 = vmatmul.mubr.f32.gmra.mrb[0].mxu0 %v1940
        %v2073 = vpop.f32.mrb[0].mxu0
        %v2074 = vadd.f32 %v1907, %v2073
        %v2075 = vpop.f32.mrb[0].mxu0
        %2076 = vmatprep.mubr.f32.mxu0 0.0
        %2077 = vmatmul.mubr.f32.gmra.mrb[0].mxu0 %v1943
        %v2078 = vpop.f32.mrb[0].mxu0
        %v2079 = vadd.f32 %v1907, %v2078
        %v2080 = vpop.f32.mrb[0].mxu0
        %2081 = vmatprep.mubr.f32.mxu0 0.0
        %2082 = vmatmul.mubr.f32.gmra.mrb[0].mxu0 %v1946
        %v2083 = vpop.f32.mrb[0].mxu0
        %v2084 = vadd.f32 %v1907, %v2083
        %v2085 = vpop.f32.mrb[0].mxu0
        %2086 = vmatprep.mubr.f32.mxu0 0.0
        %2087 = vmatmul.mubr.f32.gmra.mrb[0].mxu0 %v1949
        %v2088 = vpop.f32.mrb[0].mxu0
        %v2089 = vadd.f32 %v1907, %v2088
        %v2090 = vpop.f32.mrb[0].mxu0
        %2091 = vmatprep.mubr.f32.mxu0 0.0
        %2092 = vmatmul.mubr.f32.gmra.mrb[0].mxu0 %v1952
        %v2093 = vpop.f32.mrb[0].mxu0
        %v2094 = vadd.f32 %v1907, %v2093
        %v2095 = vpop.f32.mrb[0].mxu0
        %2096 = vmatprep.mubr.f32.mxu0 0.0
        %2097 = vmatmul.mubr.f32.gmra.mrb[0].mxu0 %v1955
        %v2098 = vpop.f32.mrb[0].mxu0
        %v2099 = vadd.f32 %v1907, %v2098
        %v2100 = vpop.f32.mrb[0].mxu0
        %2101 = vdwg.mxu0
        %v2102 = vmul.f32 %v2024, 0.01
        %v2103 = vmul.f32 %v2029, 0.01
        %v2104 = vmul.f32 %v2034, 0.01
        %v2105 = vmul.f32 %v2039, 0.01
        %v2106 = vmul.f32 %v2044, 0.01
        %v2107 = vmul.f32 %v2049, 0.01
        %v2108 = vmul.f32 %v2054, 0.01
        %v2109 = vmul.f32 %v2059, 0.01
        %v2110 = vmul.f32 %v2064, 0.01
        %v2111 = vmul.f32 %v2069, 0.01
        %v2112 = vmul.f32 %v2074, 0.01
        %v2113 = vmul.f32 %v2079, 0.01
        %v2114 = vmul.f32 %v2084, 0.01
        %v2115 = vmul.f32 %v2089, 0.01
        %v2116 = vmul.f32 %v2094, 0.01
        %v2117 = vmul.f32 %v2099, 0.01
        %v2118 = vmax.f32 %v2024, %v2102
        %v2119 = vmax.f32 %v2029, %v2103
        %v2120 = vmax.f32 %v2034, %v2104
        %v2121 = vmax.f32 %v2039, %v2105
        %v2122 = vmax.f32 %v2044, %v2106
        %v2123 = vmax.f32 %v2049, %v2107
        %v2124 = vmax.f32 %v2054, %v2108
        %v2125 = vmax.f32 %v2059, %v2109
        %v2126 = vmax.f32 %v2064, %v2110
        %v2127 = vmax.f32 %v2069, %v2111
        %v2128 = vmax.f32 %v2074, %v2112
        %v2129 = vmax.f32 %v2079, %v2113
        %v2130 = vmax.f32 %v2084, %v2114
        %v2131 = vmax.f32 %v2089, %v2115
        %v2132 = vmax.f32 %v2094, %v2116
        %v2133 = vmax.f32 %v2099, %v2117
        %v2134 = vld [vmem:[%s14] sm:$0xff]
        %v2135 = vld [vmem:[%s14 + $0x8] sm:$0xff]
        %v2136 = vld [vmem:[%s14 + $0x10] sm:$0xff]
        %v2137 = vld [vmem:[%s14 + $0x18] sm:$0xff]
        %v2138 = vld [vmem:[%s14 + $0x20] sm:$0xff]
        %v2139 = vld [vmem:[%s14 + $0x28] sm:$0xff]
        %v2140 = vld [vmem:[%s14 + $0x30] sm:$0xff]
        %v2141 = vld [vmem:[%s14 + $0x38] sm:$0xff]
        %v2142 = vld [vmem:[%s15] sm:$0x1]
        %v2144 = vlaneseq
        %v2145 = vshrl.u32 %v2144, 7
        %v2146 = vsub.s32 0, %v2145
        %v2147 = vrot.slane %v2142, %v2146
        %v2150 = vsel %vm859, %v2118, 0
        %v2153 = vsel %vm859, %v2119, 0
        %v2156 = vsel %vm859, %v2120, 0
        %v2159 = vsel %vm859, %v2121, 0
        %v2162 = vsel %vm859, %v2122, 0
        %v2165 = vsel %vm859, %v2123, 0
        %v2168 = vsel %vm859, %v2124, 0
        %v2171 = vsel %vm859, %v2125, 0
        %v2174 = vsel %vm859, %v2126, 0
        %v2177 = vsel %vm859, %v2127, 0
        %v2180 = vsel %vm859, %v2128, 0
        %v2183 = vsel %vm859, %v2129, 0
        %v2186 = vsel %vm859, %v2130, 0
        %v2189 = vsel %vm859, %v2131, 0
        %v2192 = vsel %vm859, %v2132, 0
        %v2195 = vsel %vm859, %v2133, 0
        %2197 = vmatprep.subr.mxu0 0.0
        %2198 = vmatpush1.msra.mxu0 %v2134
        %2199 = vmatprep.subr.mxu0 0.0
        %2200 = vmatpush1.msra.mxu0 %v2135
        %2201 = vmatprep.subr.mxu0 0.0
        %2202 = vmatpush1.msra.mxu0 %v2136
        %2203 = vmatprep.subr.mxu0 0.0
        %2204 = vmatpush1.msra.mxu0 %v2137
        %2205 = vmatprep.subr.mxu0 0.0
        %2206 = vmatpush1.msra.mxu0 %v2138
        %2207 = vmatprep.subr.mxu0 0.0
        %2208 = vmatpush1.msra.mxu0 %v2139
        %2209 = vmatprep.subr.mxu0 0.0
        %2210 = vmatpush1.msra.mxu0 %v2140
        %2211 = vmatprep.subr.mxu0 0.0
        %2212 = vmatpush1.msra.mxu0 %v2141
        %2213 = vmatprep.subr.mxu0 0.0
        %2214 = vmatpush1.msra.mxu0 0.0
        %2215 = vmatprep.subr.mxu0 0.0
        %2216 = vmatpush1.msra.mxu0 0.0
        %2217 = vmatprep.subr.mxu0 0.0
        %2218 = vmatpush1.msra.mxu0 0.0
        %2219 = vmatprep.subr.mxu0 0.0
        %2220 = vmatpush1.msra.mxu0 0.0
        %2221 = vmatprep.subr.mxu0 0.0
        %2222 = vmatpush1.msra.mxu0 0.0
        %2223 = vmatprep.subr.mxu0 0.0
        %2224 = vmatpush1.msra.mxu0 0.0
        %2225 = vmatprep.subr.mxu0 0.0
        %2226 = vmatpush1.msra.mxu0 0.0
        %2227 = vmatprep.subr.mxu0 0.0
        %2228 = vmatpush1.msra.mxu0 0.0
        %2229 = vmatprep.subr.mxu0 0.0
        %2230 = vmatpush1.msra.mxu0 0.0
        %2231 = vmatprep.subr.mxu0 0.0
        %2232 = vmatpush1.msra.mxu0 0.0
        %2233 = vmatprep.subr.mxu0 0.0
        %2234 = vmatpush1.msra.mxu0 0.0
        %2235 = vmatprep.subr.mxu0 0.0
        %2236 = vmatpush1.msra.mxu0 0.0
        %2237 = vmatprep.subr.mxu0 0.0
        %2238 = vmatpush1.msra.mxu0 0.0
        %2239 = vmatprep.subr.mxu0 0.0
        %2240 = vmatpush1.msra.mxu0 0.0
        %2241 = vmatprep.subr.mxu0 0.0
        %2242 = vmatpush1.msra.mxu0 0.0
        %2243 = vmatprep.subr.mxu0 0.0
        %2244 = vmatpush1.msra.mxu0 0.0
        %2245 = vmatprep.subr.mxu0 0.0
        %2246 = vmatpush1.msra.mxu0 0.0
        %2247 = vmatprep.subr.mxu0 0.0
        %2248 = vmatpush1.msra.mxu0 0.0
        %2249 = vmatprep.subr.mxu0 0.0
        %2250 = vmatpush1.msra.mxu0 0.0
        %2251 = vmatprep.subr.mxu0 0.0
        %2252 = vmatpush1.msra.mxu0 0.0
        %2253 = vmatprep.subr.mxu0 0.0
        %2254 = vmatpush1.msra.mxu0 0.0
        %2255 = vmatprep.subr.mxu0 0.0
        %2256 = vmatpush1.msra.mxu0 0.0
        %2257 = vmatprep.subr.mxu0 0.0
        %2258 = vmatpush1.msra.mxu0 0.0
        %2259 = vmatprep.subr.mxu0 0.0
        %2260 = vmatpush1.msra.mxu0 0.0
        %2261 = vmatprep.mubr.f32.mxu0 0.0
        %2262 = vmatmul.mubr.f32.gmra.mrb[0].mxu0 %v2150
        %v2263 = vpop.f32.mrb[0].mxu0
        %v2264 = vadd.f32 %v2147, %v2263
        %v2265 = vpop.f32.mrb[0].mxu0
        %2266 = vmatprep.mubr.f32.mxu0 0.0
        %2267 = vmatmul.mubr.f32.gmra.mrb[0].mxu0 %v2153
        %v2268 = vpop.f32.mrb[0].mxu0
        %v2269 = vadd.f32 %v2147, %v2268
        %v2270 = vpop.f32.mrb[0].mxu0
        %2271 = vmatprep.mubr.f32.mxu0 0.0
        %2272 = vmatmul.mubr.f32.gmra.mrb[0].mxu0 %v2156
        %v2273 = vpop.f32.mrb[0].mxu0
        %v2274 = vadd.f32 %v2147, %v2273
        %v2275 = vpop.f32.mrb[0].mxu0
        %2276 = vmatprep.mubr.f32.mxu0 0.0
        %2277 = vmatmul.mubr.f32.gmra.mrb[0].mxu0 %v2159
        %v2278 = vpop.f32.mrb[0].mxu0
        %v2279 = vadd.f32 %v2147, %v2278
        %v2280 = vpop.f32.mrb[0].mxu0
        %2281 = vmatprep.mubr.f32.mxu0 0.0
        %2282 = vmatmul.mubr.f32.gmra.mrb[0].mxu0 %v2162
        %v2283 = vpop.f32.mrb[0].mxu0
        %v2284 = vadd.f32 %v2147, %v2283
        %v2285 = vpop.f32.mrb[0].mxu0
        %2286 = vmatprep.mubr.f32.mxu0 0.0
        %2287 = vmatmul.mubr.f32.gmra.mrb[0].mxu0 %v2165
        %v2288 = vpop.f32.mrb[0].mxu0
        %v2289 = vadd.f32 %v2147, %v2288
        %v2290 = vpop.f32.mrb[0].mxu0
        %2291 = vmatprep.mubr.f32.mxu0 0.0
        %2292 = vmatmul.mubr.f32.gmra.mrb[0].mxu0 %v2168
        %v2293 = vpop.f32.mrb[0].mxu0
        %v2294 = vadd.f32 %v2147, %v2293
        %v2295 = vpop.f32.mrb[0].mxu0
        %2296 = vmatprep.mubr.f32.mxu0 0.0
        %2297 = vmatmul.mubr.f32.gmra.mrb[0].mxu0 %v2171
        %v2298 = vpop.f32.mrb[0].mxu0
        %v2299 = vadd.f32 %v2147, %v2298
        %v2300 = vpop.f32.mrb[0].mxu0
        %2301 = vmatprep.mubr.f32.mxu0 0.0
        %2302 = vmatmul.mubr.f32.gmra.mrb[0].mxu0 %v2174
        %v2303 = vpop.f32.mrb[0].mxu0
        %v2304 = vadd.f32 %v2147, %v2303
        %v2305 = vpop.f32.mrb[0].mxu0
        %2306 = vmatprep.mubr.f32.mxu0 0.0
        %2307 = vmatmul.mubr.f32.gmra.mrb[0].mxu0 %v2177
        %v2308 = vpop.f32.mrb[0].mxu0
        %v2309 = vadd.f32 %v2147, %v2308
        %v2310 = vpop.f32.mrb[0].mxu0
        %2311 = vmatprep.mubr.f32.mxu0 0.0
        %2312 = vmatmul.mubr.f32.gmra.mrb[0].mxu0 %v2180
        %v2313 = vpop.f32.mrb[0].mxu0
        %v2314 = vadd.f32 %v2147, %v2313
        %v2315 = vpop.f32.mrb[0].mxu0
        %2316 = vmatprep.mubr.f32.mxu0 0.0
        %2317 = vmatmul.mubr.f32.gmra.mrb[0].mxu0 %v2183
        %v2318 = vpop.f32.mrb[0].mxu0
        %v2319 = vadd.f32 %v2147, %v2318
        %v2320 = vpop.f32.mrb[0].mxu0
        %2321 = vmatprep.mubr.f32.mxu0 0.0
        %2322 = vmatmul.mubr.f32.gmra.mrb[0].mxu0 %v2186
        %v2323 = vpop.f32.mrb[0].mxu0
        %v2324 = vadd.f32 %v2147, %v2323
        %v2325 = vpop.f32.mrb[0].mxu0
        %2326 = vmatprep.mubr.f32.mxu0 0.0
        %2327 = vmatmul.mubr.f32.gmra.mrb[0].mxu0 %v2189
        %v2328 = vpop.f32.mrb[0].mxu0
        %v2329 = vadd.f32 %v2147, %v2328
        %v2330 = vpop.f32.mrb[0].mxu0
        %2331 = vmatprep.mubr.f32.mxu0 0.0
        %2332 = vmatmul.mubr.f32.gmra.mrb[0].mxu0 %v2192
        %v2333 = vpop.f32.mrb[0].mxu0
        %v2334 = vadd.f32 %v2147, %v2333
        %v2335 = vpop.f32.mrb[0].mxu0
        %2336 = vmatprep.mubr.f32.mxu0 0.0
        %2337 = vmatmul.mubr.f32.gmra.mrb[0].mxu0 %v2195
        %v2338 = vpop.f32.mrb[0].mxu0
        %v2339 = vadd.f32 %v2147, %v2338
        %v2340 = vpop.f32.mrb[0].mxu0
        %2341 = vdwg.mxu0
        %2342 = vst [vmem:[%s583] sm:$0xff] %v2264
        %2343 = vst [vmem:[%s583 + $0x8] sm:$0xff] %v2269
        %2344 = vst [vmem:[%s583 + $0x10] sm:$0xff] %v2274
        %2345 = vst [vmem:[%s583 + $0x18] sm:$0xff] %v2279
        %2346 = vst [vmem:[%s583 + $0x20] sm:$0xff] %v2284
        %2347 = vst [vmem:[%s583 + $0x28] sm:$0xff] %v2289
        %2348 = vst [vmem:[%s583 + $0x30] sm:$0xff] %v2294
        %2349 = vst [vmem:[%s583 + $0x38] sm:$0xff] %v2299
        %2350 = vst [vmem:[%s583 + $0x40] sm:$0xff] %v2304
        %2351 = vst [vmem:[%s583 + $0x48] sm:$0xff] %v2309
        %2352 = vst [vmem:[%s583 + $0x50] sm:$0xff] %v2314
        %2353 = vst [vmem:[%s583 + $0x58] sm:$0xff] %v2319
        %2354 = vst [vmem:[%s583 + $0x60] sm:$0xff] %v2324
        %2355 = vst [vmem:[%s583 + $0x68] sm:$0xff] %v2329
        %2356 = vst [vmem:[%s583 + $0x70] sm:$0xff] %v2334
        %2357 = vst [vmem:[%s583 + $0x78] sm:$0xff] %v2339
        %2358 = vst [vmem:[%s589] sm:$0xff] %v1420
        %2359 = vst [vmem:[%s589 + $0x8] sm:$0xff] %v1425
        %2360 = vst [vmem:[%s589 + $0x10] sm:$0xff] %v1430
        %2361 = vst [vmem:[%s589 + $0x18] sm:$0xff] %v1435
        %2362 = vst [vmem:[%s589 + $0x20] sm:$0xff] %v1440
        %2363 = vst [vmem:[%s589 + $0x28] sm:$0xff] %v1445
        %2364 = vst [vmem:[%s589 + $0x30] sm:$0xff] %v1450
        %2365 = vst [vmem:[%s589 + $0x38] sm:$0xff] %v1455
        %2366 = vst [vmem:[%s589 + $0x40] sm:$0xff] %v1460
        %2367 = vst [vmem:[%s589 + $0x48] sm:$0xff] %v1465
        %2368 = vst [vmem:[%s589 + $0x50] sm:$0xff] %v1470
        %2369 = vst [vmem:[%s589 + $0x58] sm:$0xff] %v1475
        %2370 = vst [vmem:[%s589 + $0x60] sm:$0xff] %v1480
        %2371 = vst [vmem:[%s589 + $0x68] sm:$0xff] %v1485
        %2372 = vst [vmem:[%s589 + $0x70] sm:$0xff] %v1490
        %2373 = vst [vmem:[%s589 + $0x78] sm:$0xff] %v1495
        %s2374 = sand.u32 %s386, 1
        %s2375 = scalar_lea.sflag [#allocation3], %s2374
        %s2376 = sand.u32 %s386, 1
        %s2377 = smul.addr %s2376, 128
        %s2378 = scalar_lea.vmem [#allocation2], %s2377
        %s2379 = sand.u32 %s412, 1
        %s2380 = sand.u32 %s412, 1
        %s2381 = smul.addr %s2380, 128
        %s2382 = scalar_lea.vmem [#allocation4], %s2381
        // Predicated region
        $region85: #{contrast_vae_forward.1} parent=83 // pred_check
          %p2383 = pneg %p396
        $region86: #{contrast_vae_forward.1} parent=83 // pred_check_branch
          %2385 = sbr.rel (%p2383) target = $region88
        $region87: #{contrast_vae_forward.1} parent=83 // pred_region
          %s2386 = smul.u32 16, %s32
          %s2387 = ssub.s32 25, %s2386
          %p2388 = scmp.lt.s32.totalorder %s2387, 16
          %s2389 = scalar_select %p2388, %s2387, 16
          %s2390 = smul.u32 128, %s2389
          %s2392 = ssub.s32 2048, %s2390
          %2393 = vsyncadd %s2375, %s2392
          %p2394 = scmp.ne.s32.totalorder 0, %s2390
          %s2395 = smul.addr %s2386, 128
          %s2396 = scalar_lea.hbm %s16, %s2395
          %s2397 = smul.u32 8, %s2389
          %s2398 = sshll.u32 %s2378, 4
          %s2399 = int_to_ptr.vmem [resolvable:$true] %s2398
          %s2400 = sshll.u32 %s2397, 4
          %2404 = dma.vmem_to_hbm [thread:$0]  (%p2394), %s2399, %s2400, %s2396, %s2375, 128, 128, 8
        $region88: #{contrast_vae_forward.1} parent=83 // pred_fallthru
          _
        // Predicated region
        $region89: #{contrast_vae_forward.1} parent=83 // pred_check
          %p2405 = pneg %p422
        $region90: #{contrast_vae_forward.1} parent=83 // pred_check_branch
          %2407 = sbr.rel (%p2405) target = $region92
        $region91: #{contrast_vae_forward.1} parent=83 // pred_region
          %s2408 = smul.u32 16, %s32
          %s2409 = ssub.s32 25, %s2408
          %p2410 = scmp.lt.s32.totalorder %s2409, 16
          %s2411 = scalar_select %p2410, %s2409, 16
          %s2412 = smul.u32 128, %s2411
          %p2413 = scmp.ne.s32.totalorder 0, %s2412
          %s2414 = smul.addr %s2408, 8
          %s2415 = scalar_lea.vmem %s17, %s2414
          // Predicated region
          $region93: #{contrast_vae_forward.1} parent=91 // pred_check
            %p2416 = pneg %p2413
          $region94: #{contrast_vae_forward.1} parent=91 // pred_check_branch
            %2418 = sbr.rel (%p2416) target = $region96
          $region95: #{contrast_vae_forward.1} parent=91 // pred_region
            // Predicated region
            $region97: #{contrast_vae_forward.1} parent=95 // pred_check
              _
            $region98: #{contrast_vae_forward.1} parent=95 // pred_check_branch
              %2420 = sbr.rel (0) target = $region100
            $region99: #{contrast_vae_forward.1} parent=95 // pred_region
              // Predicated region
              $region119: #{contrast_vae_forward.1} parent=99 // pred_check
                _
              $region120: #{contrast_vae_forward.1} parent=99 // pred_check_branch
                %2499 = sbr.rel (0) target = $region122
              $region121: #{contrast_vae_forward.1} parent=99 // pred_region
                %s2500 = sshrl.u32 %s2411, 4
                // While loop
                $region123: #{contrast_vae_forward.1} parent=121 // loop_pre_header
                  _
                $region124: #{contrast_vae_forward.1} parent=121 // loop_header
                  %s2502 = sphi 0, %s2504
                  %p2503 = scmp.ge.s32.totalorder %s2502, %s2500
                  %s2507 = sphi 0, %s2544
                  %s2508 = sphi %s2382, %s2547
                  %s2509 = sphi %s2415, %s2548
                $region125: #{contrast_vae_forward.1} parent=121 // loop_header_branch
                  %2506 = sbr.rel (%p2503) target = $region129
                $region126: #{contrast_vae_forward.1} parent=121 // loop_body
                  %v2510 = vld [vmem:[%s2508] sm:$0xff]
                  %2511 = vst [vmem:[%s2509] sm:$0xff] %v2510
                  %v2512 = vld [vmem:[%s2508 + $0x8] sm:$0xff]
                  %2513 = vst [vmem:[%s2509 + $0x8] sm:$0xff] %v2512
                  %v2514 = vld [vmem:[%s2508 + $0x10] sm:$0xff]
                  %2515 = vst [vmem:[%s2509 + $0x10] sm:$0xff] %v2514
                  %v2516 = vld [vmem:[%s2508 + $0x18] sm:$0xff]
                  %2517 = vst [vmem:[%s2509 + $0x18] sm:$0xff] %v2516
                  %v2518 = vld [vmem:[%s2508 + $0x20] sm:$0xff]
                  %2519 = vst [vmem:[%s2509 + $0x20] sm:$0xff] %v2518
                  %v2520 = vld [vmem:[%s2508 + $0x28] sm:$0xff]
                  %2521 = vst [vmem:[%s2509 + $0x28] sm:$0xff] %v2520
                  %v2522 = vld [vmem:[%s2508 + $0x30] sm:$0xff]
                  %2523 = vst [vmem:[%s2509 + $0x30] sm:$0xff] %v2522
                  %v2524 = vld [vmem:[%s2508 + $0x38] sm:$0xff]
                  %2525 = vst [vmem:[%s2509 + $0x38] sm:$0xff] %v2524
                  %v2526 = vld [vmem:[%s2508 + $0x40] sm:$0xff]
                  %2527 = vst [vmem:[%s2509 + $0x40] sm:$0xff] %v2526
                  %v2528 = vld [vmem:[%s2508 + $0x48] sm:$0xff]
                  %2529 = vst [vmem:[%s2509 + $0x48] sm:$0xff] %v2528
                  %v2530 = vld [vmem:[%s2508 + $0x50] sm:$0xff]
                  %2531 = vst [vmem:[%s2509 + $0x50] sm:$0xff] %v2530
                  %v2532 = vld [vmem:[%s2508 + $0x58] sm:$0xff]
                  %2533 = vst [vmem:[%s2509 + $0x58] sm:$0xff] %v2532
                  %v2534 = vld [vmem:[%s2508 + $0x60] sm:$0xff]
                  %2535 = vst [vmem:[%s2509 + $0x60] sm:$0xff] %v2534
                  %v2536 = vld [vmem:[%s2508 + $0x68] sm:$0xff]
                  %2537 = vst [vmem:[%s2509 + $0x68] sm:$0xff] %v2536
                  %v2538 = vld [vmem:[%s2508 + $0x70] sm:$0xff]
                  %2539 = vst [vmem:[%s2509 + $0x70] sm:$0xff] %v2538
                  %v2540 = vld [vmem:[%s2508 + $0x78] sm:$0xff]
                  %2541 = vst [vmem:[%s2509 + $0x78] sm:$0xff] %v2540
                  %s2542 = sadd.s32 1, %s2507
                  %p2543 = scmp.ge.s32.totalorder %s2542, %s2500
                  %s2544 = scalar_select %p2543, 0, %s2542
                  %s2545 = smul.u32 %s2544, 128
                  %s2546 = smul.u32 %s2544, 128
                  %s2547 = scalar_lea.vmem %s2382, %s2545 [#allocation4]
                  %s2548 = scalar_lea.vmem %s2415, %s2546
                $region127: #{contrast_vae_forward.1} parent=121 // loop_footer
                  %s2504 = sadd.s32 %s2502, 1
                $region128: #{contrast_vae_forward.1} parent=121 // loop_footer_branch
                  %2501 = sbr.rel target = $region124
                $region129: #{contrast_vae_forward.1} parent=121 // loop_exit
                  _
                %s2549 = sshrl.u32 %s2411, 4
                %s2550 = sand.u32 %s2411, 15
                %s2551 = smul.u32 %s2549, 16
                %s2552 = smul.u32 8, %s2551
                %s2553 = scalar_lea.vmem %s2382, %s2552 [#allocation4]
                %s2554 = smul.u32 8, %s2551
                %s2555 = scalar_lea.vmem %s2415, %s2554
                // While loop
                $region130: #{contrast_vae_forward.1} parent=121 // loop_pre_header
                  _
                $region131: #{contrast_vae_forward.1} parent=121 // loop_header
                  %s2557 = sphi 0, %s2559
                  %p2558 = scmp.ge.s32.totalorder %s2557, %s2550
                  %s2562 = sphi 0, %s2569
                  %s2563 = sphi %s2553, %s2572
                  %s2564 = sphi %s2555, %s2573
                $region132: #{contrast_vae_forward.1} parent=121 // loop_header_branch
                  %2561 = sbr.rel (%p2558) target = $region136
                $region133: #{contrast_vae_forward.1} parent=121 // loop_body
                  %v2565 = vld [vmem:[%s2563] sm:$0xff]
                  %2566 = vst [vmem:[%s2564] sm:$0xff] %v2565
                  %s2567 = sadd.s32 1, %s2562
                  %p2568 = scmp.ge.s32.totalorder %s2567, %s2550
                  %s2569 = scalar_select %p2568, 0, %s2567
                  %s2570 = smul.u32 %s2569, 8
                  %s2571 = smul.u32 %s2569, 8
                  %s2572 = scalar_lea.vmem %s2553, %s2570 [#allocation4]
                  %s2573 = scalar_lea.vmem %s2555, %s2571
                $region134: #{contrast_vae_forward.1} parent=121 // loop_footer
                  %s2559 = sadd.s32 %s2557, 1
                $region135: #{contrast_vae_forward.1} parent=121 // loop_footer_branch
                  %2556 = sbr.rel target = $region131
                $region136: #{contrast_vae_forward.1} parent=121 // loop_exit
                  _
              $region122: #{contrast_vae_forward.1} parent=99 // pred_fallthru
                _
              // Predicated region
              $region137: #{contrast_vae_forward.1} parent=99 // pred_check
                _
              $region138: #{contrast_vae_forward.1} parent=99 // pred_check_branch
                %2575 = sbr.rel target = $region140
              $region139: #{contrast_vae_forward.1} parent=99 // pred_region
                _
              $region140: #{contrast_vae_forward.1} parent=99 // pred_fallthru
                _
            $region100: #{contrast_vae_forward.1} parent=95 // pred_fallthru
              _
            // Predicated region
            $region101: #{contrast_vae_forward.1} parent=95 // pred_check
              _
            $region102: #{contrast_vae_forward.1} parent=95 // pred_check_branch
              %2422 = sbr.rel target = $region104
            $region103: #{contrast_vae_forward.1} parent=95 // pred_region
              %s2424 = sshrl.u32 %s2411, 4
              // While loop
              $region105: #{contrast_vae_forward.1} parent=103 // loop_pre_header
                _
              $region106: #{contrast_vae_forward.1} parent=103 // loop_header
                %s2426 = sphi 0, %s2428
                %p2427 = scmp.ge.s32.totalorder %s2426, %s2424
                %s2431 = sphi 0, %s2468
                %s2432 = sphi %s2382, %s2471
                %s2433 = sphi %s2415, %s2472
              $region107: #{contrast_vae_forward.1} parent=103 // loop_header_branch
                %2430 = sbr.rel (%p2427) target = $region111
              $region108: #{contrast_vae_forward.1} parent=103 // loop_body
                %v2434 = vld [vmem:[%s2432] sm:$0xff]
                %2435 = vst [vmem:[%s2433] sm:$0xff] %v2434
                %v2436 = vld [vmem:[%s2432 + $0x8] sm:$0xff]
                %2437 = vst [vmem:[%s2433 + $0x8] sm:$0xff] %v2436
                %v2438 = vld [vmem:[%s2432 + $0x10] sm:$0xff]
                %2439 = vst [vmem:[%s2433 + $0x10] sm:$0xff] %v2438
                %v2440 = vld [vmem:[%s2432 + $0x18] sm:$0xff]
                %2441 = vst [vmem:[%s2433 + $0x18] sm:$0xff] %v2440
                %v2442 = vld [vmem:[%s2432 + $0x20] sm:$0xff]
                %2443 = vst [vmem:[%s2433 + $0x20] sm:$0xff] %v2442
                %v2444 = vld [vmem:[%s2432 + $0x28] sm:$0xff]
                %2445 = vst [vmem:[%s2433 + $0x28] sm:$0xff] %v2444
                %v2446 = vld [vmem:[%s2432 + $0x30] sm:$0xff]
                %2447 = vst [vmem:[%s2433 + $0x30] sm:$0xff] %v2446
                %v2448 = vld [vmem:[%s2432 + $0x38] sm:$0xff]
                %2449 = vst [vmem:[%s2433 + $0x38] sm:$0xff] %v2448
                %v2450 = vld [vmem:[%s2432 + $0x40] sm:$0xff]
                %2451 = vst [vmem:[%s2433 + $0x40] sm:$0xff] %v2450
                %v2452 = vld [vmem:[%s2432 + $0x48] sm:$0xff]
                %2453 = vst [vmem:[%s2433 + $0x48] sm:$0xff] %v2452
                %v2454 = vld [vmem:[%s2432 + $0x50] sm:$0xff]
                %2455 = vst [vmem:[%s2433 + $0x50] sm:$0xff] %v2454
                %v2456 = vld [vmem:[%s2432 + $0x58] sm:$0xff]
                %2457 = vst [vmem:[%s2433 + $0x58] sm:$0xff] %v2456
                %v2458 = vld [vmem:[%s2432 + $0x60] sm:$0xff]
                %2459 = vst [vmem:[%s2433 + $0x60] sm:$0xff] %v2458
                %v2460 = vld [vmem:[%s2432 + $0x68] sm:$0xff]
                %2461 = vst [vmem:[%s2433 + $0x68] sm:$0xff] %v2460
                %v2462 = vld [vmem:[%s2432 + $0x70] sm:$0xff]
                %2463 = vst [vmem:[%s2433 + $0x70] sm:$0xff] %v2462
                %v2464 = vld [vmem:[%s2432 + $0x78] sm:$0xff]
                %2465 = vst [vmem:[%s2433 + $0x78] sm:$0xff] %v2464
                %s2466 = sadd.s32 1, %s2431
                %p2467 = scmp.ge.s32.totalorder %s2466, %s2424
                %s2468 = scalar_select %p2467, 0, %s2466
                %s2469 = smul.u32 %s2468, 128
                %s2470 = smul.u32 %s2468, 128
                %s2471 = scalar_lea.vmem %s2382, %s2469 [#allocation4]
                %s2472 = scalar_lea.vmem %s2415, %s2470
              $region109: #{contrast_vae_forward.1} parent=103 // loop_footer
                %s2428 = sadd.s32 %s2426, 1
              $region110: #{contrast_vae_forward.1} parent=103 // loop_footer_branch
                %2425 = sbr.rel target = $region106
              $region111: #{contrast_vae_forward.1} parent=103 // loop_exit
                _
              %s2473 = sshrl.u32 %s2411, 4
              %s2474 = sand.u32 %s2411, 15
              %s2475 = smul.u32 %s2473, 16
              %s2476 = smul.u32 8, %s2475
              %s2477 = scalar_lea.vmem %s2382, %s2476 [#allocation4]
              %s2478 = smul.u32 8, %s2475
              %s2479 = scalar_lea.vmem %s2415, %s2478
              // While loop
              $region112: #{contrast_vae_forward.1} parent=103 // loop_pre_header
                _
              $region113: #{contrast_vae_forward.1} parent=103 // loop_header
                %s2481 = sphi 0, %s2483
                %p2482 = scmp.ge.s32.totalorder %s2481, %s2474
                %s2486 = sphi 0, %s2493
                %s2487 = sphi %s2477, %s2496
                %s2488 = sphi %s2479, %s2497
              $region114: #{contrast_vae_forward.1} parent=103 // loop_header_branch
                %2485 = sbr.rel (%p2482) target = $region118
              $region115: #{contrast_vae_forward.1} parent=103 // loop_body
                %v2489 = vld [vmem:[%s2487] sm:$0xff]
                %2490 = vst [vmem:[%s2488] sm:$0xff] %v2489
                %s2491 = sadd.s32 1, %s2486
                %p2492 = scmp.ge.s32.totalorder %s2491, %s2474
                %s2493 = scalar_select %p2492, 0, %s2491
                %s2494 = smul.u32 %s2493, 8
                %s2495 = smul.u32 %s2493, 8
                %s2496 = scalar_lea.vmem %s2477, %s2494 [#allocation4]
                %s2497 = scalar_lea.vmem %s2479, %s2495
              $region116: #{contrast_vae_forward.1} parent=103 // loop_footer
                %s2483 = sadd.s32 %s2481, 1
              $region117: #{contrast_vae_forward.1} parent=103 // loop_footer_branch
                %2480 = sbr.rel target = $region113
              $region118: #{contrast_vae_forward.1} parent=103 // loop_exit
                _
            $region104: #{contrast_vae_forward.1} parent=95 // pred_fallthru
              _
          $region96: #{contrast_vae_forward.1} parent=91 // pred_fallthru
            _
          %2576 = vnop
        $region92: #{contrast_vae_forward.1} parent=83 // pred_fallthru
          _
      $region84: #{contrast_vae_forward.1} parent=5 // pred_fallthru
        _
      %p2577 = scmp.le.s32.totalorder 2, %s27
      // Predicated region
      $region141: #{contrast_vae_forward.1} parent=5 // pred_check
        %p2578 = pneg %p2577
      $region142: #{contrast_vae_forward.1} parent=5 // pred_check_branch
        %2580 = sbr.rel (%p2578) target = $region144
      $region143: #{contrast_vae_forward.1} parent=5 // pred_region
        %s2581 = ssub.s32 %s27, 2
        // Predicated region
        $region145: #{contrast_vae_forward.1} parent=143 // pred_check
          %p2582 = pneg %p402
        $region146: #{contrast_vae_forward.1} parent=143 // pred_check_branch
          %2584 = sbr.rel (%p2582) target = $region148
        $region147: #{contrast_vae_forward.1} parent=143 // pred_region
          %s2585 = sand.u32 %s387, 1
          %s2586 = scalar_lea.sflag [#allocation3], %s2585
          %s2587 = sand.u32 %s387, 1
          %s2588 = smul.addr %s2587, 128
          %s2589 = scalar_lea.vmem [#allocation2], %s2588
          %2590 = dma.done %s2586, 2048
        $region148: #{contrast_vae_forward.1} parent=143 // pred_fallthru
          _
        // Predicated region
        $region149: #{contrast_vae_forward.1} parent=143 // pred_check
          %p2591 = pneg %p428
        $region150: #{contrast_vae_forward.1} parent=143 // pred_check_branch
          %2593 = sbr.rel (%p2591) target = $region152
        $region151: #{contrast_vae_forward.1} parent=143 // pred_region
          %s2594 = sand.u32 %s413, 1
          %s2595 = sand.u32 %s413, 1
          %s2596 = smul.addr %s2595, 128
          %s2597 = scalar_lea.vmem [#allocation4], %s2596
        $region152: #{contrast_vae_forward.1} parent=143 // pred_fallthru
          _
      $region144: #{contrast_vae_forward.1} parent=5 // pred_fallthru
        _
    $region6: #{contrast_vae_forward.1} parent=1 // loop_footer
      %s31 = sadd.s32 1, %s27
    $region7: #{contrast_vae_forward.1} parent=1 // loop_footer_branch
      %26 = sbr.rel target = $region3
    $region8: #{contrast_vae_forward.1} parent=1 // loop_exit
      _
    %2598 = vsyncpa [#allocation3], 1
    %s2599 = scalar_lea.sflag [#allocation3], 1
    %2600 = vsyncpa %s2599, 1

// kernel: contrast_vae_forward.1
$region0: #{contrast_vae_forward.1}
  #allocation0 [shape = 'u32[]', space=smem, size = 0x4, offset = 0x4, fixed_abs, tag = 'smem constant byte address 0x4 - core index']
  #allocation1 [shape = 'u32[144,128]{1,0:T(1,128)}', space=vmem, size = 0x12000, scoped, tag = 'internal scratch']
  %s0 = inlined_call_operand.vmem [shape: f32[200,128], index: 0, kind: input, shape index: {}]
  %s1 = inlined_call_operand.vmem [shape: f32[200,32], index: 1, kind: input, shape index: {}]
  %s2 = inlined_call_operand.vmem [shape: f32[128,64], index: 2, kind: input, shape index: {}]
  %s3 = inlined_call_operand.vmem [shape: f32[1,64], index: 3, kind: input, shape index: {}]
  %s4 = inlined_call_operand.vmem [shape: f32[64,64], index: 4, kind: input, shape index: {}]
  %s5 = inlined_call_operand.vmem [shape: f32[1,64], index: 5, kind: input, shape index: {}]
  %s6 = inlined_call_operand.vmem [shape: f32[64,32], index: 6, kind: input, shape index: {}]
  %s7 = inlined_call_operand.vmem [shape: f32[1,32], index: 7, kind: input, shape index: {}]
  %s8 = inlined_call_operand.vmem [shape: f32[32,128], index: 8, kind: input, shape index: {}]
  %s9 = inlined_call_operand.vmem [shape: f32[1,128], index: 9, kind: input, shape index: {}]
  %s10 = inlined_call_operand.vmem [shape: f32[32,64], index: 10, kind: input, shape index: {}]
  %s11 = inlined_call_operand.vmem [shape: f32[1,64], index: 11, kind: input, shape index: {}]
  %s12 = inlined_call_operand.vmem [shape: f32[64,64], index: 12, kind: input, shape index: {}]
  %s13 = inlined_call_operand.vmem [shape: f32[1,64], index: 13, kind: input, shape index: {}]
  %s14 = inlined_call_operand.vmem [shape: f32[64,128], index: 14, kind: input, shape index: {}]
  %s15 = inlined_call_operand.vmem [shape: f32[1,128], index: 15, kind: input, shape index: {}]
  %s16 = inlined_call_operand.hbm [shape: f32[200,128], index: 16, kind: output, shape index: {0}]
  %s17 = inlined_call_operand.vmem [shape: f32[200,128], index: 17, kind: output, shape index: {1}]
  %18 = xla_tuple %s16, %s17
  %s19 = sld [smem:[#allocation0]]
  $region153: #{contrast_vae_forward.1} parent=0
    _
  %s21 = ssub.s32 1, %s19
  %s22 = scalar_select 0, %s21, %s19
  $region1: #{contrast_vae_forward.1} parent=0
    #allocation2 [shape = 'u8[131072]{0}', space=vmem, size = 0x20000, scoped, tag = 'output window, operand 0']
    #allocation3 [shape = 's32[2]{0}', space=sflag, size = 0x8, scoped, tag = 'scoped memory for contrast_vae_forward.1']
    #allocation4 [shape = 'u8[131072]{0}', space=vmem, size = 0x20000, scoped, tag = 'output window, operand 1']
    %23 = vsyncpa [#allocation3], 0
    %s24 = scalar_lea.sflag [#allocation3], 1
    %25 = vsyncpa %s24, 0
    loop: start=0, step=1, limit=4
    $region2: #{contrast_vae_forward.1} parent=1 // loop_pre_header
      _
    $region3: #{contrast_vae_forward.1} parent=1 // loop_header
      %s27 = sphi 0, %s31
      %p28 = scmp.ge.s32.totalorder %s27, 4
      %s37 = sphi 0, %s39
      %s40 = sphi 0, %s37
      %s41 = sphi 0, %s40
      %s57 = sphi 0, %s41
      %s63 = sphi 0, %s65
      %s66 = sphi 0, %s63
      %s67 = sphi 0, %s66
      %s83 = sphi 0, %s67
      %s87 = sphi 0, %s87
      %s89 = sphi 0, %s87
      %s90 = sphi 0, %s89
      %s104 = sphi 0, %s90
      %s108 = sphi 0, %s108
      %s110 = sphi 0, %s108
      %s111 = sphi 0, %s110
      %s125 = sphi 0, %s111
      %s129 = sphi 0, %s129
      %s131 = sphi 0, %s129
      %s132 = sphi 0, %s131
      %s146 = sphi 0, %s132
      %s150 = sphi 0, %s150
      %s152 = sphi 0, %s150
      %s153 = sphi 0, %s152
      %s167 = sphi 0, %s153
      %s171 = sphi 0, %s171
      %s173 = sphi 0, %s171
      %s174 = sphi 0, %s173
      %s188 = sphi 0, %s174
      %s192 = sphi 0, %s192
      %s194 = sphi 0, %s192
      %s195 = sphi 0, %s194
      %s209 = sphi 0, %s195
      %s213 = sphi 0, %s213
      %s215 = sphi 0, %s213
      %s216 = sphi 0, %s215
      %s230 = sphi 0, %s216
      %s234 = sphi 0, %s234
      %s236 = sphi 0, %s234
      %s237 = sphi 0, %s236
      %s251 = sphi 0, %s237
      %s255 = sphi 0, %s255
      %s257 = sphi 0, %s255
      %s258 = sphi 0, %s257
      %s272 = sphi 0, %s258
      %s276 = sphi 0, %s276
      %s278 = sphi 0, %s276
      %s279 = sphi 0, %s278
      %s293 = sphi 0, %s279
      %s297 = sphi 0, %s297
      %s299 = sphi 0, %s297
      %s300 = sphi 0, %s299
      %s314 = sphi 0, %s300
      %s318 = sphi 0, %s318
      %s320 = sphi 0, %s318
      %s321 = sphi 0, %s320
      %s335 = sphi 0, %s321
      %s339 = sphi 0, %s339
      %s341 = sphi 0, %s339
      %s342 = sphi 0, %s341
      %s356 = sphi 0, %s342
      %s360 = sphi 0, %s360
      %s362 = sphi 0, %s360
      %s363 = sphi 0, %s362
      %s377 = sphi 0, %s363
      %s383 = sphi 0, %s385
      %s386 = sphi 0, %s383
      %s387 = sphi 0, %s386
      %s403 = sphi 0, %s387
      %s409 = sphi 0, %s411
      %s412 = sphi 0, %s409
      %s413 = sphi 0, %s412
      %s429 = sphi 0, %s413
    $region4: #{contrast_vae_forward.1} parent=1 // loop_header_branch
      %30 = sbr.rel (%p28) target = $region8
    $region5: #{contrast_vae_forward.1} parent=1 // loop_body
      %s32 = ssub.s32 %s27, 1
      %s33 = ssub.s32 %s27, 2
      %s34 = sadd.s32 %s27, 1
      %s35 = ssub.s32 %s27, %s34
      %p36 = scmp.eq.s32.totalorder %s35, 0
      %s38 = sadd.s32 %s37, 1
      %s39 = scalar_select %p36, %s37, %s38
      %p42 = pneg %p36
      %p43 = scmp.eq.s32.totalorder %s27, 1
      %p44 = por %p42, %p43
      %p45 = scmp.ne.s32.totalorder %s37, %s40
      %p46 = scmp.eq.s32.totalorder %s27, 0
      %p47 = por %p45, %p46
      %p48 = scmp.ne.s32.totalorder %s37, %s40
      %p49 = scmp.eq.s32.totalorder %s32, 1
      %p50 = por %p48, %p49
      %p51 = scmp.ne.s32.totalorder %s40, %s41
      %p52 = scmp.eq.s32.totalorder %s32, 0
      %p53 = por %p51, %p52
      %p54 = scmp.ne.s32.totalorder %s40, %s41
      %p55 = scmp.eq.s32.totalorder %s33, 1
      %p56 = por %p54, %p55
      %p58 = scmp.ne.s32.totalorder %s41, %s57
      %p59 = scmp.eq.s32.totalorder %s33, 0
      %p60 = por %p58, %p59
      %s61 = ssub.s32 %s27, %s34
      %p62 = scmp.eq.s32.totalorder %s61, 0
      %s64 = sadd.s32 %s63, 1
      %s65 = scalar_select %p62, %s63, %s64
      %p68 = pneg %p62
      %p69 = scmp.eq.s32.totalorder %s27, 1
      %p70 = por %p68, %p69
      %p71 = scmp.ne.s32.totalorder %s63, %s66
      %p72 = scmp.eq.s32.totalorder %s27, 0
      %p73 = por %p71, %p72
      %p74 = scmp.ne.s32.totalorder %s63, %s66
      %p75 = scmp.eq.s32.totalorder %s32, 1
      %p76 = por %p74, %p75
      %p77 = scmp.ne.s32.totalorder %s66, %s67
      %p78 = scmp.eq.s32.totalorder %s32, 0
      %p79 = por %p77, %p78
      %p80 = scmp.ne.s32.totalorder %s66, %s67
      %p81 = scmp.eq.s32.totalorder %s33, 1
      %p82 = por %p80, %p81
      %p84 = scmp.ne.s32.totalorder %s67, %s83
      %p85 = scmp.eq.s32.totalorder %s33, 0
      %p86 = por %p84, %p85
      %s88 = sadd.s32 %s87, 1
      %p91 = scmp.eq.s32.totalorder %s27, 1
      %p92 = scmp.ne.s32.totalorder %s87, %s89
      %p93 = scmp.eq.s32.totalorder %s27, 0
      %p94 = por %p92, %p93
      %p95 = scmp.ne.s32.totalorder %s87, %s89
      %p96 = scmp.eq.s32.totalorder %s32, 1
      %p97 = por %p95, %p96
      %p98 = scmp.ne.s32.totalorder %s89, %s90
      %p99 = scmp.eq.s32.totalorder %s32, 0
      %p100 = por %p98, %p99
      %p101 = scmp.ne.s32.totalorder %s89, %s90
      %p102 = scmp.eq.s32.totalorder %s33, 1
      %p103 = por %p101, %p102
      %p105 = scmp.ne.s32.totalorder %s90, %s104
      %p106 = scmp.eq.s32.totalorder %s33, 0
      %p107 = por %p105, %p106
      %s109 = sadd.s32 %s108, 1
      %p112 = scmp.eq.s32.totalorder %s27, 1
      %p113 = scmp.ne.s32.totalorder %s108, %s110
      %p114 = scmp.eq.s32.totalorder %s27, 0
      %p115 = por %p113, %p114
      %p116 = scmp.ne.s32.totalorder %s108, %s110
      %p117 = scmp.eq.s32.totalorder %s32, 1
      %p118 = por %p116, %p117
      %p119 = scmp.ne.s32.totalorder %s110, %s111
      %p120 = scmp.eq.s32.totalorder %s32, 0
      %p121 = por %p119, %p120
      %p122 = scmp.ne.s32.totalorder %s110, %s111
      %p123 = scmp.eq.s32.totalorder %s33, 1
      %p124 = por %p122, %p123
      %p126 = scmp.ne.s32.totalorder %s111, %s125
      %p127 = scmp.eq.s32.totalorder %s33, 0
      %p128 = por %p126, %p127
      %s130 = sadd.s32 %s129, 1
      %p133 = scmp.eq.s32.totalorder %s27, 1
      %p134 = scmp.ne.s32.totalorder %s129, %s131
      %p135 = scmp.eq.s32.totalorder %s27, 0
      %p136 = por %p134, %p135
      %p137 = scmp.ne.s32.totalorder %s129, %s131
      %p138 = scmp.eq.s32.totalorder %s32, 1
      %p139 = por %p137, %p138
      %p140 = scmp.ne.s32.totalorder %s131, %s132
      %p141 = scmp.eq.s32.totalorder %s32, 0
      %p142 = por %p140, %p141
      %p143 = scmp.ne.s32.totalorder %s131, %s132
      %p144 = scmp.eq.s32.totalorder %s33, 1
      %p145 = por %p143, %p144
      %p147 = scmp.ne.s32.totalorder %s132, %s146
      %p148 = scmp.eq.s32.totalorder %s33, 0
      %p149 = por %p147, %p148
      %s151 = sadd.s32 %s150, 1
      %p154 = scmp.eq.s32.totalorder %s27, 1
      %p155 = scmp.ne.s32.totalorder %s150, %s152
      %p156 = scmp.eq.s32.totalorder %s27, 0
      %p157 = por %p155, %p156
      %p158 = scmp.ne.s32.totalorder %s150, %s152
      %p159 = scmp.eq.s32.totalorder %s32, 1
      %p160 = por %p158, %p159
      %p161 = scmp.ne.s32.totalorder %s152, %s153
      %p162 = scmp.eq.s32.totalorder %s32, 0
      %p163 = por %p161, %p162
      %p164 = scmp.ne.s32.totalorder %s152, %s153
      %p165 = scmp.eq.s32.totalorder %s33, 1
      %p166 = por %p164, %p165
      %p168 = scmp.ne.s32.totalorder %s153, %s167
      %p169 = scmp.eq.s32.totalorder %s33, 0
      %p170 = por %p168, %p169
      %s172 = sadd.s32 %s171, 1
      %p175 = scmp.eq.s32.totalorder %s27, 1
      %p176 = scmp.ne.s32.totalorder %s171, %s173
      %p177 = scmp.eq.s32.totalorder %s27, 0
      %p178 = por %p176, %p177
      %p179 = scmp.ne.s32.totalorder %s171, %s173
      %p180 = scmp.eq.s32.totalorder %s32, 1
      %p181 = por %p179, %p180
      %p182 = scmp.ne.s32.totalorder %s173, %s174
      %p183 = scmp.eq.s32.totalorder %s32, 0
      %p184 = por %p182, %p183
      %p185 = scmp.ne.s32.totalorder %s173, %s174
      %p186 = scmp.eq.s32.totalorder %s33, 1
      %p187 = por %p185, %p186
      %p189 = scmp.ne.s32.totalorder %s174, %s188
      %p190 = scmp.eq.s32.totalorder %s33, 0
      %p191 = por %p189, %p190
      %s193 = sadd.s32 %s192, 1
      %p196 = scmp.eq.s32.totalorder %s27, 1
      %p197 = scmp.ne.s32.totalorder %s192, %s194
      %p198 = scmp.eq.s32.totalorder %s27, 0
      %p199 = por %p197, %p198
      %p200 = scmp.ne.s32.totalorder %s192, %s194
      %p201 = scmp.eq.s32.totalorder %s32, 1
      %p202 = por %p200, %p201
      %p203 = scmp.ne.s32.totalorder %s194, %s195
      %p204 = scmp.eq.s32.totalorder %s32, 0
      %p205 = por %p203, %p204
      %p206 = scmp.ne.s32.totalorder %s194, %s195
      %p207 = scmp.eq.s32.totalorder %s33, 1
      %p208 = por %p206, %p207
      %p210 = scmp.ne.s32.totalorder %s195, %s209
      %p211 = scmp.eq.s32.totalorder %s33, 0
      %p212 = por %p210, %p211
      %s214 = sadd.s32 %s213, 1
      %p217 = scmp.eq.s32.totalorder %s27, 1
      %p218 = scmp.ne.s32.totalorder %s213, %s215
      %p219 = scmp.eq.s32.totalorder %s27, 0
      %p220 = por %p218, %p219
      %p221 = scmp.ne.s32.totalorder %s213, %s215
      %p222 = scmp.eq.s32.totalorder %s32, 1
      %p223 = por %p221, %p222
      %p224 = scmp.ne.s32.totalorder %s215, %s216
      %p225 = scmp.eq.s32.totalorder %s32, 0
      %p226 = por %p224, %p225
      %p227 = scmp.ne.s32.totalorder %s215, %s216
      %p228 = scmp.eq.s32.totalorder %s33, 1
      %p229 = por %p227, %p228
      %p231 = scmp.ne.s32.totalorder %s216, %s230
      %p232 = scmp.eq.s32.totalorder %s33, 0
      %p233 = por %p231, %p232
      %s235 = sadd.s32 %s234, 1
      %p238 = scmp.eq.s32.totalorder %s27, 1
      %p239 = scmp.ne.s32.totalorder %s234, %s236
      %p240 = scmp.eq.s32.totalorder %s27, 0
      %p241 = por %p239, %p240
      %p242 = scmp.ne.s32.totalorder %s234, %s236
      %p243 = scmp.eq.s32.totalorder %s32, 1
      %p244 = por %p242, %p243
      %p245 = scmp.ne.s32.totalorder %s236, %s237
      %p246 = scmp.eq.s32.totalorder %s32, 0
      %p247 = por %p245, %p246
      %p248 = scmp.ne.s32.totalorder %s236, %s237
      %p249 = scmp.eq.s32.totalorder %s33, 1
      %p250 = por %p248, %p249
      %p252 = scmp.ne.s32.totalorder %s237, %s251
      %p253 = scmp.eq.s32.totalorder %s33, 0
      %p254 = por %p252, %p253
      %s256 = sadd.s32 %s255, 1
      %p259 = scmp.eq.s32.totalorder %s27, 1
      %p260 = scmp.ne.s32.totalorder %s255, %s257
      %p261 = scmp.eq.s32.totalorder %s27, 0
      %p262 = por %p260, %p261
      %p263 = scmp.ne.s32.totalorder %s255, %s257
      %p264 = scmp.eq.s32.totalorder %s32, 1
      %p265 = por %p263, %p264
      %p266 = scmp.ne.s32.totalorder %s257, %s258
      %p267 = scmp.eq.s32.totalorder %s32, 0
      %p268 = por %p266, %p267
      %p269 = scmp.ne.s32.totalorder %s257, %s258
      %p270 = scmp.eq.s32.totalorder %s33, 1
      %p271 = por %p269, %p270
      %p273 = scmp.ne.s32.totalorder %s258, %s272
      %p274 = scmp.eq.s32.totalorder %s33, 0
      %p275 = por %p273, %p274
      %s277 = sadd.s32 %s276, 1
      %p280 = scmp.eq.s32.totalorder %s27, 1
      %p281 = scmp.ne.s32.totalorder %s276, %s278
      %p282 = scmp.eq.s32.totalorder %s27, 0
      %p283 = por %p281, %p282
      %p284 = scmp.ne.s32.totalorder %s276, %s278
      %p285 = scmp.eq.s32.totalorder %s32, 1
      %p286 = por %p284, %p285
      %p287 = scmp.ne.s32.totalorder %s278, %s279
      %p288 = scmp.eq.s32.totalorder %s32, 0
      %p289 = por %p287, %p288
      %p290 = scmp.ne.s32.totalorder %s278, %s279
      %p291 = scmp.eq.s32.totalorder %s33, 1
      %p292 = por %p290, %p291
      %p294 = scmp.ne.s32.totalorder %s279, %s293
      %p295 = scmp.eq.s32.totalorder %s33, 0
      %p296 = por %p294, %p295
      %s298 = sadd.s32 %s297, 1
      %p301 = scmp.eq.s32.totalorder %s27, 1
      %p302 = scmp.ne.s32.totalorder %s297, %s299
      %p303 = scmp.eq.s32.totalorder %s27, 0
      %p304 = por %p302, %p303
      %p305 = scmp.ne.s32.totalorder %s297, %s299
      %p306 = scmp.eq.s32.totalorder %s32, 1
      %p307 = por %p305, %p306
      %p308 = scmp.ne.s32.totalorder %s299, %s300
      %p309 = scmp.eq.s32.totalorder %s32, 0
      %p310 = por %p308, %p309
      %p311 = scmp.ne.s32.totalorder %s299, %s300
      %p312 = scmp.eq.s32.totalorder %s33, 1
      %p313 = por %p311, %p312
      %p315 = scmp.ne.s32.totalorder %s300, %s314
      %p316 = scmp.eq.s32.totalorder %s33, 0
      %p317 = por %p315, %p316
      %s319 = sadd.s32 %s318, 1
      %p322 = scmp.eq.s32.totalorder %s27, 1
      %p323 = scmp.ne.s32.totalorder %s318, %s320
      %p324 = scmp.eq.s32.totalorder %s27, 0
      %p325 = por %p323, %p324
      %p326 = scmp.ne.s32.totalorder %s318, %s320
      %p327 = scmp.eq.s32.totalorder %s32, 1
      %p328 = por %p326, %p327
      %p329 = scmp.ne.s32.totalorder %s320, %s321
      %p330 = scmp.eq.s32.totalorder %s32, 0
      %p331 = por %p329, %p330
      %p332 = scmp.ne.s32.totalorder %s320, %s321
      %p333 = scmp.eq.s32.totalorder %s33, 1
      %p334 = por %p332, %p333
      %p336 = scmp.ne.s32.totalorder %s321, %s335
      %p337 = scmp.eq.s32.totalorder %s33, 0
      %p338 = por %p336, %p337
      %s340 = sadd.s32 %s339, 1
      %p343 = scmp.eq.s32.totalorder %s27, 1
      %p344 = scmp.ne.s32.totalorder %s339, %s341
      %p345 = scmp.eq.s32.totalorder %s27, 0
      %p346 = por %p344, %p345
      %p347 = scmp.ne.s32.totalorder %s339, %s341
      %p348 = scmp.eq.s32.totalorder %s32, 1
      %p349 = por %p347, %p348
      %p350 = scmp.ne.s32.totalorder %s341, %s342
      %p351 = scmp.eq.s32.totalorder %s32, 0
      %p352 = por %p350, %p351
      %p353 = scmp.ne.s32.totalorder %s341, %s342
      %p354 = scmp.eq.s32.totalorder %s33, 1
      %p355 = por %p353, %p354
      %p357 = scmp.ne.s32.totalorder %s342, %s356
      %p358 = scmp.eq.s32.totalorder %s33, 0
      %p359 = por %p357, %p358
      %s361 = sadd.s32 %s360, 1
      %p364 = scmp.eq.s32.totalorder %s27, 1
      %p365 = scmp.ne.s32.totalorder %s360, %s362
      %p366 = scmp.eq.s32.totalorder %s27, 0
      %p367 = por %p365, %p366
      %p368 = scmp.ne.s32.totalorder %s360, %s362
      %p369 = scmp.eq.s32.totalorder %s32, 1
      %p370 = por %p368, %p369
      %p371 = scmp.ne.s32.totalorder %s362, %s363
      %p372 = scmp.eq.s32.totalorder %s32, 0
      %p373 = por %p371, %p372
      %p374 = scmp.ne.s32.totalorder %s362, %s363
      %p375 = scmp.eq.s32.totalorder %s33, 1
      %p376 = por %p374, %p375
      %p378 = scmp.ne.s32.totalorder %s363, %s377
      %p379 = scmp.eq.s32.totalorder %s33, 0
      %p380 = por %p378, %p379
      %s381 = ssub.s32 %s27, %s34
      %p382 = scmp.eq.s32.totalorder %s381, 0
      %s384 = sadd.s32 %s383, 1
      %s385 = scalar_select %p382, %s383, %s384
      %p388 = pneg %p382
      %p389 = scmp.eq.s32.totalorder %s27, 1
      %p390 = por %p388, %p389
      %p391 = scmp.ne.s32.totalorder %s383, %s386
      %p392 = scmp.eq.s32.totalorder %s27, 0
      %p393 = por %p391, %p392
      %p394 = scmp.ne.s32.totalorder %s383, %s386
      %p395 = scmp.eq.s32.totalorder %s32, 1
      %p396 = por %p394, %p395
      %p397 = scmp.ne.s32.totalorder %s386, %s387
      %p398 = scmp.eq.s32.totalorder %s32, 0
      %p399 = por %p397, %p398
      %p400 = scmp.ne.s32.totalorder %s386, %s387
      %p401 = scmp.eq.s32.totalorder %s33, 1
      %p402 = por %p400, %p401
      %p404 = scmp.ne.s32.totalorder %s387, %s403
      %p405 = scmp.eq.s32.totalorder %s33, 0
      %p406 = por %p404, %p405
      %s407 = ssub.s32 %s27, %s34
      %p408 = scmp.eq.s32.totalorder %s407, 0
      %s410 = sadd.s32 %s409, 1
      %s411 = scalar_select %p408, %s409, %s410
      %p414 = pneg %p408
      %p415 = scmp.eq.s32.totalorder %s27, 1
      %p416 = por %p414, %p415
      %p417 = scmp.ne.s32.totalorder %s409, %s412
      %p418 = scmp.eq.s32.totalorder %s27, 0
      %p419 = por %p417, %p418
      %p420 = scmp.ne.s32.totalorder %s409, %s412
      %p421 = scmp.eq.s32.totalorder %s32, 1
      %p422 = por %p420, %p421
      %p423 = scmp.ne.s32.totalorder %s412, %s413
      %p424 = scmp.eq.s32.totalorder %s32, 0
      %p425 = por %p423, %p424
      %p426 = scmp.ne.s32.totalorder %s412, %s413
      %p427 = scmp.eq.s32.totalorder %s33, 1
      %p428 = por %p426, %p427
      %p430 = scmp.ne.s32.totalorder %s413, %s429
      %p431 = scmp.eq.s32.totalorder %s33, 0
      %p432 = por %p430, %p431
      %p433 = scmp.le.s32.totalorder 1, %s27
      %p434 = scmp.lt.s32.totalorder %s27, 3
      %p435 = pnand %p433, %p434
      %p436 = pneg %p435
      // Predicated region
      $region9: #{contrast_vae_forward.1} parent=5 // pred_check
        _
      $region10: #{contrast_vae_forward.1} parent=5 // pred_check_branch
        %438 = sbr.rel (%p435) target = $region12
      $region11: #{contrast_vae_forward.1} parent=5 // pred_region
        %s439 = ssub.s32 %s27, 1
        // Predicated region
        $region13: #{contrast_vae_forward.1} parent=11 // pred_check
          %p440 = pneg %p100
        $region14: #{contrast_vae_forward.1} parent=11 // pred_check_branch
          %442 = sbr.rel (%p440) target = $region16
        $region15: #{contrast_vae_forward.1} parent=11 // pred_region
          _
        $region16: #{contrast_vae_forward.1} parent=11 // pred_fallthru
          _
        // Predicated region
        $region17: #{contrast_vae_forward.1} parent=11 // pred_check
          %p443 = pneg %p121
        $region18: #{contrast_vae_forward.1} parent=11 // pred_check_branch
          %445 = sbr.rel (%p443) target = $region20
        $region19: #{contrast_vae_forward.1} parent=11 // pred_region
          _
        $region20: #{contrast_vae_forward.1} parent=11 // pred_fallthru
          _
        // Predicated region
        $region21: #{contrast_vae_forward.1} parent=11 // pred_check
          %p446 = pneg %p142
        $region22: #{contrast_vae_forward.1} parent=11 // pred_check_branch
          %448 = sbr.rel (%p446) target = $region24
        $region23: #{contrast_vae_forward.1} parent=11 // pred_region
          _
        $region24: #{contrast_vae_forward.1} parent=11 // pred_fallthru
          _
        // Predicated region
        $region25: #{contrast_vae_forward.1} parent=11 // pred_check
          %p449 = pneg %p163
        $region26: #{contrast_vae_forward.1} parent=11 // pred_check_branch
          %451 = sbr.rel (%p449) target = $region28
        $region27: #{contrast_vae_forward.1} parent=11 // pred_region
          _
        $region28: #{contrast_vae_forward.1} parent=11 // pred_fallthru
          _
        // Predicated region
        $region29: #{contrast_vae_forward.1} parent=11 // pred_check
          %p452 = pneg %p184
        $region30: #{contrast_vae_forward.1} parent=11 // pred_check_branch
          %454 = sbr.rel (%p452) target = $region32
        $region31: #{contrast_vae_forward.1} parent=11 // pred_region
          _
        $region32: #{contrast_vae_forward.1} parent=11 // pred_fallthru
          _
        // Predicated region
        $region33: #{contrast_vae_forward.1} parent=11 // pred_check
          %p455 = pneg %p205
        $region34: #{contrast_vae_forward.1} parent=11 // pred_check_branch
          %457 = sbr.rel (%p455) target = $region36
        $region35: #{contrast_vae_forward.1} parent=11 // pred_region
          _
        $region36: #{contrast_vae_forward.1} parent=11 // pred_fallthru
          _
        // Predicated region
        $region37: #{contrast_vae_forward.1} parent=11 // pred_check
          %p458 = pneg %p226
        $region38: #{contrast_vae_forward.1} parent=11 // pred_check_branch
          %460 = sbr.rel (%p458) target = $region40
        $region39: #{contrast_vae_forward.1} parent=11 // pred_region
          _
        $region40: #{contrast_vae_forward.1} parent=11 // pred_fallthru
          _
        // Predicated region
        $region41: #{contrast_vae_forward.1} parent=11 // pred_check
          %p461 = pneg %p247
        $region42: #{contrast_vae_forward.1} parent=11 // pred_check_branch
          %463 = sbr.rel (%p461) target = $region44
        $region43: #{contrast_vae_forward.1} parent=11 // pred_region
          _
        $region44: #{contrast_vae_forward.1} parent=11 // pred_fallthru
          _
        // Predicated region
        $region45: #{contrast_vae_forward.1} parent=11 // pred_check
          %p464 = pneg %p268
        $region46: #{contrast_vae_forward.1} parent=11 // pred_check_branch
          %466 = sbr.rel (%p464) target = $region48
        $region47: #{contrast_vae_forward.1} parent=11 // pred_region
          _
        $region48: #{contrast_vae_forward.1} parent=11 // pred_fallthru
          _
        // Predicated region
        $region49: #{contrast_vae_forward.1} parent=11 // pred_check
          %p467 = pneg %p289
        $region50: #{contrast_vae_forward.1} parent=11 // pred_check_branch
          %469 = sbr.rel (%p467) target = $region52
        $region51: #{contrast_vae_forward.1} parent=11 // pred_region
          _
        $region52: #{contrast_vae_forward.1} parent=11 // pred_fallthru
          _
        // Predicated region
        $region53: #{contrast_vae_forward.1} parent=11 // pred_check
          %p470 = pneg %p310
        $region54: #{contrast_vae_forward.1} parent=11 // pred_check_branch
          %472 = sbr.rel (%p470) target = $region56
        $region55: #{contrast_vae_forward.1} parent=11 // pred_region
          _
        $region56: #{contrast_vae_forward.1} parent=11 // pred_fallthru
          _
        // Predicated region
        $region57: #{contrast_vae_forward.1} parent=11 // pred_check
          %p473 = pneg %p331
        $region58: #{contrast_vae_forward.1} parent=11 // pred_check_branch
          %475 = sbr.rel (%p473) target = $region60
        $region59: #{contrast_vae_forward.1} parent=11 // pred_region
          _
        $region60: #{contrast_vae_forward.1} parent=11 // pred_fallthru
          _
        // Predicated region
        $region61: #{contrast_vae_forward.1} parent=11 // pred_check
          %p476 = pneg %p352
        $region62: #{contrast_vae_forward.1} parent=11 // pred_check_branch
          %478 = sbr.rel (%p476) target = $region64
        $region63: #{contrast_vae_forward.1} parent=11 // pred_region
          _
        $region64: #{contrast_vae_forward.1} parent=11 // pred_fallthru
          _
        // Predicated region
        $region65: #{contrast_vae_forward.1} parent=11 // pred_check
          %p479 = pneg %p373
        $region66: #{contrast_vae_forward.1} parent=11 // pred_check_branch
          %481 = sbr.rel (%p479) target = $region68
        $region67: #{contrast_vae_forward.1} parent=11 // pred_region
          _
        $region68: #{contrast_vae_forward.1} parent=11 // pred_fallthru
          _
      $region12: #{contrast_vae_forward.1} parent=5 // pred_fallthru
        _
      %p482 = scmp.lt.s32.totalorder %s27, 2
      // Predicated region
      $region69: #{contrast_vae_forward.1} parent=5 // pred_check
        %p483 = pneg %p482
      $region70: #{contrast_vae_forward.1} parent=5 // pred_check_branch
        %485 = sbr.rel (%p483) target = $region72
      $region71: #{contrast_vae_forward.1} parent=5 // pred_region
        // Predicated region
        $region73: #{contrast_vae_forward.1} parent=71 // pred_check
          %p486 = pneg %p47
        $region74: #{contrast_vae_forward.1} parent=71 // pred_check_branch
          %488 = sbr.rel (%p486) target = $region76
        $region75: #{contrast_vae_forward.1} parent=71 // pred_region
          %s489 = smul.u32 16, %s27
          %s490 = ssub.s32 25, %s489
          %p491 = scmp.lt.s32.totalorder %s490, 16
          %s492 = scalar_select %p491, %s490, 16
          %s493 = smul.u32 128, %s492
          %p494 = scmp.lt.s32.totalorder %s489, 24
          %s495 = scalar_select %p494, %s489, 24
          %s496 = smul.addr %s495, 8
          %s497 = scalar_lea.vmem %s0, %s496
          %s498 = smul.u32 16, %s27
          %s499 = ssub.s32 25, %s498
          %p500 = scmp.lt.s32.totalorder %s499, 16
          %s501 = scalar_select %p500, %s499, 16
          %s502 = smul.u32 128, %s501
        $region76: #{contrast_vae_forward.1} parent=71 // pred_fallthru
          _
        // Predicated region
        $region77: #{contrast_vae_forward.1} parent=71 // pred_check
          %p503 = pneg %p73
        $region78: #{contrast_vae_forward.1} parent=71 // pred_check_branch
          %505 = sbr.rel (%p503) target = $region80
        $region79: #{contrast_vae_forward.1} parent=71 // pred_region
          %s506 = smul.u32 16, %s27
          %s507 = ssub.s32 25, %s506
          %p508 = scmp.lt.s32.totalorder %s507, 16
          %s509 = scalar_select %p508, %s507, 16
          %s510 = smul.u32 128, %s509
          %p511 = scmp.lt.s32.totalorder %s506, 24
          %s512 = scalar_select %p511, %s506, 24
          %s513 = smul.addr %s512, 8
          %s514 = scalar_lea.vmem %s1, %s513
          %s515 = smul.u32 16, %s27
          %s516 = ssub.s32 25, %s515
          %p517 = scmp.lt.s32.totalorder %s516, 16
          %s518 = scalar_select %p517, %s516, 16
          %s519 = smul.u32 128, %s518
        $region80: #{contrast_vae_forward.1} parent=71 // pred_fallthru
          _
      $region72: #{contrast_vae_forward.1} parent=5 // pred_fallthru
        _
      %p520 = scmp.le.s32.totalorder 1, %s27
      %p521 = scmp.lt.s32.totalorder %s27, 3
      %p522 = pnand %p520, %p521
      %p523 = pneg %p522
      // Predicated region
      $region81: #{contrast_vae_forward.1} parent=5 // pred_check
        _
      $region82: #{contrast_vae_forward.1} parent=5 // pred_check_branch
        %525 = sbr.rel (%p522) target = $region84
      $region83: #{contrast_vae_forward.1} parent=5 // pred_region
        %s526 = ssub.s32 %s27, 1
        %s527 = smul.u32 16, %s32
        %s528 = ssub.s32 25, %s527
        %p529 = scmp.lt.s32.totalorder %s528, 16
        %s530 = scalar_select %p529, %s528, 16
        %s531 = smul.u32 128, %s530
        %p532 = scmp.lt.s32.totalorder %s527, 24
        %s533 = scalar_select %p532, %s527, 24
        %s534 = smul.addr %s533, 8
        %s535 = scalar_lea.vmem %s0, %s534
        %p536 = pneg %p53
        %p537 = pneg %p50
        %s538 = smul.u32 16, %s32
        %s539 = ssub.s32 25, %s538
        %p540 = scmp.lt.s32.totalorder %s539, 16
        %s541 = scalar_select %p540, %s539, 16
        %s542 = smul.u32 128, %s541
        %p543 = scmp.lt.s32.totalorder %s538, 24
        %s544 = scalar_select %p543, %s538, 24
        %s545 = smul.addr %s544, 8
        %s546 = scalar_lea.vmem %s1, %s545
        %p547 = pneg %p79
        %p548 = pneg %p76
        %p549 = pneg %p100
        %p550 = pneg %p97
        %p551 = pneg %p121
        %p552 = pneg %p118
        %p553 = pneg %p142
        %p554 = pneg %p139
        %p555 = pneg %p163
        %p556 = pneg %p160
        %p557 = pneg %p184
        %p558 = pneg %p181
        %p559 = pneg %p205
        %p560 = pneg %p202
        %p561 = pneg %p226
        %p562 = pneg %p223
        %p563 = pneg %p247
        %p564 = pneg %p244
        %p565 = pneg %p268
        %p566 = pneg %p265
        %p567 = pneg %p289
        %p568 = pneg %p286
        %p569 = pneg %p310
        %p570 = pneg %p307
        %p571 = pneg %p331
        %p572 = pneg %p328
        %p573 = pneg %p352
        %p574 = pneg %p349
        %p575 = pneg %p373
        %p576 = pneg %p370
        %p577 = pneg %p399
        %p578 = pneg %p396
        %s579 = sand.u32 %s386, 1
        %s580 = scalar_lea.sflag [#allocation3], %s579
        %s581 = sand.u32 %s386, 1
        %s582 = smul.addr %s581, 128
        %s583 = scalar_lea.vmem [#allocation2], %s582
        %p584 = pneg %p425
        %p585 = pneg %p422
        %s586 = sand.u32 %s412, 1
        %s587 = sand.u32 %s412, 1
        %s588 = smul.addr %s587, 128
        %s589 = scalar_lea.vmem [#allocation4], %s588
        %s590 = smul.u32 16, %s32
        %s591 = ssub.s32 25, %s590
        %p592 = scmp.lt.s32.totalorder %s591, 16
        %s593 = scalar_select %p592, %s591, 16
        %s594 = smul.u32 128, %s593
        %p595 = scmp.lt.s32.totalorder %s590, 24
        %s596 = scalar_select %p595, %s590, 24
        %s597 = smul.addr %s596, 8
        %s598 = scalar_lea.vmem %s0, %s597
        %s599 = smul.u32 16, %s32
        %s600 = ssub.s32 25, %s599
        %p601 = scmp.lt.s32.totalorder %s600, 16
        %s602 = scalar_select %p601, %s600, 16
        %s603 = smul.u32 128, %s602
        %s604 = smul.u32 16, %s32
        %s605 = ssub.s32 25, %s604
        %p606 = scmp.lt.s32.totalorder %s605, 16
        %s607 = scalar_select %p606, %s605, 16
        %s608 = smul.u32 128, %s607
        %p609 = scmp.lt.s32.totalorder %s604, 24
        %s610 = scalar_select %p609, %s604, 24
        %s611 = smul.addr %s610, 8
        %s612 = scalar_lea.vmem %s1, %s611
        %s613 = smul.u32 16, %s32
        %s614 = ssub.s32 25, %s613
        %p615 = scmp.lt.s32.totalorder %s614, 16
        %s616 = scalar_select %p615, %s614, 16
        %s617 = smul.u32 128, %s616
        %s618 = smul.u32 16, %s32
        %s619 = ssub.s32 25, %s618
        %p620 = scmp.lt.s32.totalorder %s619, 16
        %s621 = scalar_select %p620, %s619, 16
        %s622 = smul.u32 128, %s621
        %s623 = smul.u32 16, %s32
        %s624 = ssub.s32 25, %s623
        %p625 = scmp.lt.s32.totalorder %s624, 16
        %s626 = scalar_select %p625, %s624, 16
        %s627 = smul.u32 128, %s626
        %v628 = vld [vmem:[%s598] sm:$0xff]
        %v629 = vld [vmem:[%s598 + $0x8] sm:$0xff]
        %v630 = vld [vmem:[%s598 + $0x10] sm:$0xff]
        %v631 = vld [vmem:[%s598 + $0x18] sm:$0xff]
        %v632 = vld [vmem:[%s598 + $0x20] sm:$0xff]
        %v633 = vld [vmem:[%s598 + $0x28] sm:$0xff]
        %v634 = vld [vmem:[%s598 + $0x30] sm:$0xff]
        %v635 = vld [vmem:[%s598 + $0x38] sm:$0xff]
        %v636 = vld [vmem:[%s598 + $0x40] sm:$0xff]
        %v637 = vld [vmem:[%s598 + $0x48] sm:$0xff]
        %v638 = vld [vmem:[%s598 + $0x50] sm:$0xff]
        %v639 = vld [vmem:[%s598 + $0x58] sm:$0xff]
        %v640 = vld [vmem:[%s598 + $0x60] sm:$0xff]
        %v641 = vld [vmem:[%s598 + $0x68] sm:$0xff]
        %v642 = vld [vmem:[%s598 + $0x70] sm:$0xff]
        %v643 = vld [vmem:[%s598 + $0x78] sm:$0xff]
        %v644 = vld [vmem:[%s2] sm:$0xff]
        %v645 = vld [vmem:[%s2 + $0x8] sm:$0xff]
        %v646 = vld [vmem:[%s2 + $0x10] sm:$0xff]
        %v647 = vld [vmem:[%s2 + $0x18] sm:$0xff]
        %v648 = vld [vmem:[%s2 + $0x20] sm:$0xff]
        %v649 = vld [vmem:[%s2 + $0x28] sm:$0xff]
        %v650 = vld [vmem:[%s2 + $0x30] sm:$0xff]
        %v651 = vld [vmem:[%s2 + $0x38] sm:$0xff]
        %v652 = vld [vmem:[%s2 + $0x40] sm:$0xff]
        %v653 = vld [vmem:[%s2 + $0x48] sm:$0xff]
        %v654 = vld [vmem:[%s2 + $0x50] sm:$0xff]
        %v655 = vld [vmem:[%s2 + $0x58] sm:$0xff]
        %v656 = vld [vmem:[%s2 + $0x60] sm:$0xff]
        %v657 = vld [vmem:[%s2 + $0x68] sm:$0xff]
        %v658 = vld [vmem:[%s2 + $0x70] sm:$0xff]
        %v659 = vld [vmem:[%s2 + $0x78] sm:$0xff]
        %v660 = vld [vmem:[%s3] sm:$0x1]
        %v662 = vlaneseq
        %v663 = vshrl.u32 %v662, 7
        %v664 = vsub.s32 0, %v663
        %v665 = vrot.slane %v660, %v664
        %667 = vmatprep.subr.mxu0 0.0
        %668 = vmatpush1.msra.mxu0 %v644
        %669 = vmatprep.subr.mxu0 0.0
        %670 = vmatpush1.msra.mxu0 %v645
        %671 = vmatprep.subr.mxu0 0.0
        %672 = vmatpush1.msra.mxu0 %v646
        %673 = vmatprep.subr.mxu0 0.0
        %674 = vmatpush1.msra.mxu0 %v647
        %675 = vmatprep.subr.mxu0 0.0
        %676 = vmatpush1.msra.mxu0 %v648
        %677 = vmatprep.subr.mxu0 0.0
        %678 = vmatpush1.msra.mxu0 %v649
        %679 = vmatprep.subr.mxu0 0.0
        %680 = vmatpush1.msra.mxu0 %v650
        %681 = vmatprep.subr.mxu0 0.0
        %682 = vmatpush1.msra.mxu0 %v651
        %683 = vmatprep.subr.mxu0 0.0
        %684 = vmatpush1.msra.mxu0 %v652
        %685 = vmatprep.subr.mxu0 0.0
        %686 = vmatpush1.msra.mxu0 %v653
        %687 = vmatprep.subr.mxu0 0.0
        %688 = vmatpush1.msra.mxu0 %v654
        %689 = vmatprep.subr.mxu0 0.0
        %690 = vmatpush1.msra.mxu0 %v655
        %691 = vmatprep.subr.mxu0 0.0
        %692 = vmatpush1.msra.mxu0 %v656
        %693 = vmatprep.subr.mxu0 0.0
        %694 = vmatpush1.msra.mxu0 %v657
        %695 = vmatprep.subr.mxu0 0.0
        %696 = vmatpush1.msra.mxu0 %v658
        %697 = vmatprep.subr.mxu0 0.0
        %698 = vmatpush1.msra.mxu0 %v659
        %699 = vmatprep.subr.mxu0 0.0
        %700 = vmatpush1.msra.mxu0 0.0
        %701 = vmatprep.subr.mxu0 0.0
        %702 = vmatpush1.msra.mxu0 0.0
        %703 = vmatprep.subr.mxu0 0.0
        %704 = vmatpush1.msra.mxu0 0.0
        %705 = vmatprep.subr.mxu0 0.0
        %706 = vmatpush1.msra.mxu0 0.0
        %707 = vmatprep.subr.mxu0 0.0
        %708 = vmatpush1.msra.mxu0 0.0
        %709 = vmatprep.subr.mxu0 0.0
        %710 = vmatpush1.msra.mxu0 0.0
        %711 = vmatprep.subr.mxu0 0.0
        %712 = vmatpush1.msra.mxu0 0.0
        %713 = vmatprep.subr.mxu0 0.0
        %714 = vmatpush1.msra.mxu0 0.0
        %715 = vmatprep.subr.mxu0 0.0
        %716 = vmatpush1.msra.mxu0 0.0
        %717 = vmatprep.subr.mxu0 0.0
        %718 = vmatpush1.msra.mxu0 0.0
        %719 = vmatprep.subr.mxu0 0.0
        %720 = vmatpush1.msra.mxu0 0.0
        %721 = vmatprep.subr.mxu0 0.0
        %722 = vmatpush1.msra.mxu0 0.0
        %723 = vmatprep.subr.mxu0 0.0
        %724 = vmatpush1.msra.mxu0 0.0
        %725 = vmatprep.subr.mxu0 0.0
        %726 = vmatpush1.msra.mxu0 0.0
        %727 = vmatprep.subr.mxu0 0.0
        %728 = vmatpush1.msra.mxu0 0.0
        %729 = vmatprep.subr.mxu0 0.0
        %730 = vmatpush1.msra.mxu0 0.0
        %731 = vmatprep.mubr.f32.mxu0 0.0
        %732 = vmatmul.mubr.f32.gmra.mrb[0].mxu0 %v628
        %v733 = vpop.f32.mrb[0].mxu0
        %v734 = vadd.f32 %v665, %v733
        %v735 = vpop.f32.mrb[0].mxu0
        %736 = vmatprep.mubr.f32.mxu0 0.0
        %737 = vmatmul.mubr.f32.gmra.mrb[0].mxu0 %v629
        %v738 = vpop.f32.mrb[0].mxu0
        %v739 = vadd.f32 %v665, %v738
        %v740 = vpop.f32.mrb[0].mxu0
        %741 = vmatprep.mubr.f32.mxu0 0.0
        %742 = vmatmul.mubr.f32.gmra.mrb[0].mxu0 %v630
        %v743 = vpop.f32.mrb[0].mxu0
        %v744 = vadd.f32 %v665, %v743
        %v745 = vpop.f32.mrb[0].mxu0
        %746 = vmatprep.mubr.f32.mxu0 0.0
        %747 = vmatmul.mubr.f32.gmra.mrb[0].mxu0 %v631
        %v748 = vpop.f32.mrb[0].mxu0
        %v749 = vadd.f32 %v665, %v748
        %v750 = vpop.f32.mrb[0].mxu0
        %751 = vmatprep.mubr.f32.mxu0 0.0
        %752 = vmatmul.mubr.f32.gmra.mrb[0].mxu0 %v632
        %v753 = vpop.f32.mrb[0].mxu0
        %v754 = vadd.f32 %v665, %v753
        %v755 = vpop.f32.mrb[0].mxu0
        %756 = vmatprep.mubr.f32.mxu0 0.0
        %757 = vmatmul.mubr.f32.gmra.mrb[0].mxu0 %v633
        %v758 = vpop.f32.mrb[0].mxu0
        %v759 = vadd.f32 %v665, %v758
        %v760 = vpop.f32.mrb[0].mxu0
        %761 = vmatprep.mubr.f32.mxu0 0.0
        %762 = vmatmul.mubr.f32.gmra.mrb[0].mxu0 %v634
        %v763 = vpop.f32.mrb[0].mxu0
        %v764 = vadd.f32 %v665, %v763
        %v765 = vpop.f32.mrb[0].mxu0
        %766 = vmatprep.mubr.f32.mxu0 0.0
        %767 = vmatmul.mubr.f32.gmra.mrb[0].mxu0 %v635
        %v768 = vpop.f32.mrb[0].mxu0
        %v769 = vadd.f32 %v665, %v768
        %v770 = vpop.f32.mrb[0].mxu0
        %771 = vmatprep.mubr.f32.mxu0 0.0
        %772 = vmatmul.mubr.f32.gmra.mrb[0].mxu0 %v636
        %v773 = vpop.f32.mrb[0].mxu0
        %v774 = vadd.f32 %v665, %v773
        %v775 = vpop.f32.mrb[0].mxu0
        %776 = vmatprep.mubr.f32.mxu0 0.0
        %777 = vmatmul.mubr.f32.gmra.mrb[0].mxu0 %v637
        %v778 = vpop.f32.mrb[0].mxu0
        %v779 = vadd.f32 %v665, %v778
        %v780 = vpop.f32.mrb[0].mxu0
        %781 = vmatprep.mubr.f32.mxu0 0.0
        %782 = vmatmul.mubr.f32.gmra.mrb[0].mxu0 %v638
        %v783 = vpop.f32.mrb[0].mxu0
        %v784 = vadd.f32 %v665, %v783
        %v785 = vpop.f32.mrb[0].mxu0
        %786 = vmatprep.mubr.f32.mxu0 0.0
        %787 = vmatmul.mubr.f32.gmra.mrb[0].mxu0 %v639
        %v788 = vpop.f32.mrb[0].mxu0
        %v789 = vadd.f32 %v665, %v788
        %v790 = vpop.f32.mrb[0].mxu0
        %791 = vmatprep.mubr.f32.mxu0 0.0
        %792 = vmatmul.mubr.f32.gmra.mrb[0].mxu0 %v640
        %v793 = vpop.f32.mrb[0].mxu0
        %v794 = vadd.f32 %v665, %v793
        %v795 = vpop.f32.mrb[0].mxu0
        %796 = vmatprep.mubr.f32.mxu0 0.0
        %797 = vmatmul.mubr.f32.gmra.mrb[0].mxu0 %v641
        %v798 = vpop.f32.mrb[0].mxu0
        %v799 = vadd.f32 %v665, %v798
        %v800 = vpop.f32.mrb[0].mxu0
        %801 = vmatprep.mubr.f32.mxu0 0.0
        %802 = vmatmul.mubr.f32.gmra.mrb[0].mxu0 %v642
        %v803 = vpop.f32.mrb[0].mxu0
        %v804 = vadd.f32 %v665, %v803
        %v805 = vpop.f32.mrb[0].mxu0
        %806 = vmatprep.mubr.f32.mxu0 0.0
        %807 = vmatmul.mubr.f32.gmra.mrb[0].mxu0 %v643
        %v808 = vpop.f32.mrb[0].mxu0
        %v809 = vadd.f32 %v665, %v808
        %v810 = vpop.f32.mrb[0].mxu0
        %811 = vdwg.mxu0
        %v812 = vmul.f32 %v734, 0.01
        %v813 = vmul.f32 %v739, 0.01
        %v814 = vmul.f32 %v744, 0.01
        %v815 = vmul.f32 %v749, 0.01
        %v816 = vmul.f32 %v754, 0.01
        %v817 = vmul.f32 %v759, 0.01
        %v818 = vmul.f32 %v764, 0.01
        %v819 = vmul.f32 %v769, 0.01
        %v820 = vmul.f32 %v774, 0.01
        %v821 = vmul.f32 %v779, 0.01
        %v822 = vmul.f32 %v784, 0.01
        %v823 = vmul.f32 %v789, 0.01
        %v824 = vmul.f32 %v794, 0.01
        %v825 = vmul.f32 %v799, 0.01
        %v826 = vmul.f32 %v804, 0.01
        %v827 = vmul.f32 %v809, 0.01
        %v828 = vmax.f32 %v734, %v812
        %v829 = vmax.f32 %v739, %v813
        %v830 = vmax.f32 %v744, %v814
        %v831 = vmax.f32 %v749, %v815
        %v832 = vmax.f32 %v754, %v816
        %v833 = vmax.f32 %v759, %v817
        %v834 = vmax.f32 %v764, %v818
        %v835 = vmax.f32 %v769, %v819
        %v836 = vmax.f32 %v774, %v820
        %v837 = vmax.f32 %v779, %v821
        %v838 = vmax.f32 %v784, %v822
        %v839 = vmax.f32 %v789, %v823
        %v840 = vmax.f32 %v794, %v824
        %v841 = vmax.f32 %v799, %v825
        %v842 = vmax.f32 %v804, %v826
        %v843 = vmax.f32 %v809, %v827
        %v844 = vld [vmem:[%s4] sm:$0xff]
        %v845 = vld [vmem:[%s4 + $0x8] sm:$0xff]
        %v846 = vld [vmem:[%s4 + $0x10] sm:$0xff]
        %v847 = vld [vmem:[%s4 + $0x18] sm:$0xff]
        %v848 = vld [vmem:[%s4 + $0x20] sm:$0xff]
        %v849 = vld [vmem:[%s4 + $0x28] sm:$0xff]
        %v850 = vld [vmem:[%s4 + $0x30] sm:$0xff]
        %v851 = vld [vmem:[%s4 + $0x38] sm:$0xff]
        %v852 = vld [vmem:[%s5] sm:$0x1]
        %v854 = vlaneseq
        %v855 = vshrl.u32 %v854, 7
        %v856 = vsub.s32 0, %v855
        %v857 = vrot.slane %v852, %v856
        %vm859 = vcmask 523264
        %v861 = vsel %vm859, %v828, 0
        %v864 = vsel %vm859, %v829, 0
        %v867 = vsel %vm859, %v830, 0
        %v870 = vsel %vm859, %v831, 0
        %v873 = vsel %vm859, %v832, 0
        %v876 = vsel %vm859, %v833, 0
        %v879 = vsel %vm859, %v834, 0
        %v882 = vsel %vm859, %v835, 0
        %v885 = vsel %vm859, %v836, 0
        %v888 = vsel %vm859, %v837, 0
        %v891 = vsel %vm859, %v838, 0
        %v894 = vsel %vm859, %v839, 0
        %v897 = vsel %vm859, %v840, 0
        %v900 = vsel %vm859, %v841, 0
        %v903 = vsel %vm859, %v842, 0
        %v906 = vsel %vm859, %v843, 0
        %908 = vmatprep.subr.mxu0 0.0
        %909 = vmatpush1.msra.mxu0 %v844
        %910 = vmatprep.subr.mxu0 0.0
        %911 = vmatpush1.msra.mxu0 %v845
        %912 = vmatprep.subr.mxu0 0.0
        %913 = vmatpush1.msra.mxu0 %v846
        %914 = vmatprep.subr.mxu0 0.0
        %915 = vmatpush1.msra.mxu0 %v847
        %916 = vmatprep.subr.mxu0 0.0
        %917 = vmatpush1.msra.mxu0 %v848
        %918 = vmatprep.subr.mxu0 0.0
        %919 = vmatpush1.msra.mxu0 %v849
        %920 = vmatprep.subr.mxu0 0.0
        %921 = vmatpush1.msra.mxu0 %v850
        %922 = vmatprep.subr.mxu0 0.0
        %923 = vmatpush1.msra.mxu0 %v851
        %924 = vmatprep.subr.mxu0 0.0
        %925 = vmatpush1.msra.mxu0 0.0
        %926 = vmatprep.subr.mxu0 0.0
        %927 = vmatpush1.msra.mxu0 0.0
        %928 = vmatprep.subr.mxu0 0.0
        %929 = vmatpush1.msra.mxu0 0.0
        %930 = vmatprep.subr.mxu0 0.0
        %931 = vmatpush1.msra.mxu0 0.0
        %932 = vmatprep.subr.mxu0 0.0
        %933 = vmatpush1.msra.mxu0 0.0
        %934 = vmatprep.subr.mxu0 0.0
        %935 = vmatpush1.msra.mxu0 0.0
        %936 = vmatprep.subr.mxu0 0.0
        %937 = vmatpush1.msra.mxu0 0.0
        %938 = vmatprep.subr.mxu0 0.0
        %939 = vmatpush1.msra.mxu0 0.0
        %940 = vmatprep.subr.mxu0 0.0
        %941 = vmatpush1.msra.mxu0 0.0
        %942 = vmatprep.subr.mxu0 0.0
        %943 = vmatpush1.msra.mxu0 0.0
        %944 = vmatprep.subr.mxu0 0.0
        %945 = vmatpush1.msra.mxu0 0.0
        %946 = vmatprep.subr.mxu0 0.0
        %947 = vmatpush1.msra.mxu0 0.0
        %948 = vmatprep.subr.mxu0 0.0
        %949 = vmatpush1.msra.mxu0 0.0
        %950 = vmatprep.subr.mxu0 0.0
        %951 = vmatpush1.msra.mxu0 0.0
        %952 = vmatprep.subr.mxu0 0.0
        %953 = vmatpush1.msra.mxu0 0.0
        %954 = vmatprep.subr.mxu0 0.0
        %955 = vmatpush1.msra.mxu0 0.0
        %956 = vmatprep.subr.mxu0 0.0
        %957 = vmatpush1.msra.mxu0 0.0
        %958 = vmatprep.subr.mxu0 0.0
        %959 = vmatpush1.msra.mxu0 0.0
        %960 = vmatprep.subr.mxu0 0.0
        %961 = vmatpush1.msra.mxu0 0.0
        %962 = vmatprep.subr.mxu0 0.0
        %963 = vmatpush1.msra.mxu0 0.0
        %964 = vmatprep.subr.mxu0 0.0
        %965 = vmatpush1.msra.mxu0 0.0
        %966 = vmatprep.subr.mxu0 0.0
        %967 = vmatpush1.msra.mxu0 0.0
        %968 = vmatprep.subr.mxu0 0.0
        %969 = vmatpush1.msra.mxu0 0.0
        %970 = vmatprep.subr.mxu0 0.0
        %971 = vmatpush1.msra.mxu0 0.0
        %972 = vmatprep.mubr.f32.mxu0 0.0
        %973 = vmatmul.mubr.f32.gmra.mrb[0].mxu0 %v861
        %v974 = vpop.f32.mrb[0].mxu0
        %v975 = vadd.f32 %v857, %v974
        %v976 = vpop.f32.mrb[0].mxu0
        %977 = vmatprep.mubr.f32.mxu0 0.0
        %978 = vmatmul.mubr.f32.gmra.mrb[0].mxu0 %v864
        %v979 = vpop.f32.mrb[0].mxu0
        %v980 = vadd.f32 %v857, %v979
        %v981 = vpop.f32.mrb[0].mxu0
        %982 = vmatprep.mubr.f32.mxu0 0.0
        %983 = vmatmul.mubr.f32.gmra.mrb[0].mxu0 %v867
        %v984 = vpop.f32.mrb[0].mxu0
        %v985 = vadd.f32 %v857, %v984
        %v986 = vpop.f32.mrb[0].mxu0
        %987 = vmatprep.mubr.f32.mxu0 0.0
        %988 = vmatmul.mubr.f32.gmra.mrb[0].mxu0 %v870
        %v989 = vpop.f32.mrb[0].mxu0
        %v990 = vadd.f32 %v857, %v989
        %v991 = vpop.f32.mrb[0].mxu0
        %992 = vmatprep.mubr.f32.mxu0 0.0
        %993 = vmatmul.mubr.f32.gmra.mrb[0].mxu0 %v873
        %v994 = vpop.f32.mrb[0].mxu0
        %v995 = vadd.f32 %v857, %v994
        %v996 = vpop.f32.mrb[0].mxu0
        %997 = vmatprep.mubr.f32.mxu0 0.0
        %998 = vmatmul.mubr.f32.gmra.mrb[0].mxu0 %v876
        %v999 = vpop.f32.mrb[0].mxu0
        %v1000 = vadd.f32 %v857, %v999
        %v1001 = vpop.f32.mrb[0].mxu0
        %1002 = vmatprep.mubr.f32.mxu0 0.0
        %1003 = vmatmul.mubr.f32.gmra.mrb[0].mxu0 %v879
        %v1004 = vpop.f32.mrb[0].mxu0
        %v1005 = vadd.f32 %v857, %v1004
        %v1006 = vpop.f32.mrb[0].mxu0
        %1007 = vmatprep.mubr.f32.mxu0 0.0
        %1008 = vmatmul.mubr.f32.gmra.mrb[0].mxu0 %v882
        %v1009 = vpop.f32.mrb[0].mxu0
        %v1010 = vadd.f32 %v857, %v1009
        %v1011 = vpop.f32.mrb[0].mxu0
        %1012 = vmatprep.mubr.f32.mxu0 0.0
        %1013 = vmatmul.mubr.f32.gmra.mrb[0].mxu0 %v885
        %v1014 = vpop.f32.mrb[0].mxu0
        %v1015 = vadd.f32 %v857, %v1014
        %v1016 = vpop.f32.mrb[0].mxu0
        %1017 = vmatprep.mubr.f32.mxu0 0.0
        %1018 = vmatmul.mubr.f32.gmra.mrb[0].mxu0 %v888
        %v1019 = vpop.f32.mrb[0].mxu0
        %v1020 = vadd.f32 %v857, %v1019
        %v1021 = vpop.f32.mrb[0].mxu0
        %1022 = vmatprep.mubr.f32.mxu0 0.0
        %1023 = vmatmul.mubr.f32.gmra.mrb[0].mxu0 %v891
        %v1024 = vpop.f32.mrb[0].mxu0
        %v1025 = vadd.f32 %v857, %v1024
        %v1026 = vpop.f32.mrb[0].mxu0
        %1027 = vmatprep.mubr.f32.mxu0 0.0
        %1028 = vmatmul.mubr.f32.gmra.mrb[0].mxu0 %v894
        %v1029 = vpop.f32.mrb[0].mxu0
        %v1030 = vadd.f32 %v857, %v1029
        %v1031 = vpop.f32.mrb[0].mxu0
        %1032 = vmatprep.mubr.f32.mxu0 0.0
        %1033 = vmatmul.mubr.f32.gmra.mrb[0].mxu0 %v897
        %v1034 = vpop.f32.mrb[0].mxu0
        %v1035 = vadd.f32 %v857, %v1034
        %v1036 = vpop.f32.mrb[0].mxu0
        %1037 = vmatprep.mubr.f32.mxu0 0.0
        %1038 = vmatmul.mubr.f32.gmra.mrb[0].mxu0 %v900
        %v1039 = vpop.f32.mrb[0].mxu0
        %v1040 = vadd.f32 %v857, %v1039
        %v1041 = vpop.f32.mrb[0].mxu0
        %1042 = vmatprep.mubr.f32.mxu0 0.0
        %1043 = vmatmul.mubr.f32.gmra.mrb[0].mxu0 %v903
        %v1044 = vpop.f32.mrb[0].mxu0
        %v1045 = vadd.f32 %v857, %v1044
        %v1046 = vpop.f32.mrb[0].mxu0
        %1047 = vmatprep.mubr.f32.mxu0 0.0
        %1048 = vmatmul.mubr.f32.gmra.mrb[0].mxu0 %v906
        %v1049 = vpop.f32.mrb[0].mxu0
        %v1050 = vadd.f32 %v857, %v1049
        %v1051 = vpop.f32.mrb[0].mxu0
        %1052 = vdwg.mxu0
        %v1053 = vmul.f32 %v975, 0.01
        %v1054 = vmul.f32 %v980, 0.01
        %v1055 = vmul.f32 %v985, 0.01
        %v1056 = vmul.f32 %v990, 0.01
        %v1057 = vmul.f32 %v995, 0.01
        %v1058 = vmul.f32 %v1000, 0.01
        %v1059 = vmul.f32 %v1005, 0.01
        %v1060 = vmul.f32 %v1010, 0.01
        %v1061 = vmul.f32 %v1015, 0.01
        %v1062 = vmul.f32 %v1020, 0.01
        %v1063 = vmul.f32 %v1025, 0.01
        %v1064 = vmul.f32 %v1030, 0.01
        %v1065 = vmul.f32 %v1035, 0.01
        %v1066 = vmul.f32 %v1040, 0.01
        %v1067 = vmul.f32 %v1045, 0.01
        %v1068 = vmul.f32 %v1050, 0.01
        %v1069 = vmax.f32 %v975, %v1053
        %v1070 = vmax.f32 %v980, %v1054
        %v1071 = vmax.f32 %v985, %v1055
        %v1072 = vmax.f32 %v990, %v1056
        %v1073 = vmax.f32 %v995, %v1057
        %v1074 = vmax.f32 %v1000, %v1058
        %v1075 = vmax.f32 %v1005, %v1059
        %v1076 = vmax.f32 %v1010, %v1060
        %v1077 = vmax.f32 %v1015, %v1061
        %v1078 = vmax.f32 %v1020, %v1062
        %v1079 = vmax.f32 %v1025, %v1063
        %v1080 = vmax.f32 %v1030, %v1064
        %v1081 = vmax.f32 %v1035, %v1065
        %v1082 = vmax.f32 %v1040, %v1066
        %v1083 = vmax.f32 %v1045, %v1067
        %v1084 = vmax.f32 %v1050, %v1068
        %v1085 = vld [vmem:[%s6] sm:$0xff]
        %v1086 = vld [vmem:[%s6 + $0x8] sm:$0xff]
        %v1087 = vld [vmem:[%s6 + $0x10] sm:$0xff]
        %v1088 = vld [vmem:[%s6 + $0x18] sm:$0xff]
        %v1089 = vld [vmem:[%s6 + $0x20] sm:$0xff]
        %v1090 = vld [vmem:[%s6 + $0x28] sm:$0xff]
        %v1091 = vld [vmem:[%s6 + $0x30] sm:$0xff]
        %v1092 = vld [vmem:[%s6 + $0x38] sm:$0xff]
        %v1093 = vld [vmem:[%s7] sm:$0x1]
        %v1095 = vlaneseq
        %v1096 = vshrl.u32 %v1095, 7
        %v1097 = vsub.s32 0, %v1096
        %v1098 = vrot.slane %v1093, %v1097
        %v1101 = vsel %vm859, %v1069, 0
        %v1104 = vsel %vm859, %v1070, 0
        %v1107 = vsel %vm859, %v1071, 0
        %v1110 = vsel %vm859, %v1072, 0
        %v1113 = vsel %vm859, %v1073, 0
        %v1116 = vsel %vm859, %v1074, 0
        %v1119 = vsel %vm859, %v1075, 0
        %v1122 = vsel %vm859, %v1076, 0
        %v1125 = vsel %vm859, %v1077, 0
        %v1128 = vsel %vm859, %v1078, 0
        %v1131 = vsel %vm859, %v1079, 0
        %v1134 = vsel %vm859, %v1080, 0
        %v1137 = vsel %vm859, %v1081, 0
        %v1140 = vsel %vm859, %v1082, 0
        %v1143 = vsel %vm859, %v1083, 0
        %v1146 = vsel %vm859, %v1084, 0
        %1148 = vmatprep.subr.mxu0 0.0
        %1149 = vmatpush1.msra.mxu0 %v1085
        %1150 = vmatprep.subr.mxu0 0.0
        %1151 = vmatpush1.msra.mxu0 %v1086
        %1152 = vmatprep.subr.mxu0 0.0
        %1153 = vmatpush1.msra.mxu0 %v1087
        %1154 = vmatprep.subr.mxu0 0.0
        %1155 = vmatpush1.msra.mxu0 %v1088
        %1156 = vmatprep.subr.mxu0 0.0
        %1157 = vmatpush1.msra.mxu0 %v1089
        %1158 = vmatprep.subr.mxu0 0.0
        %1159 = vmatpush1.msra.mxu0 %v1090
        %1160 = vmatprep.subr.mxu0 0.0
        %1161 = vmatpush1.msra.mxu0 %v1091
        %1162 = vmatprep.subr.mxu0 0.0
        %1163 = vmatpush1.msra.mxu0 %v1092
        %1164 = vmatprep.subr.mxu0 0.0
        %1165 = vmatpush1.msra.mxu0 0.0
        %1166 = vmatprep.subr.mxu0 0.0
        %1167 = vmatpush1.msra.mxu0 0.0
        %1168 = vmatprep.subr.mxu0 0.0
        %1169 = vmatpush1.msra.mxu0 0.0
        %1170 = vmatprep.subr.mxu0 0.0
        %1171 = vmatpush1.msra.mxu0 0.0
        %1172 = vmatprep.subr.mxu0 0.0
        %1173 = vmatpush1.msra.mxu0 0.0
        %1174 = vmatprep.subr.mxu0 0.0
        %1175 = vmatpush1.msra.mxu0 0.0
        %1176 = vmatprep.subr.mxu0 0.0
        %1177 = vmatpush1.msra.mxu0 0.0
        %1178 = vmatprep.subr.mxu0 0.0
        %1179 = vmatpush1.msra.mxu0 0.0
        %1180 = vmatprep.subr.mxu0 0.0
        %1181 = vmatpush1.msra.mxu0 0.0
        %1182 = vmatprep.subr.mxu0 0.0
        %1183 = vmatpush1.msra.mxu0 0.0
        %1184 = vmatprep.subr.mxu0 0.0
        %1185 = vmatpush1.msra.mxu0 0.0
        %1186 = vmatprep.subr.mxu0 0.0
        %1187 = vmatpush1.msra.mxu0 0.0
        %1188 = vmatprep.subr.mxu0 0.0
        %1189 = vmatpush1.msra.mxu0 0.0
        %1190 = vmatprep.subr.mxu0 0.0
        %1191 = vmatpush1.msra.mxu0 0.0
        %1192 = vmatprep.subr.mxu0 0.0
        %1193 = vmatpush1.msra.mxu0 0.0
        %1194 = vmatprep.subr.mxu0 0.0
        %1195 = vmatpush1.msra.mxu0 0.0
        %1196 = vmatprep.subr.mxu0 0.0
        %1197 = vmatpush1.msra.mxu0 0.0
        %1198 = vmatprep.subr.mxu0 0.0
        %1199 = vmatpush1.msra.mxu0 0.0
        %1200 = vmatprep.subr.mxu0 0.0
        %1201 = vmatpush1.msra.mxu0 0.0
        %1202 = vmatprep.subr.mxu0 0.0
        %1203 = vmatpush1.msra.mxu0 0.0
        %1204 = vmatprep.subr.mxu0 0.0
        %1205 = vmatpush1.msra.mxu0 0.0
        %1206 = vmatprep.subr.mxu0 0.0
        %1207 = vmatpush1.msra.mxu0 0.0
        %1208 = vmatprep.subr.mxu0 0.0
        %1209 = vmatpush1.msra.mxu0 0.0
        %1210 = vmatprep.subr.mxu0 0.0
        %1211 = vmatpush1.msra.mxu0 0.0
        %1212 = vmatprep.mubr.f32.mxu0 0.0
        %1213 = vmatmul.mubr.f32.gmra.mrb[0].mxu0 %v1101
        %v1214 = vpop.f32.mrb[0].mxu0
        %v1215 = vadd.f32 %v1098, %v1214
        %v1216 = vpop.f32.mrb[0].mxu0
        %1217 = vmatprep.mubr.f32.mxu0 0.0
        %1218 = vmatmul.mubr.f32.gmra.mrb[0].mxu0 %v1104
        %v1219 = vpop.f32.mrb[0].mxu0
        %v1220 = vadd.f32 %v1098, %v1219
        %v1221 = vpop.f32.mrb[0].mxu0
        %1222 = vmatprep.mubr.f32.mxu0 0.0
        %1223 = vmatmul.mubr.f32.gmra.mrb[0].mxu0 %v1107
        %v1224 = vpop.f32.mrb[0].mxu0
        %v1225 = vadd.f32 %v1098, %v1224
        %v1226 = vpop.f32.mrb[0].mxu0
        %1227 = vmatprep.mubr.f32.mxu0 0.0
        %1228 = vmatmul.mubr.f32.gmra.mrb[0].mxu0 %v1110
        %v1229 = vpop.f32.mrb[0].mxu0
        %v1230 = vadd.f32 %v1098, %v1229
        %v1231 = vpop.f32.mrb[0].mxu0
        %1232 = vmatprep.mubr.f32.mxu0 0.0
        %1233 = vmatmul.mubr.f32.gmra.mrb[0].mxu0 %v1113
        %v1234 = vpop.f32.mrb[0].mxu0
        %v1235 = vadd.f32 %v1098, %v1234
        %v1236 = vpop.f32.mrb[0].mxu0
        %1237 = vmatprep.mubr.f32.mxu0 0.0
        %1238 = vmatmul.mubr.f32.gmra.mrb[0].mxu0 %v1116
        %v1239 = vpop.f32.mrb[0].mxu0
        %v1240 = vadd.f32 %v1098, %v1239
        %v1241 = vpop.f32.mrb[0].mxu0
        %1242 = vmatprep.mubr.f32.mxu0 0.0
        %1243 = vmatmul.mubr.f32.gmra.mrb[0].mxu0 %v1119
        %v1244 = vpop.f32.mrb[0].mxu0
        %v1245 = vadd.f32 %v1098, %v1244
        %v1246 = vpop.f32.mrb[0].mxu0
        %1247 = vmatprep.mubr.f32.mxu0 0.0
        %1248 = vmatmul.mubr.f32.gmra.mrb[0].mxu0 %v1122
        %v1249 = vpop.f32.mrb[0].mxu0
        %v1250 = vadd.f32 %v1098, %v1249
        %v1251 = vpop.f32.mrb[0].mxu0
        %1252 = vmatprep.mubr.f32.mxu0 0.0
        %1253 = vmatmul.mubr.f32.gmra.mrb[0].mxu0 %v1125
        %v1254 = vpop.f32.mrb[0].mxu0
        %v1255 = vadd.f32 %v1098, %v1254
        %v1256 = vpop.f32.mrb[0].mxu0
        %1257 = vmatprep.mubr.f32.mxu0 0.0
        %1258 = vmatmul.mubr.f32.gmra.mrb[0].mxu0 %v1128
        %v1259 = vpop.f32.mrb[0].mxu0
        %v1260 = vadd.f32 %v1098, %v1259
        %v1261 = vpop.f32.mrb[0].mxu0
        %1262 = vmatprep.mubr.f32.mxu0 0.0
        %1263 = vmatmul.mubr.f32.gmra.mrb[0].mxu0 %v1131
        %v1264 = vpop.f32.mrb[0].mxu0
        %v1265 = vadd.f32 %v1098, %v1264
        %v1266 = vpop.f32.mrb[0].mxu0
        %1267 = vmatprep.mubr.f32.mxu0 0.0
        %1268 = vmatmul.mubr.f32.gmra.mrb[0].mxu0 %v1134
        %v1269 = vpop.f32.mrb[0].mxu0
        %v1270 = vadd.f32 %v1098, %v1269
        %v1271 = vpop.f32.mrb[0].mxu0
        %1272 = vmatprep.mubr.f32.mxu0 0.0
        %1273 = vmatmul.mubr.f32.gmra.mrb[0].mxu0 %v1137
        %v1274 = vpop.f32.mrb[0].mxu0
        %v1275 = vadd.f32 %v1098, %v1274
        %v1276 = vpop.f32.mrb[0].mxu0
        %1277 = vmatprep.mubr.f32.mxu0 0.0
        %1278 = vmatmul.mubr.f32.gmra.mrb[0].mxu0 %v1140
        %v1279 = vpop.f32.mrb[0].mxu0
        %v1280 = vadd.f32 %v1098, %v1279
        %v1281 = vpop.f32.mrb[0].mxu0
        %1282 = vmatprep.mubr.f32.mxu0 0.0
        %1283 = vmatmul.mubr.f32.gmra.mrb[0].mxu0 %v1143
        %v1284 = vpop.f32.mrb[0].mxu0
        %v1285 = vadd.f32 %v1098, %v1284
        %v1286 = vpop.f32.mrb[0].mxu0
        %1287 = vmatprep.mubr.f32.mxu0 0.0
        %1288 = vmatmul.mubr.f32.gmra.mrb[0].mxu0 %v1146
        %v1289 = vpop.f32.mrb[0].mxu0
        %v1290 = vadd.f32 %v1098, %v1289
        %v1291 = vpop.f32.mrb[0].mxu0
        %1292 = vdwg.mxu0
        %v1293 = vld [vmem:[%s8] sm:$0xff]
        %v1294 = vld [vmem:[%s8 + $0x8] sm:$0xff]
        %v1295 = vld [vmem:[%s8 + $0x10] sm:$0xff]
        %v1296 = vld [vmem:[%s8 + $0x18] sm:$0xff]
        %v1297 = vld [vmem:[%s9] sm:$0x1]
        %v1299 = vlaneseq
        %v1300 = vshrl.u32 %v1299, 7
        %v1301 = vsub.s32 0, %v1300
        %v1302 = vrot.slane %v1297, %v1301
        %vm1304 = vcmask 261120
        %v1306 = vsel %vm1304, %v1215, 0
        %v1309 = vsel %vm1304, %v1220, 0
        %v1312 = vsel %vm1304, %v1225, 0
        %v1315 = vsel %vm1304, %v1230, 0
        %v1318 = vsel %vm1304, %v1235, 0
        %v1321 = vsel %vm1304, %v1240, 0
        %v1324 = vsel %vm1304, %v1245, 0
        %v1327 = vsel %vm1304, %v1250, 0
        %v1330 = vsel %vm1304, %v1255, 0
        %v1333 = vsel %vm1304, %v1260, 0
        %v1336 = vsel %vm1304, %v1265, 0
        %v1339 = vsel %vm1304, %v1270, 0
        %v1342 = vsel %vm1304, %v1275, 0
        %v1345 = vsel %vm1304, %v1280, 0
        %v1348 = vsel %vm1304, %v1285, 0
        %v1351 = vsel %vm1304, %v1290, 0
        %1353 = vmatprep.subr.mxu0 0.0
        %1354 = vmatpush1.msra.mxu0 %v1293
        %1355 = vmatprep.subr.mxu0 0.0
        %1356 = vmatpush1.msra.mxu0 %v1294
        %1357 = vmatprep.subr.mxu0 0.0
        %1358 = vmatpush1.msra.mxu0 %v1295
        %1359 = vmatprep.subr.mxu0 0.0
        %1360 = vmatpush1.msra.mxu0 %v1296
        %1361 = vmatprep.subr.mxu0 0.0
        %1362 = vmatpush1.msra.mxu0 0.0
        %1363 = vmatprep.subr.mxu0 0.0
        %1364 = vmatpush1.msra.mxu0 0.0
        %1365 = vmatprep.subr.mxu0 0.0
        %1366 = vmatpush1.msra.mxu0 0.0
        %1367 = vmatprep.subr.mxu0 0.0
        %1368 = vmatpush1.msra.mxu0 0.0
        %1369 = vmatprep.subr.mxu0 0.0
        %1370 = vmatpush1.msra.mxu0 0.0
        %1371 = vmatprep.subr.mxu0 0.0
        %1372 = vmatpush1.msra.mxu0 0.0
        %1373 = vmatprep.subr.mxu0 0.0
        %1374 = vmatpush1.msra.mxu0 0.0
        %1375 = vmatprep.subr.mxu0 0.0
        %1376 = vmatpush1.msra.mxu0 0.0
        %1377 = vmatprep.subr.mxu0 0.0
        %1378 = vmatpush1.msra.mxu0 0.0
        %1379 = vmatprep.subr.mxu0 0.0
        %1380 = vmatpush1.msra.mxu0 0.0
        %1381 = vmatprep.subr.mxu0 0.0
        %1382 = vmatpush1.msra.mxu0 0.0
        %1383 = vmatprep.subr.mxu0 0.0
        %1384 = vmatpush1.msra.mxu0 0.0
        %1385 = vmatprep.subr.mxu0 0.0
        %1386 = vmatpush1.msra.mxu0 0.0
        %1387 = vmatprep.subr.mxu0 0.0
        %1388 = vmatpush1.msra.mxu0 0.0
        %1389 = vmatprep.subr.mxu0 0.0
        %1390 = vmatpush1.msra.mxu0 0.0
        %1391 = vmatprep.subr.mxu0 0.0
        %1392 = vmatpush1.msra.mxu0 0.0
        %1393 = vmatprep.subr.mxu0 0.0
        %1394 = vmatpush1.msra.mxu0 0.0
        %1395 = vmatprep.subr.mxu0 0.0
        %1396 = vmatpush1.msra.mxu0 0.0
        %1397 = vmatprep.subr.mxu0 0.0
        %1398 = vmatpush1.msra.mxu0 0.0
        %1399 = vmatprep.subr.mxu0 0.0
        %1400 = vmatpush1.msra.mxu0 0.0
        %1401 = vmatprep.subr.mxu0 0.0
        %1402 = vmatpush1.msra.mxu0 0.0
        %1403 = vmatprep.subr.mxu0 0.0
        %1404 = vmatpush1.msra.mxu0 0.0
        %1405 = vmatprep.subr.mxu0 0.0
        %1406 = vmatpush1.msra.mxu0 0.0
        %1407 = vmatprep.subr.mxu0 0.0
        %1408 = vmatpush1.msra.mxu0 0.0
        %1409 = vmatprep.subr.mxu0 0.0
        %1410 = vmatpush1.msra.mxu0 0.0
        %1411 = vmatprep.subr.mxu0 0.0
        %1412 = vmatpush1.msra.mxu0 0.0
        %1413 = vmatprep.subr.mxu0 0.0
        %1414 = vmatpush1.msra.mxu0 0.0
        %1415 = vmatprep.subr.mxu0 0.0
        %1416 = vmatpush1.msra.mxu0 0.0
        %1417 = vmatprep.mubr.f32.mxu0 0.0
        %1418 = vmatmul.mubr.f32.gmra.mrb[0].mxu0 %v1306
        %v1419 = vpop.f32.mrb[0].mxu0
        %v1420 = vadd.f32 %v1302, %v1419
        %v1421 = vpop.f32.mrb[0].mxu0
        %1422 = vmatprep.mubr.f32.mxu0 0.0
        %1423 = vmatmul.mubr.f32.gmra.mrb[0].mxu0 %v1309
        %v1424 = vpop.f32.mrb[0].mxu0
        %v1425 = vadd.f32 %v1302, %v1424
        %v1426 = vpop.f32.mrb[0].mxu0
        %1427 = vmatprep.mubr.f32.mxu0 0.0
        %1428 = vmatmul.mubr.f32.gmra.mrb[0].mxu0 %v1312
        %v1429 = vpop.f32.mrb[0].mxu0
        %v1430 = vadd.f32 %v1302, %v1429
        %v1431 = vpop.f32.mrb[0].mxu0
        %1432 = vmatprep.mubr.f32.mxu0 0.0
        %1433 = vmatmul.mubr.f32.gmra.mrb[0].mxu0 %v1315
        %v1434 = vpop.f32.mrb[0].mxu0
        %v1435 = vadd.f32 %v1302, %v1434
        %v1436 = vpop.f32.mrb[0].mxu0
        %1437 = vmatprep.mubr.f32.mxu0 0.0
        %1438 = vmatmul.mubr.f32.gmra.mrb[0].mxu0 %v1318
        %v1439 = vpop.f32.mrb[0].mxu0
        %v1440 = vadd.f32 %v1302, %v1439
        %v1441 = vpop.f32.mrb[0].mxu0
        %1442 = vmatprep.mubr.f32.mxu0 0.0
        %1443 = vmatmul.mubr.f32.gmra.mrb[0].mxu0 %v1321
        %v1444 = vpop.f32.mrb[0].mxu0
        %v1445 = vadd.f32 %v1302, %v1444
        %v1446 = vpop.f32.mrb[0].mxu0
        %1447 = vmatprep.mubr.f32.mxu0 0.0
        %1448 = vmatmul.mubr.f32.gmra.mrb[0].mxu0 %v1324
        %v1449 = vpop.f32.mrb[0].mxu0
        %v1450 = vadd.f32 %v1302, %v1449
        %v1451 = vpop.f32.mrb[0].mxu0
        %1452 = vmatprep.mubr.f32.mxu0 0.0
        %1453 = vmatmul.mubr.f32.gmra.mrb[0].mxu0 %v1327
        %v1454 = vpop.f32.mrb[0].mxu0
        %v1455 = vadd.f32 %v1302, %v1454
        %v1456 = vpop.f32.mrb[0].mxu0
        %1457 = vmatprep.mubr.f32.mxu0 0.0
        %1458 = vmatmul.mubr.f32.gmra.mrb[0].mxu0 %v1330
        %v1459 = vpop.f32.mrb[0].mxu0
        %v1460 = vadd.f32 %v1302, %v1459
        %v1461 = vpop.f32.mrb[0].mxu0
        %1462 = vmatprep.mubr.f32.mxu0 0.0
        %1463 = vmatmul.mubr.f32.gmra.mrb[0].mxu0 %v1333
        %v1464 = vpop.f32.mrb[0].mxu0
        %v1465 = vadd.f32 %v1302, %v1464
        %v1466 = vpop.f32.mrb[0].mxu0
        %1467 = vmatprep.mubr.f32.mxu0 0.0
        %1468 = vmatmul.mubr.f32.gmra.mrb[0].mxu0 %v1336
        %v1469 = vpop.f32.mrb[0].mxu0
        %v1470 = vadd.f32 %v1302, %v1469
        %v1471 = vpop.f32.mrb[0].mxu0
        %1472 = vmatprep.mubr.f32.mxu0 0.0
        %1473 = vmatmul.mubr.f32.gmra.mrb[0].mxu0 %v1339
        %v1474 = vpop.f32.mrb[0].mxu0
        %v1475 = vadd.f32 %v1302, %v1474
        %v1476 = vpop.f32.mrb[0].mxu0
        %1477 = vmatprep.mubr.f32.mxu0 0.0
        %1478 = vmatmul.mubr.f32.gmra.mrb[0].mxu0 %v1342
        %v1479 = vpop.f32.mrb[0].mxu0
        %v1480 = vadd.f32 %v1302, %v1479
        %v1481 = vpop.f32.mrb[0].mxu0
        %1482 = vmatprep.mubr.f32.mxu0 0.0
        %1483 = vmatmul.mubr.f32.gmra.mrb[0].mxu0 %v1345
        %v1484 = vpop.f32.mrb[0].mxu0
        %v1485 = vadd.f32 %v1302, %v1484
        %v1486 = vpop.f32.mrb[0].mxu0
        %1487 = vmatprep.mubr.f32.mxu0 0.0
        %1488 = vmatmul.mubr.f32.gmra.mrb[0].mxu0 %v1348
        %v1489 = vpop.f32.mrb[0].mxu0
        %v1490 = vadd.f32 %v1302, %v1489
        %v1491 = vpop.f32.mrb[0].mxu0
        %1492 = vmatprep.mubr.f32.mxu0 0.0
        %1493 = vmatmul.mubr.f32.gmra.mrb[0].mxu0 %v1351
        %v1494 = vpop.f32.mrb[0].mxu0
        %v1495 = vadd.f32 %v1302, %v1494
        %v1496 = vpop.f32.mrb[0].mxu0
        %1497 = vdwg.mxu0
        %v1498 = vld [vmem:[%s612] sm:$0xff]
        %v1499 = vld [vmem:[%s612 + $0x8] sm:$0xff]
        %v1500 = vld [vmem:[%s612 + $0x10] sm:$0xff]
        %v1501 = vld [vmem:[%s612 + $0x18] sm:$0xff]
        %v1502 = vld [vmem:[%s612 + $0x20] sm:$0xff]
        %v1503 = vld [vmem:[%s612 + $0x28] sm:$0xff]
        %v1504 = vld [vmem:[%s612 + $0x30] sm:$0xff]
        %v1505 = vld [vmem:[%s612 + $0x38] sm:$0xff]
        %v1506 = vld [vmem:[%s612 + $0x40] sm:$0xff]
        %v1507 = vld [vmem:[%s612 + $0x48] sm:$0xff]
        %v1508 = vld [vmem:[%s612 + $0x50] sm:$0xff]
        %v1509 = vld [vmem:[%s612 + $0x58] sm:$0xff]
        %v1510 = vld [vmem:[%s612 + $0x60] sm:$0xff]
        %v1511 = vld [vmem:[%s612 + $0x68] sm:$0xff]
        %v1512 = vld [vmem:[%s612 + $0x70] sm:$0xff]
        %v1513 = vld [vmem:[%s612 + $0x78] sm:$0xff]
        %v1514 = vmul.f32 %v1420, 0.5
        %v1515 = vmul.f32 %v1425, 0.5
        %v1516 = vmul.f32 %v1430, 0.5
        %v1517 = vmul.f32 %v1435, 0.5
        %v1518 = vmul.f32 %v1440, 0.5
        %v1519 = vmul.f32 %v1445, 0.5
        %v1520 = vmul.f32 %v1450, 0.5
        %v1521 = vmul.f32 %v1455, 0.5
        %v1522 = vmul.f32 %v1460, 0.5
        %v1523 = vmul.f32 %v1465, 0.5
        %v1524 = vmul.f32 %v1470, 0.5
        %v1525 = vmul.f32 %v1475, 0.5
        %v1526 = vmul.f32 %v1480, 0.5
        %v1527 = vmul.f32 %v1485, 0.5
        %v1528 = vmul.f32 %v1490, 0.5
        %v1529 = vmul.f32 %v1495, 0.5
        %v1530 = vmul.f32 %v1514, 1.442695
        %v1531 = vpow.pop %v1530
        %v1532 = vmul.f32 %v1515, 1.442695
        %v1533 = vpow.pop %v1532
        %v1534 = vmul.f32 %v1516, 1.442695
        %v1535 = vpow.pop %v1534
        %v1536 = vmul.f32 %v1517, 1.442695
        %v1537 = vpow.pop %v1536
        %v1538 = vmul.f32 %v1518, 1.442695
        %v1539 = vpow.pop %v1538
        %v1540 = vmul.f32 %v1519, 1.442695
        %v1541 = vpow.pop %v1540
        %v1542 = vmul.f32 %v1520, 1.442695
        %v1543 = vpow.pop %v1542
        %v1544 = vmul.f32 %v1521, 1.442695
        %v1545 = vpow.pop %v1544
        %v1546 = vmul.f32 %v1522, 1.442695
        %v1547 = vpow.pop %v1546
        %v1548 = vmul.f32 %v1523, 1.442695
        %v1549 = vpow.pop %v1548
        %v1550 = vmul.f32 %v1524, 1.442695
        %v1551 = vpow.pop %v1550
        %v1552 = vmul.f32 %v1525, 1.442695
        %v1553 = vpow.pop %v1552
        %v1554 = vmul.f32 %v1526, 1.442695
        %v1555 = vpow.pop %v1554
        %v1556 = vmul.f32 %v1527, 1.442695
        %v1557 = vpow.pop %v1556
        %v1558 = vmul.f32 %v1528, 1.442695
        %v1559 = vpow.pop %v1558
        %v1560 = vmul.f32 %v1529, 1.442695
        %v1561 = vpow.pop %v1560
        %1578 = vrot.lane.b32.xlu0 %v1531, 96
        %v1579 = vpop.permute.xlu0 %1578
        %1580 = vrot.lane.b32.xlu0 %v1533, 96
        %v1581 = vpop.permute.xlu0 %1580
        %1582 = vrot.lane.b32.xlu0 %v1535, 96
        %v1583 = vpop.permute.xlu0 %1582
        %1584 = vrot.lane.b32.xlu0 %v1537, 96
        %v1585 = vpop.permute.xlu0 %1584
        %1586 = vrot.lane.b32.xlu0 %v1539, 96
        %v1587 = vpop.permute.xlu0 %1586
        %1588 = vrot.lane.b32.xlu0 %v1541, 96
        %v1589 = vpop.permute.xlu0 %1588
        %1590 = vrot.lane.b32.xlu0 %v1543, 96
        %v1591 = vpop.permute.xlu0 %1590
        %1592 = vrot.lane.b32.xlu0 %v1545, 96
        %v1593 = vpop.permute.xlu0 %1592
        %1594 = vrot.lane.b32.xlu0 %v1547, 96
        %v1595 = vpop.permute.xlu0 %1594
        %1596 = vrot.lane.b32.xlu0 %v1549, 96
        %v1597 = vpop.permute.xlu0 %1596
        %1598 = vrot.lane.b32.xlu0 %v1551, 96
        %v1599 = vpop.permute.xlu0 %1598
        %1600 = vrot.lane.b32.xlu0 %v1553, 96
        %v1601 = vpop.permute.xlu0 %1600
        %1602 = vrot.lane.b32.xlu0 %v1555, 96
        %v1603 = vpop.permute.xlu0 %1602
        %1604 = vrot.lane.b32.xlu0 %v1557, 96
        %v1605 = vpop.permute.xlu0 %1604
        %1606 = vrot.lane.b32.xlu0 %v1559, 96
        %v1607 = vpop.permute.xlu0 %1606
        %1608 = vrot.lane.b32.xlu0 %v1561, 96
        %v1609 = vpop.permute.xlu0 %1608
        %v1626 = vmul.f32 %v1498, %v1579
        %v1627 = vmul.f32 %v1499, %v1581
        %v1628 = vmul.f32 %v1500, %v1583
        %v1629 = vmul.f32 %v1501, %v1585
        %v1630 = vmul.f32 %v1502, %v1587
        %v1631 = vmul.f32 %v1503, %v1589
        %v1632 = vmul.f32 %v1504, %v1591
        %v1633 = vmul.f32 %v1505, %v1593
        %v1634 = vmul.f32 %v1506, %v1595
        %v1635 = vmul.f32 %v1507, %v1597
        %v1636 = vmul.f32 %v1508, %v1599
        %v1637 = vmul.f32 %v1509, %v1601
        %v1638 = vmul.f32 %v1510, %v1603
        %v1639 = vmul.f32 %v1511, %v1605
        %v1640 = vmul.f32 %v1512, %v1607
        %v1641 = vmul.f32 %v1513, %v1609
        %v1642 = vadd.f32 %v1420, %v1626
        %v1643 = vadd.f32 %v1425, %v1627
        %v1644 = vadd.f32 %v1430, %v1628
        %v1645 = vadd.f32 %v1435, %v1629
        %v1646 = vadd.f32 %v1440, %v1630
        %v1647 = vadd.f32 %v1445, %v1631
        %v1648 = vadd.f32 %v1450, %v1632
        %v1649 = vadd.f32 %v1455, %v1633
        %v1650 = vadd.f32 %v1460, %v1634
        %v1651 = vadd.f32 %v1465, %v1635
        %v1652 = vadd.f32 %v1470, %v1636
        %v1653 = vadd.f32 %v1475, %v1637
        %v1654 = vadd.f32 %v1480, %v1638
        %v1655 = vadd.f32 %v1485, %v1639
        %v1656 = vadd.f32 %v1490, %v1640
        %v1657 = vadd.f32 %v1495, %v1641
        %v1658 = vld [vmem:[%s10] sm:$0xff]
        %v1659 = vld [vmem:[%s10 + $0x8] sm:$0xff]
        %v1660 = vld [vmem:[%s10 + $0x10] sm:$0xff]
        %v1661 = vld [vmem:[%s10 + $0x18] sm:$0xff]
        %v1662 = vld [vmem:[%s11] sm:$0x1]
        %v1664 = vlaneseq
        %v1665 = vshrl.u32 %v1664, 7
        %v1666 = vsub.s32 0, %v1665
        %v1667 = vrot.slane %v1662, %v1666
        %v1670 = vsel %vm1304, %v1642, 0
        %v1673 = vsel %vm1304, %v1643, 0
        %v1676 = vsel %vm1304, %v1644, 0
        %v1679 = vsel %vm1304, %v1645, 0
        %v1682 = vsel %vm1304, %v1646, 0
        %v1685 = vsel %vm1304, %v1647, 0
        %v1688 = vsel %vm1304, %v1648, 0
        %v1691 = vsel %vm1304, %v1649, 0
        %v1694 = vsel %vm1304, %v1650, 0
        %v1697 = vsel %vm1304, %v1651, 0
        %v1700 = vsel %vm1304, %v1652, 0
        %v1703 = vsel %vm1304, %v1653, 0
        %v1706 = vsel %vm1304, %v1654, 0
        %v1709 = vsel %vm1304, %v1655, 0
        %v1712 = vsel %vm1304, %v1656, 0
        %v1715 = vsel %vm1304, %v1657, 0
        %1717 = vmatprep.subr.mxu0 0.0
        %1718 = vmatpush1.msra.mxu0 %v1658
        %1719 = vmatprep.subr.mxu0 0.0
        %1720 = vmatpush1.msra.mxu0 %v1659
        %1721 = vmatprep.subr.mxu0 0.0
        %1722 = vmatpush1.msra.mxu0 %v1660
        %1723 = vmatprep.subr.mxu0 0.0
        %1724 = vmatpush1.msra.mxu0 %v1661
        %1725 = vmatprep.subr.mxu0 0.0
        %1726 = vmatpush1.msra.mxu0 0.0
        %1727 = vmatprep.subr.mxu0 0.0
        %1728 = vmatpush1.msra.mxu0 0.0
        %1729 = vmatprep.subr.mxu0 0.0
        %1730 = vmatpush1.msra.mxu0 0.0
        %1731 = vmatprep.subr.mxu0 0.0
        %1732 = vmatpush1.msra.mxu0 0.0
        %1733 = vmatprep.subr.mxu0 0.0
        %1734 = vmatpush1.msra.mxu0 0.0
        %1735 = vmatprep.subr.mxu0 0.0
        %1736 = vmatpush1.msra.mxu0 0.0
        %1737 = vmatprep.subr.mxu0 0.0
        %1738 = vmatpush1.msra.mxu0 0.0
        %1739 = vmatprep.subr.mxu0 0.0
        %1740 = vmatpush1.msra.mxu0 0.0
        %1741 = vmatprep.subr.mxu0 0.0
        %1742 = vmatpush1.msra.mxu0 0.0
        %1743 = vmatprep.subr.mxu0 0.0
        %1744 = vmatpush1.msra.mxu0 0.0
        %1745 = vmatprep.subr.mxu0 0.0
        %1746 = vmatpush1.msra.mxu0 0.0
        %1747 = vmatprep.subr.mxu0 0.0
        %1748 = vmatpush1.msra.mxu0 0.0
        %1749 = vmatprep.subr.mxu0 0.0
        %1750 = vmatpush1.msra.mxu0 0.0
        %1751 = vmatprep.subr.mxu0 0.0
        %1752 = vmatpush1.msra.mxu0 0.0
        %1753 = vmatprep.subr.mxu0 0.0
        %1754 = vmatpush1.msra.mxu0 0.0
        %1755 = vmatprep.subr.mxu0 0.0
        %1756 = vmatpush1.msra.mxu0 0.0
        %1757 = vmatprep.subr.mxu0 0.0
        %1758 = vmatpush1.msra.mxu0 0.0
        %1759 = vmatprep.subr.mxu0 0.0
        %1760 = vmatpush1.msra.mxu0 0.0
        %1761 = vmatprep.subr.mxu0 0.0
        %1762 = vmatpush1.msra.mxu0 0.0
        %1763 = vmatprep.subr.mxu0 0.0
        %1764 = vmatpush1.msra.mxu0 0.0
        %1765 = vmatprep.subr.mxu0 0.0
        %1766 = vmatpush1.msra.mxu0 0.0
        %1767 = vmatprep.subr.mxu0 0.0
        %1768 = vmatpush1.msra.mxu0 0.0
        %1769 = vmatprep.subr.mxu0 0.0
        %1770 = vmatpush1.msra.mxu0 0.0
        %1771 = vmatprep.subr.mxu0 0.0
        %1772 = vmatpush1.msra.mxu0 0.0
        %1773 = vmatprep.subr.mxu0 0.0
        %1774 = vmatpush1.msra.mxu0 0.0
        %1775 = vmatprep.subr.mxu0 0.0
        %1776 = vmatpush1.msra.mxu0 0.0
        %1777 = vmatprep.subr.mxu0 0.0
        %1778 = vmatpush1.msra.mxu0 0.0
        %1779 = vmatprep.subr.mxu0 0.0
        %1780 = vmatpush1.msra.mxu0 0.0
        %1781 = vmatprep.mubr.f32.mxu0 0.0
        %1782 = vmatmul.mubr.f32.gmra.mrb[0].mxu0 %v1670
        %v1783 = vpop.f32.mrb[0].mxu0
        %v1784 = vadd.f32 %v1667, %v1783
        %v1785 = vpop.f32.mrb[0].mxu0
        %1786 = vmatprep.mubr.f32.mxu0 0.0
        %1787 = vmatmul.mubr.f32.gmra.mrb[0].mxu0 %v1673
        %v1788 = vpop.f32.mrb[0].mxu0
        %v1789 = vadd.f32 %v1667, %v1788
        %v1790 = vpop.f32.mrb[0].mxu0
        %1791 = vmatprep.mubr.f32.mxu0 0.0
        %1792 = vmatmul.mubr.f32.gmra.mrb[0].mxu0 %v1676
        %v1793 = vpop.f32.mrb[0].mxu0
        %v1794 = vadd.f32 %v1667, %v1793
        %v1795 = vpop.f32.mrb[0].mxu0
        %1796 = vmatprep.mubr.f32.mxu0 0.0
        %1797 = vmatmul.mubr.f32.gmra.mrb[0].mxu0 %v1679
        %v1798 = vpop.f32.mrb[0].mxu0
        %v1799 = vadd.f32 %v1667, %v1798
        %v1800 = vpop.f32.mrb[0].mxu0
        %1801 = vmatprep.mubr.f32.mxu0 0.0
        %1802 = vmatmul.mubr.f32.gmra.mrb[0].mxu0 %v1682
        %v1803 = vpop.f32.mrb[0].mxu0
        %v1804 = vadd.f32 %v1667, %v1803
        %v1805 = vpop.f32.mrb[0].mxu0
        %1806 = vmatprep.mubr.f32.mxu0 0.0
        %1807 = vmatmul.mubr.f32.gmra.mrb[0].mxu0 %v1685
        %v1808 = vpop.f32.mrb[0].mxu0
        %v1809 = vadd.f32 %v1667, %v1808
        %v1810 = vpop.f32.mrb[0].mxu0
        %1811 = vmatprep.mubr.f32.mxu0 0.0
        %1812 = vmatmul.mubr.f32.gmra.mrb[0].mxu0 %v1688
        %v1813 = vpop.f32.mrb[0].mxu0
        %v1814 = vadd.f32 %v1667, %v1813
        %v1815 = vpop.f32.mrb[0].mxu0
        %1816 = vmatprep.mubr.f32.mxu0 0.0
        %1817 = vmatmul.mubr.f32.gmra.mrb[0].mxu0 %v1691
        %v1818 = vpop.f32.mrb[0].mxu0
        %v1819 = vadd.f32 %v1667, %v1818
        %v1820 = vpop.f32.mrb[0].mxu0
        %1821 = vmatprep.mubr.f32.mxu0 0.0
        %1822 = vmatmul.mubr.f32.gmra.mrb[0].mxu0 %v1694
        %v1823 = vpop.f32.mrb[0].mxu0
        %v1824 = vadd.f32 %v1667, %v1823
        %v1825 = vpop.f32.mrb[0].mxu0
        %1826 = vmatprep.mubr.f32.mxu0 0.0
        %1827 = vmatmul.mubr.f32.gmra.mrb[0].mxu0 %v1697
        %v1828 = vpop.f32.mrb[0].mxu0
        %v1829 = vadd.f32 %v1667, %v1828
        %v1830 = vpop.f32.mrb[0].mxu0
        %1831 = vmatprep.mubr.f32.mxu0 0.0
        %1832 = vmatmul.mubr.f32.gmra.mrb[0].mxu0 %v1700
        %v1833 = vpop.f32.mrb[0].mxu0
        %v1834 = vadd.f32 %v1667, %v1833
        %v1835 = vpop.f32.mrb[0].mxu0
        %1836 = vmatprep.mubr.f32.mxu0 0.0
        %1837 = vmatmul.mubr.f32.gmra.mrb[0].mxu0 %v1703
        %v1838 = vpop.f32.mrb[0].mxu0
        %v1839 = vadd.f32 %v1667, %v1838
        %v1840 = vpop.f32.mrb[0].mxu0
        %1841 = vmatprep.mubr.f32.mxu0 0.0
        %1842 = vmatmul.mubr.f32.gmra.mrb[0].mxu0 %v1706
        %v1843 = vpop.f32.mrb[0].mxu0
        %v1844 = vadd.f32 %v1667, %v1843
        %v1845 = vpop.f32.mrb[0].mxu0
        %1846 = vmatprep.mubr.f32.mxu0 0.0
        %1847 = vmatmul.mubr.f32.gmra.mrb[0].mxu0 %v1709
        %v1848 = vpop.f32.mrb[0].mxu0
        %v1849 = vadd.f32 %v1667, %v1848
        %v1850 = vpop.f32.mrb[0].mxu0
        %1851 = vmatprep.mubr.f32.mxu0 0.0
        %1852 = vmatmul.mubr.f32.gmra.mrb[0].mxu0 %v1712
        %v1853 = vpop.f32.mrb[0].mxu0
        %v1854 = vadd.f32 %v1667, %v1853
        %v1855 = vpop.f32.mrb[0].mxu0
        %1856 = vmatprep.mubr.f32.mxu0 0.0
        %1857 = vmatmul.mubr.f32.gmra.mrb[0].mxu0 %v1715
        %v1858 = vpop.f32.mrb[0].mxu0
        %v1859 = vadd.f32 %v1667, %v1858
        %v1860 = vpop.f32.mrb[0].mxu0
        %1861 = vdwg.mxu0
        %v1862 = vmul.f32 %v1784, 0.01
        %v1863 = vmul.f32 %v1789, 0.01
        %v1864 = vmul.f32 %v1794, 0.01
        %v1865 = vmul.f32 %v1799, 0.01
        %v1866 = vmul.f32 %v1804, 0.01
        %v1867 = vmul.f32 %v1809, 0.01
        %v1868 = vmul.f32 %v1814, 0.01
        %v1869 = vmul.f32 %v1819, 0.01
        %v1870 = vmul.f32 %v1824, 0.01
        %v1871 = vmul.f32 %v1829, 0.01
        %v1872 = vmul.f32 %v1834, 0.01
        %v1873 = vmul.f32 %v1839, 0.01
        %v1874 = vmul.f32 %v1844, 0.01
        %v1875 = vmul.f32 %v1849, 0.01
        %v1876 = vmul.f32 %v1854, 0.01
        %v1877 = vmul.f32 %v1859, 0.01
        %v1878 = vmax.f32 %v1784, %v1862
        %v1879 = vmax.f32 %v1789, %v1863
        %v1880 = vmax.f32 %v1794, %v1864
        %v1881 = vmax.f32 %v1799, %v1865
        %v1882 = vmax.f32 %v1804, %v1866
        %v1883 = vmax.f32 %v1809, %v1867
        %v1884 = vmax.f32 %v1814, %v1868
        %v1885 = vmax.f32 %v1819, %v1869
        %v1886 = vmax.f32 %v1824, %v1870
        %v1887 = vmax.f32 %v1829, %v1871
        %v1888 = vmax.f32 %v1834, %v1872
        %v1889 = vmax.f32 %v1839, %v1873
        %v1890 = vmax.f32 %v1844, %v1874
        %v1891 = vmax.f32 %v1849, %v1875
        %v1892 = vmax.f32 %v1854, %v1876
        %v1893 = vmax.f32 %v1859, %v1877
        %v1894 = vld [vmem:[%s12] sm:$0xff]
        %v1895 = vld [vmem:[%s12 + $0x8] sm:$0xff]
        %v1896 = vld [vmem:[%s12 + $0x10] sm:$0xff]
        %v1897 = vld [vmem:[%s12 + $0x18] sm:$0xff]
        %v1898 = vld [vmem:[%s12 + $0x20] sm:$0xff]
        %v1899 = vld [vmem:[%s12 + $0x28] sm:$0xff]
        %v1900 = vld [vmem:[%s12 + $0x30] sm:$0xff]
        %v1901 = vld [vmem:[%s12 + $0x38] sm:$0xff]
        %v1902 = vld [vmem:[%s13] sm:$0x1]
        %v1904 = vlaneseq
        %v1905 = vshrl.u32 %v1904, 7
        %v1906 = vsub.s32 0, %v1905
        %v1907 = vrot.slane %v1902, %v1906
        %v1910 = vsel %vm859, %v1878, 0
        %v1913 = vsel %vm859, %v1879, 0
        %v1916 = vsel %vm859, %v1880, 0
        %v1919 = vsel %vm859, %v1881, 0
        %v1922 = vsel %vm859, %v1882, 0
        %v1925 = vsel %vm859, %v1883, 0
        %v1928 = vsel %vm859, %v1884, 0
        %v1931 = vsel %vm859, %v1885, 0
        %v1934 = vsel %vm859, %v1886, 0
        %v1937 = vsel %vm859, %v1887, 0
        %v1940 = vsel %vm859, %v1888, 0
        %v1943 = vsel %vm859, %v1889, 0
        %v1946 = vsel %vm859, %v1890, 0
        %v1949 = vsel %vm859, %v1891, 0
        %v1952 = vsel %vm859, %v1892, 0
        %v1955 = vsel %vm859, %v1893, 0
        %1957 = vmatprep.subr.mxu0 0.0
        %1958 = vmatpush1.msra.mxu0 %v1894
        %1959 = vmatprep.subr.mxu0 0.0
        %1960 = vmatpush1.msra.mxu0 %v1895
        %1961 = vmatprep.subr.mxu0 0.0
        %1962 = vmatpush1.msra.mxu0 %v1896
        %1963 = vmatprep.subr.mxu0 0.0
        %1964 = vmatpush1.msra.mxu0 %v1897
        %1965 = vmatprep.subr.mxu0 0.0
        %1966 = vmatpush1.msra.mxu0 %v1898
        %1967 = vmatprep.subr.mxu0 0.0
        %1968 = vmatpush1.msra.mxu0 %v1899
        %1969 = vmatprep.subr.mxu0 0.0
        %1970 = vmatpush1.msra.mxu0 %v1900
        %1971 = vmatprep.subr.mxu0 0.0
        %1972 = vmatpush1.msra.mxu0 %v1901
        %1973 = vmatprep.subr.mxu0 0.0
        %1974 = vmatpush1.msra.mxu0 0.0
        %1975 = vmatprep.subr.mxu0 0.0
        %1976 = vmatpush1.msra.mxu0 0.0
        %1977 = vmatprep.subr.mxu0 0.0
        %1978 = vmatpush1.msra.mxu0 0.0
        %1979 = vmatprep.subr.mxu0 0.0
        %1980 = vmatpush1.msra.mxu0 0.0
        %1981 = vmatprep.subr.mxu0 0.0
        %1982 = vmatpush1.msra.mxu0 0.0
        %1983 = vmatprep.subr.mxu0 0.0
        %1984 = vmatpush1.msra.mxu0 0.0
        %1985 = vmatprep.subr.mxu0 0.0
        %1986 = vmatpush1.msra.mxu0 0.0
        %1987 = vmatprep.subr.mxu0 0.0
        %1988 = vmatpush1.msra.mxu0 0.0
        %1989 = vmatprep.subr.mxu0 0.0
        %1990 = vmatpush1.msra.mxu0 0.0
        %1991 = vmatprep.subr.mxu0 0.0
        %1992 = vmatpush1.msra.mxu0 0.0
        %1993 = vmatprep.subr.mxu0 0.0
        %1994 = vmatpush1.msra.mxu0 0.0
        %1995 = vmatprep.subr.mxu0 0.0
        %1996 = vmatpush1.msra.mxu0 0.0
        %1997 = vmatprep.subr.mxu0 0.0
        %1998 = vmatpush1.msra.mxu0 0.0
        %1999 = vmatprep.subr.mxu0 0.0
        %2000 = vmatpush1.msra.mxu0 0.0
        %2001 = vmatprep.subr.mxu0 0.0
        %2002 = vmatpush1.msra.mxu0 0.0
        %2003 = vmatprep.subr.mxu0 0.0
        %2004 = vmatpush1.msra.mxu0 0.0
        %2005 = vmatprep.subr.mxu0 0.0
        %2006 = vmatpush1.msra.mxu0 0.0
        %2007 = vmatprep.subr.mxu0 0.0
        %2008 = vmatpush1.msra.mxu0 0.0
        %2009 = vmatprep.subr.mxu0 0.0
        %2010 = vmatpush1.msra.mxu0 0.0
        %2011 = vmatprep.subr.mxu0 0.0
        %2012 = vmatpush1.msra.mxu0 0.0
        %2013 = vmatprep.subr.mxu0 0.0
        %2014 = vmatpush1.msra.mxu0 0.0
        %2015 = vmatprep.subr.mxu0 0.0
        %2016 = vmatpush1.msra.mxu0 0.0
        %2017 = vmatprep.subr.mxu0 0.0
        %2018 = vmatpush1.msra.mxu0 0.0
        %2019 = vmatprep.subr.mxu0 0.0
        %2020 = vmatpush1.msra.mxu0 0.0
        %2021 = vmatprep.mubr.f32.mxu0 0.0
        %2022 = vmatmul.mubr.f32.gmra.mrb[0].mxu0 %v1910
        %v2023 = vpop.f32.mrb[0].mxu0
        %v2024 = vadd.f32 %v1907, %v2023
        %v2025 = vpop.f32.mrb[0].mxu0
        %2026 = vmatprep.mubr.f32.mxu0 0.0
        %2027 = vmatmul.mubr.f32.gmra.mrb[0].mxu0 %v1913
        %v2028 = vpop.f32.mrb[0].mxu0
        %v2029 = vadd.f32 %v1907, %v2028
        %v2030 = vpop.f32.mrb[0].mxu0
        %2031 = vmatprep.mubr.f32.mxu0 0.0
        %2032 = vmatmul.mubr.f32.gmra.mrb[0].mxu0 %v1916
        %v2033 = vpop.f32.mrb[0].mxu0
        %v2034 = vadd.f32 %v1907, %v2033
        %v2035 = vpop.f32.mrb[0].mxu0
        %2036 = vmatprep.mubr.f32.mxu0 0.0
        %2037 = vmatmul.mubr.f32.gmra.mrb[0].mxu0 %v1919
        %v2038 = vpop.f32.mrb[0].mxu0
        %v2039 = vadd.f32 %v1907, %v2038
        %v2040 = vpop.f32.mrb[0].mxu0
        %2041 = vmatprep.mubr.f32.mxu0 0.0
        %2042 = vmatmul.mubr.f32.gmra.mrb[0].mxu0 %v1922
        %v2043 = vpop.f32.mrb[0].mxu0
        %v2044 = vadd.f32 %v1907, %v2043
        %v2045 = vpop.f32.mrb[0].mxu0
        %2046 = vmatprep.mubr.f32.mxu0 0.0
        %2047 = vmatmul.mubr.f32.gmra.mrb[0].mxu0 %v1925
        %v2048 = vpop.f32.mrb[0].mxu0
        %v2049 = vadd.f32 %v1907, %v2048
        %v2050 = vpop.f32.mrb[0].mxu0
        %2051 = vmatprep.mubr.f32.mxu0 0.0
        %2052 = vmatmul.mubr.f32.gmra.mrb[0].mxu0 %v1928
        %v2053 = vpop.f32.mrb[0].mxu0
        %v2054 = vadd.f32 %v1907, %v2053
        %v2055 = vpop.f32.mrb[0].mxu0
        %2056 = vmatprep.mubr.f32.mxu0 0.0
        %2057 = vmatmul.mubr.f32.gmra.mrb[0].mxu0 %v1931
        %v2058 = vpop.f32.mrb[0].mxu0
        %v2059 = vadd.f32 %v1907, %v2058
        %v2060 = vpop.f32.mrb[0].mxu0
        %2061 = vmatprep.mubr.f32.mxu0 0.0
        %2062 = vmatmul.mubr.f32.gmra.mrb[0].mxu0 %v1934
        %v2063 = vpop.f32.mrb[0].mxu0
        %v2064 = vadd.f32 %v1907, %v2063
        %v2065 = vpop.f32.mrb[0].mxu0
        %2066 = vmatprep.mubr.f32.mxu0 0.0
        %2067 = vmatmul.mubr.f32.gmra.mrb[0].mxu0 %v1937
        %v2068 = vpop.f32.mrb[0].mxu0
        %v2069 = vadd.f32 %v1907, %v2068
        %v2070 = vpop.f32.mrb[0].mxu0
        %2071 = vmatprep.mubr.f32.mxu0 0.0
        %2072 = vmatmul.mubr.f32.gmra.mrb[0].mxu0 %v1940
        %v2073 = vpop.f32.mrb[0].mxu0
        %v2074 = vadd.f32 %v1907, %v2073
        %v2075 = vpop.f32.mrb[0].mxu0
        %2076 = vmatprep.mubr.f32.mxu0 0.0
        %2077 = vmatmul.mubr.f32.gmra.mrb[0].mxu0 %v1943
        %v2078 = vpop.f32.mrb[0].mxu0
        %v2079 = vadd.f32 %v1907, %v2078
        %v2080 = vpop.f32.mrb[0].mxu0
        %2081 = vmatprep.mubr.f32.mxu0 0.0
        %2082 = vmatmul.mubr.f32.gmra.mrb[0].mxu0 %v1946
        %v2083 = vpop.f32.mrb[0].mxu0
        %v2084 = vadd.f32 %v1907, %v2083
        %v2085 = vpop.f32.mrb[0].mxu0
        %2086 = vmatprep.mubr.f32.mxu0 0.0
        %2087 = vmatmul.mubr.f32.gmra.mrb[0].mxu0 %v1949
        %v2088 = vpop.f32.mrb[0].mxu0
        %v2089 = vadd.f32 %v1907, %v2088
        %v2090 = vpop.f32.mrb[0].mxu0
        %2091 = vmatprep.mubr.f32.mxu0 0.0
        %2092 = vmatmul.mubr.f32.gmra.mrb[0].mxu0 %v1952
        %v2093 = vpop.f32.mrb[0].mxu0
        %v2094 = vadd.f32 %v1907, %v2093
        %v2095 = vpop.f32.mrb[0].mxu0
        %2096 = vmatprep.mubr.f32.mxu0 0.0
        %2097 = vmatmul.mubr.f32.gmra.mrb[0].mxu0 %v1955
        %v2098 = vpop.f32.mrb[0].mxu0
        %v2099 = vadd.f32 %v1907, %v2098
        %v2100 = vpop.f32.mrb[0].mxu0
        %2101 = vdwg.mxu0
        %v2102 = vmul.f32 %v2024, 0.01
        %v2103 = vmul.f32 %v2029, 0.01
        %v2104 = vmul.f32 %v2034, 0.01
        %v2105 = vmul.f32 %v2039, 0.01
        %v2106 = vmul.f32 %v2044, 0.01
        %v2107 = vmul.f32 %v2049, 0.01
        %v2108 = vmul.f32 %v2054, 0.01
        %v2109 = vmul.f32 %v2059, 0.01
        %v2110 = vmul.f32 %v2064, 0.01
        %v2111 = vmul.f32 %v2069, 0.01
        %v2112 = vmul.f32 %v2074, 0.01
        %v2113 = vmul.f32 %v2079, 0.01
        %v2114 = vmul.f32 %v2084, 0.01
        %v2115 = vmul.f32 %v2089, 0.01
        %v2116 = vmul.f32 %v2094, 0.01
        %v2117 = vmul.f32 %v2099, 0.01
        %v2118 = vmax.f32 %v2024, %v2102
        %v2119 = vmax.f32 %v2029, %v2103
        %v2120 = vmax.f32 %v2034, %v2104
        %v2121 = vmax.f32 %v2039, %v2105
        %v2122 = vmax.f32 %v2044, %v2106
        %v2123 = vmax.f32 %v2049, %v2107
        %v2124 = vmax.f32 %v2054, %v2108
        %v2125 = vmax.f32 %v2059, %v2109
        %v2126 = vmax.f32 %v2064, %v2110
        %v2127 = vmax.f32 %v2069, %v2111
        %v2128 = vmax.f32 %v2074, %v2112
        %v2129 = vmax.f32 %v2079, %v2113
        %v2130 = vmax.f32 %v2084, %v2114
        %v2131 = vmax.f32 %v2089, %v2115
        %v2132 = vmax.f32 %v2094, %v2116
        %v2133 = vmax.f32 %v2099, %v2117
        %v2134 = vld [vmem:[%s14] sm:$0xff]
        %v2135 = vld [vmem:[%s14 + $0x8] sm:$0xff]
        %v2136 = vld [vmem:[%s14 + $0x10] sm:$0xff]
        %v2137 = vld [vmem:[%s14 + $0x18] sm:$0xff]
        %v2138 = vld [vmem:[%s14 + $0x20] sm:$0xff]
        %v2139 = vld [vmem:[%s14 + $0x28] sm:$0xff]
        %v2140 = vld [vmem:[%s14 + $0x30] sm:$0xff]
        %v2141 = vld [vmem:[%s14 + $0x38] sm:$0xff]
        %v2142 = vld [vmem:[%s15] sm:$0x1]
        %v2144 = vlaneseq
        %v2145 = vshrl.u32 %v2144, 7
        %v2146 = vsub.s32 0, %v2145
        %v2147 = vrot.slane %v2142, %v2146
        %v2150 = vsel %vm859, %v2118, 0
        %v2153 = vsel %vm859, %v2119, 0
        %v2156 = vsel %vm859, %v2120, 0
        %v2159 = vsel %vm859, %v2121, 0
        %v2162 = vsel %vm859, %v2122, 0
        %v2165 = vsel %vm859, %v2123, 0
        %v2168 = vsel %vm859, %v2124, 0
        %v2171 = vsel %vm859, %v2125, 0
        %v2174 = vsel %vm859, %v2126, 0
        %v2177 = vsel %vm859, %v2127, 0
        %v2180 = vsel %vm859, %v2128, 0
        %v2183 = vsel %vm859, %v2129, 0
        %v2186 = vsel %vm859, %v2130, 0
        %v2189 = vsel %vm859, %v2131, 0
        %v2192 = vsel %vm859, %v2132, 0
        %v2195 = vsel %vm859, %v2133, 0
        %2197 = vmatprep.subr.mxu0 0.0
        %2198 = vmatpush1.msra.mxu0 %v2134
        %2199 = vmatprep.subr.mxu0 0.0
        %2200 = vmatpush1.msra.mxu0 %v2135
        %2201 = vmatprep.subr.mxu0 0.0
        %2202 = vmatpush1.msra.mxu0 %v2136
        %2203 = vmatprep.subr.mxu0 0.0
        %2204 = vmatpush1.msra.mxu0 %v2137
        %2205 = vmatprep.subr.mxu0 0.0
        %2206 = vmatpush1.msra.mxu0 %v2138
        %2207 = vmatprep.subr.mxu0 0.0
        %2208 = vmatpush1.msra.mxu0 %v2139
        %2209 = vmatprep.subr.mxu0 0.0
        %2210 = vmatpush1.msra.mxu0 %v2140
        %2211 = vmatprep.subr.mxu0 0.0
        %2212 = vmatpush1.msra.mxu0 %v2141
        %2213 = vmatprep.subr.mxu0 0.0
        %2214 = vmatpush1.msra.mxu0 0.0
        %2215 = vmatprep.subr.mxu0 0.0
        %2216 = vmatpush1.msra.mxu0 0.0
        %2217 = vmatprep.subr.mxu0 0.0
        %2218 = vmatpush1.msra.mxu0 0.0
        %2219 = vmatprep.subr.mxu0 0.0
        %2220 = vmatpush1.msra.mxu0 0.0
        %2221 = vmatprep.subr.mxu0 0.0
        %2222 = vmatpush1.msra.mxu0 0.0
        %2223 = vmatprep.subr.mxu0 0.0
        %2224 = vmatpush1.msra.mxu0 0.0
        %2225 = vmatprep.subr.mxu0 0.0
        %2226 = vmatpush1.msra.mxu0 0.0
        %2227 = vmatprep.subr.mxu0 0.0
        %2228 = vmatpush1.msra.mxu0 0.0
        %2229 = vmatprep.subr.mxu0 0.0
        %2230 = vmatpush1.msra.mxu0 0.0
        %2231 = vmatprep.subr.mxu0 0.0
        %2232 = vmatpush1.msra.mxu0 0.0
        %2233 = vmatprep.subr.mxu0 0.0
        %2234 = vmatpush1.msra.mxu0 0.0
        %2235 = vmatprep.subr.mxu0 0.0
        %2236 = vmatpush1.msra.mxu0 0.0
        %2237 = vmatprep.subr.mxu0 0.0
        %2238 = vmatpush1.msra.mxu0 0.0
        %2239 = vmatprep.subr.mxu0 0.0
        %2240 = vmatpush1.msra.mxu0 0.0
        %2241 = vmatprep.subr.mxu0 0.0
        %2242 = vmatpush1.msra.mxu0 0.0
        %2243 = vmatprep.subr.mxu0 0.0
        %2244 = vmatpush1.msra.mxu0 0.0
        %2245 = vmatprep.subr.mxu0 0.0
        %2246 = vmatpush1.msra.mxu0 0.0
        %2247 = vmatprep.subr.mxu0 0.0
        %2248 = vmatpush1.msra.mxu0 0.0
        %2249 = vmatprep.subr.mxu0 0.0
        %2250 = vmatpush1.msra.mxu0 0.0
        %2251 = vmatprep.subr.mxu0 0.0
        %2252 = vmatpush1.msra.mxu0 0.0
        %2253 = vmatprep.subr.mxu0 0.0
        %2254 = vmatpush1.msra.mxu0 0.0
        %2255 = vmatprep.subr.mxu0 0.0
        %2256 = vmatpush1.msra.mxu0 0.0
        %2257 = vmatprep.subr.mxu0 0.0
        %2258 = vmatpush1.msra.mxu0 0.0
        %2259 = vmatprep.subr.mxu0 0.0
        %2260 = vmatpush1.msra.mxu0 0.0
        %2261 = vmatprep.mubr.f32.mxu0 0.0
        %2262 = vmatmul.mubr.f32.gmra.mrb[0].mxu0 %v2150
        %v2263 = vpop.f32.mrb[0].mxu0
        %v2264 = vadd.f32 %v2147, %v2263
        %v2265 = vpop.f32.mrb[0].mxu0
        %2266 = vmatprep.mubr.f32.mxu0 0.0
        %2267 = vmatmul.mubr.f32.gmra.mrb[0].mxu0 %v2153
        %v2268 = vpop.f32.mrb[0].mxu0
        %v2269 = vadd.f32 %v2147, %v2268
        %v2270 = vpop.f32.mrb[0].mxu0
        %2271 = vmatprep.mubr.f32.mxu0 0.0
        %2272 = vmatmul.mubr.f32.gmra.mrb[0].mxu0 %v2156
        %v2273 = vpop.f32.mrb[0].mxu0
        %v2274 = vadd.f32 %v2147, %v2273
        %v2275 = vpop.f32.mrb[0].mxu0
        %2276 = vmatprep.mubr.f32.mxu0 0.0
        %2277 = vmatmul.mubr.f32.gmra.mrb[0].mxu0 %v2159
        %v2278 = vpop.f32.mrb[0].mxu0
        %v2279 = vadd.f32 %v2147, %v2278
        %v2280 = vpop.f32.mrb[0].mxu0
        %2281 = vmatprep.mubr.f32.mxu0 0.0
        %2282 = vmatmul.mubr.f32.gmra.mrb[0].mxu0 %v2162
        %v2283 = vpop.f32.mrb[0].mxu0
        %v2284 = vadd.f32 %v2147, %v2283
        %v2285 = vpop.f32.mrb[0].mxu0
        %2286 = vmatprep.mubr.f32.mxu0 0.0
        %2287 = vmatmul.mubr.f32.gmra.mrb[0].mxu0 %v2165
        %v2288 = vpop.f32.mrb[0].mxu0
        %v2289 = vadd.f32 %v2147, %v2288
        %v2290 = vpop.f32.mrb[0].mxu0
        %2291 = vmatprep.mubr.f32.mxu0 0.0
        %2292 = vmatmul.mubr.f32.gmra.mrb[0].mxu0 %v2168
        %v2293 = vpop.f32.mrb[0].mxu0
        %v2294 = vadd.f32 %v2147, %v2293
        %v2295 = vpop.f32.mrb[0].mxu0
        %2296 = vmatprep.mubr.f32.mxu0 0.0
        %2297 = vmatmul.mubr.f32.gmra.mrb[0].mxu0 %v2171
        %v2298 = vpop.f32.mrb[0].mxu0
        %v2299 = vadd.f32 %v2147, %v2298
        %v2300 = vpop.f32.mrb[0].mxu0
        %2301 = vmatprep.mubr.f32.mxu0 0.0
        %2302 = vmatmul.mubr.f32.gmra.mrb[0].mxu0 %v2174
        %v2303 = vpop.f32.mrb[0].mxu0
        %v2304 = vadd.f32 %v2147, %v2303
        %v2305 = vpop.f32.mrb[0].mxu0
        %2306 = vmatprep.mubr.f32.mxu0 0.0
        %2307 = vmatmul.mubr.f32.gmra.mrb[0].mxu0 %v2177
        %v2308 = vpop.f32.mrb[0].mxu0
        %v2309 = vadd.f32 %v2147, %v2308
        %v2310 = vpop.f32.mrb[0].mxu0
        %2311 = vmatprep.mubr.f32.mxu0 0.0
        %2312 = vmatmul.mubr.f32.gmra.mrb[0].mxu0 %v2180
        %v2313 = vpop.f32.mrb[0].mxu0
        %v2314 = vadd.f32 %v2147, %v2313
        %v2315 = vpop.f32.mrb[0].mxu0
        %2316 = vmatprep.mubr.f32.mxu0 0.0
        %2317 = vmatmul.mubr.f32.gmra.mrb[0].mxu0 %v2183
        %v2318 = vpop.f32.mrb[0].mxu0
        %v2319 = vadd.f32 %v2147, %v2318
        %v2320 = vpop.f32.mrb[0].mxu0
        %2321 = vmatprep.mubr.f32.mxu0 0.0
        %2322 = vmatmul.mubr.f32.gmra.mrb[0].mxu0 %v2186
        %v2323 = vpop.f32.mrb[0].mxu0
        %v2324 = vadd.f32 %v2147, %v2323
        %v2325 = vpop.f32.mrb[0].mxu0
        %2326 = vmatprep.mubr.f32.mxu0 0.0
        %2327 = vmatmul.mubr.f32.gmra.mrb[0].mxu0 %v2189
        %v2328 = vpop.f32.mrb[0].mxu0
        %v2329 = vadd.f32 %v2147, %v2328
        %v2330 = vpop.f32.mrb[0].mxu0
        %2331 = vmatprep.mubr.f32.mxu0 0.0
        %2332 = vmatmul.mubr.f32.gmra.mrb[0].mxu0 %v2192
        %v2333 = vpop.f32.mrb[0].mxu0
        %v2334 = vadd.f32 %v2147, %v2333
        %v2335 = vpop.f32.mrb[0].mxu0
        %2336 = vmatprep.mubr.f32.mxu0 0.0
        %2337 = vmatmul.mubr.f32.gmra.mrb[0].mxu0 %v2195
        %v2338 = vpop.f32.mrb[0].mxu0
        %v2339 = vadd.f32 %v2147, %v2338
        %v2340 = vpop.f32.mrb[0].mxu0
        %2341 = vdwg.mxu0
        %2342 = vst [vmem:[%s583] sm:$0xff] %v2264
        %2343 = vst [vmem:[%s583 + $0x8] sm:$0xff] %v2269
        %2344 = vst [vmem:[%s583 + $0x10] sm:$0xff] %v2274
        %2345 = vst [vmem:[%s583 + $0x18] sm:$0xff] %v2279
        %2346 = vst [vmem:[%s583 + $0x20] sm:$0xff] %v2284
        %2347 = vst [vmem:[%s583 + $0x28] sm:$0xff] %v2289
        %2348 = vst [vmem:[%s583 + $0x30] sm:$0xff] %v2294
        %2349 = vst [vmem:[%s583 + $0x38] sm:$0xff] %v2299
        %2350 = vst [vmem:[%s583 + $0x40] sm:$0xff] %v2304
        %2351 = vst [vmem:[%s583 + $0x48] sm:$0xff] %v2309
        %2352 = vst [vmem:[%s583 + $0x50] sm:$0xff] %v2314
        %2353 = vst [vmem:[%s583 + $0x58] sm:$0xff] %v2319
        %2354 = vst [vmem:[%s583 + $0x60] sm:$0xff] %v2324
        %2355 = vst [vmem:[%s583 + $0x68] sm:$0xff] %v2329
        %2356 = vst [vmem:[%s583 + $0x70] sm:$0xff] %v2334
        %2357 = vst [vmem:[%s583 + $0x78] sm:$0xff] %v2339
        %2358 = vst [vmem:[%s589] sm:$0xff] %v1420
        %2359 = vst [vmem:[%s589 + $0x8] sm:$0xff] %v1425
        %2360 = vst [vmem:[%s589 + $0x10] sm:$0xff] %v1430
        %2361 = vst [vmem:[%s589 + $0x18] sm:$0xff] %v1435
        %2362 = vst [vmem:[%s589 + $0x20] sm:$0xff] %v1440
        %2363 = vst [vmem:[%s589 + $0x28] sm:$0xff] %v1445
        %2364 = vst [vmem:[%s589 + $0x30] sm:$0xff] %v1450
        %2365 = vst [vmem:[%s589 + $0x38] sm:$0xff] %v1455
        %2366 = vst [vmem:[%s589 + $0x40] sm:$0xff] %v1460
        %2367 = vst [vmem:[%s589 + $0x48] sm:$0xff] %v1465
        %2368 = vst [vmem:[%s589 + $0x50] sm:$0xff] %v1470
        %2369 = vst [vmem:[%s589 + $0x58] sm:$0xff] %v1475
        %2370 = vst [vmem:[%s589 + $0x60] sm:$0xff] %v1480
        %2371 = vst [vmem:[%s589 + $0x68] sm:$0xff] %v1485
        %2372 = vst [vmem:[%s589 + $0x70] sm:$0xff] %v1490
        %2373 = vst [vmem:[%s589 + $0x78] sm:$0xff] %v1495
        %s2374 = sand.u32 %s386, 1
        %s2375 = scalar_lea.sflag [#allocation3], %s2374
        %s2376 = sand.u32 %s386, 1
        %s2377 = smul.addr %s2376, 128
        %s2378 = scalar_lea.vmem [#allocation2], %s2377
        %s2379 = sand.u32 %s412, 1
        %s2380 = sand.u32 %s412, 1
        %s2381 = smul.addr %s2380, 128
        %s2382 = scalar_lea.vmem [#allocation4], %s2381
        // Predicated region
        $region85: #{contrast_vae_forward.1} parent=83 // pred_check
          %p2383 = pneg %p396
        $region86: #{contrast_vae_forward.1} parent=83 // pred_check_branch
          %2385 = sbr.rel (%p2383) target = $region88
        $region87: #{contrast_vae_forward.1} parent=83 // pred_region
          %s2386 = smul.u32 16, %s32
          %s2387 = ssub.s32 25, %s2386
          %p2388 = scmp.lt.s32.totalorder %s2387, 16
          %s2389 = scalar_select %p2388, %s2387, 16
          %s2390 = smul.u32 128, %s2389
          %s2392 = ssub.s32 2048, %s2390
          %2393 = vsyncadd %s2375, %s2392
          %p2394 = scmp.ne.s32.totalorder 0, %s2390
          %s2395 = smul.addr %s2386, 128
          %s2396 = scalar_lea.hbm %s16, %s2395
          %s2397 = smul.u32 8, %s2389
          %s2398 = sshll.u32 %s2378, 4
          %s2399 = int_to_ptr.vmem [resolvable:$true] %s2398
          %s2400 = sshll.u32 %s2397, 4
          %2404 = dma.vmem_to_hbm [thread:$0]  (%p2394), %s2399, %s2400, %s2396, %s2375, 128, 128, 8
        $region88: #{contrast_vae_forward.1} parent=83 // pred_fallthru
          _
        // Predicated region
        $region89: #{contrast_vae_forward.1} parent=83 // pred_check
          %p2405 = pneg %p422
        $region90: #{contrast_vae_forward.1} parent=83 // pred_check_branch
          %2407 = sbr.rel (%p2405) target = $region92
        $region91: #{contrast_vae_forward.1} parent=83 // pred_region
          %s2408 = smul.u32 16, %s32
          %s2409 = ssub.s32 25, %s2408
          %p2410 = scmp.lt.s32.totalorder %s2409, 16
          %s2411 = scalar_select %p2410, %s2409, 16
          %s2412 = smul.u32 128, %s2411
          %p2413 = scmp.ne.s32.totalorder 0, %s2412
          %s2414 = smul.addr %s2408, 8
          %s2415 = scalar_lea.vmem %s17, %s2414
          // Predicated region
          $region93: #{contrast_vae_forward.1} parent=91 // pred_check
            %p2416 = pneg %p2413
          $region94: #{contrast_vae_forward.1} parent=91 // pred_check_branch
            %2418 = sbr.rel (%p2416) target = $region96
          $region95: #{contrast_vae_forward.1} parent=91 // pred_region
            // Predicated region
            $region97: #{contrast_vae_forward.1} parent=95 // pred_check
              _
            $region98: #{contrast_vae_forward.1} parent=95 // pred_check_branch
              %2420 = sbr.rel (0) target = $region100
            $region99: #{contrast_vae_forward.1} parent=95 // pred_region
              // Predicated region
              $region119: #{contrast_vae_forward.1} parent=99 // pred_check
                _
              $region120: #{contrast_vae_forward.1} parent=99 // pred_check_branch
                %2499 = sbr.rel (0) target = $region122
              $region121: #{contrast_vae_forward.1} parent=99 // pred_region
                %s2500 = sshrl.u32 %s2411, 4
                // While loop
                $region123: #{contrast_vae_forward.1} parent=121 // loop_pre_header
                  _
                $region124: #{contrast_vae_forward.1} parent=121 // loop_header
                  %s2502 = sphi 0, %s2504
                  %p2503 = scmp.ge.s32.totalorder %s2502, %s2500
                  %s2507 = sphi 0, %s2544
                  %s2508 = sphi %s2382, %s2547
                  %s2509 = sphi %s2415, %s2548
                $region125: #{contrast_vae_forward.1} parent=121 // loop_header_branch
                  %2506 = sbr.rel (%p2503) target = $region129
                $region126: #{contrast_vae_forward.1} parent=121 // loop_body
                  %v2510 = vld [vmem:[%s2508] sm:$0xff]
                  %2511 = vst [vmem:[%s2509] sm:$0xff] %v2510
                  %v2512 = vld [vmem:[%s2508 + $0x8] sm:$0xff]
                  %2513 = vst [vmem:[%s2509 + $0x8] sm:$0xff] %v2512
                  %v2514 = vld [vmem:[%s2508 + $0x10] sm:$0xff]
                  %2515 = vst [vmem:[%s2509 + $0x10] sm:$0xff] %v2514
                  %v2516 = vld [vmem:[%s2508 + $0x18] sm:$0xff]
                  %2517 = vst [vmem:[%s2509 + $0x18] sm:$0xff] %v2516
                  %v2518 = vld [vmem:[%s2508 + $0x20] sm:$0xff]
                  %2519 = vst [vmem:[%s2509 + $0x20] sm:$0xff] %v2518
                  %v2520 = vld [vmem:[%s2508 + $0x28] sm:$0xff]
                  %2521 = vst [vmem:[%s2509 + $0x28] sm:$0xff] %v2520
                  %v2522 = vld [vmem:[%s2508 + $0x30] sm:$0xff]
                  %2523 = vst [vmem:[%s2509 + $0x30] sm:$0xff] %v2522
                  %v2524 = vld [vmem:[%s2508 + $0x38] sm:$0xff]
                  %2525 = vst [vmem:[%s2509 + $0x38] sm:$0xff] %v2524
                  %v2526 = vld [vmem:[%s2508 + $0x40] sm:$0xff]
                  %2527 = vst [vmem:[%s2509 + $0x40] sm:$0xff] %v2526
                  %v2528 = vld [vmem:[%s2508 + $0x48] sm:$0xff]
                  %2529 = vst [vmem:[%s2509 + $0x48] sm:$0xff] %v2528
                  %v2530 = vld [vmem:[%s2508 + $0x50] sm:$0xff]
                  %2531 = vst [vmem:[%s2509 + $0x50] sm:$0xff] %v2530
                  %v2532 = vld [vmem:[%s2508 + $0x58] sm:$0xff]
                  %2533 = vst [vmem:[%s2509 + $0x58] sm:$0xff] %v2532
                  %v2534 = vld [vmem:[%s2508 + $0x60] sm:$0xff]
                  %2535 = vst [vmem:[%s2509 + $0x60] sm:$0xff] %v2534
                  %v2536 = vld [vmem:[%s2508 + $0x68] sm:$0xff]
                  %2537 = vst [vmem:[%s2509 + $0x68] sm:$0xff] %v2536
                  %v2538 = vld [vmem:[%s2508 + $0x70] sm:$0xff]
                  %2539 = vst [vmem:[%s2509 + $0x70] sm:$0xff] %v2538
                  %v2540 = vld [vmem:[%s2508 + $0x78] sm:$0xff]
                  %2541 = vst [vmem:[%s2509 + $0x78] sm:$0xff] %v2540
                  %s2542 = sadd.s32 1, %s2507
                  %p2543 = scmp.ge.s32.totalorder %s2542, %s2500
                  %s2544 = scalar_select %p2543, 0, %s2542
                  %s2545 = smul.u32 %s2544, 128
                  %s2546 = smul.u32 %s2544, 128
                  %s2547 = scalar_lea.vmem %s2382, %s2545 [#allocation4]
                  %s2548 = scalar_lea.vmem %s2415, %s2546
                $region127: #{contrast_vae_forward.1} parent=121 // loop_footer
                  %s2504 = sadd.s32 %s2502, 1
                $region128: #{contrast_vae_forward.1} parent=121 // loop_footer_branch
                  %2501 = sbr.rel target = $region124
                $region129: #{contrast_vae_forward.1} parent=121 // loop_exit
                  _
                %s2549 = sshrl.u32 %s2411, 4
                %s2550 = sand.u32 %s2411, 15
                %s2551 = smul.u32 %s2549, 16
                %s2552 = smul.u32 8, %s2551
                %s2553 = scalar_lea.vmem %s2382, %s2552 [#allocation4]
                %s2554 = smul.u32 8, %s2551
                %s2555 = scalar_lea.vmem %s2415, %s2554
                // While loop
                $region130: #{contrast_vae_forward.1} parent=121 // loop_pre_header
                  _
                $region131: #{contrast_vae_forward.1} parent=121 // loop_header
                  %s2557 = sphi 0, %s2559
                  %p2558 = scmp.ge.s32.totalorder %s2557, %s2550
                  %s2562 = sphi 0, %s2569
                  %s2563 = sphi %s2553, %s2572
                  %s2564 = sphi %s2555, %s2573
                $region132: #{contrast_vae_forward.1} parent=121 // loop_header_branch
                  %2561 = sbr.rel (%p2558) target = $region136
                $region133: #{contrast_vae_forward.1} parent=121 // loop_body
                  %v2565 = vld [vmem:[%s2563] sm:$0xff]
                  %2566 = vst [vmem:[%s2564] sm:$0xff] %v2565
                  %s2567 = sadd.s32 1, %s2562
                  %p2568 = scmp.ge.s32.totalorder %s2567, %s2550
                  %s2569 = scalar_select %p2568, 0, %s2567
                  %s2570 = smul.u32 %s2569, 8
                  %s2571 = smul.u32 %s2569, 8
                  %s2572 = scalar_lea.vmem %s2553, %s2570 [#allocation4]
                  %s2573 = scalar_lea.vmem %s2555, %s2571
                $region134: #{contrast_vae_forward.1} parent=121 // loop_footer
                  %s2559 = sadd.s32 %s2557, 1
                $region135: #{contrast_vae_forward.1} parent=121 // loop_footer_branch
                  %2556 = sbr.rel target = $region131
                $region136: #{contrast_vae_forward.1} parent=121 // loop_exit
                  _
              $region122: #{contrast_vae_forward.1} parent=99 // pred_fallthru
                _
              // Predicated region
              $region137: #{contrast_vae_forward.1} parent=99 // pred_check
                _
              $region138: #{contrast_vae_forward.1} parent=99 // pred_check_branch
                %2575 = sbr.rel target = $region140
              $region139: #{contrast_vae_forward.1} parent=99 // pred_region
                _
              $region140: #{contrast_vae_forward.1} parent=99 // pred_fallthru
                _
            $region100: #{contrast_vae_forward.1} parent=95 // pred_fallthru
              _
            // Predicated region
            $region101: #{contrast_vae_forward.1} parent=95 // pred_check
              _
            $region102: #{contrast_vae_forward.1} parent=95 // pred_check_branch
              %2422 = sbr.rel target = $region104
            $region103: #{contrast_vae_forward.1} parent=95 // pred_region
              %s2424 = sshrl.u32 %s2411, 4
              // While loop
              $region105: #{contrast_vae_forward.1} parent=103 // loop_pre_header
                _
              $region106: #{contrast_vae_forward.1} parent=103 // loop_header
                %s2426 = sphi 0, %s2428
                %p2427 = scmp.ge.s32.totalorder %s2426, %s2424
                %s2431 = sphi 0, %s2468
                %s2432 = sphi %s2382, %s2471
                %s2433 = sphi %s2415, %s2472
              $region107: #{contrast_vae_forward.1} parent=103 // loop_header_branch
                %2430 = sbr.rel (%p2427) target = $region111
              $region108: #{contrast_vae_forward.1} parent=103 // loop_body
                %v2434 = vld [vmem:[%s2432] sm:$0xff]
                %2435 = vst [vmem:[%s2433] sm:$0xff] %v2434
                %v2436 = vld [vmem:[%s2432 + $0x8] sm:$0xff]
                %2437 = vst [vmem:[%s2433 + $0x8] sm:$0xff] %v2436
                %v2438 = vld [vmem:[%s2432 + $0x10] sm:$0xff]
                %2439 = vst [vmem:[%s2433 + $0x10] sm:$0xff] %v2438
                %v2440 = vld [vmem:[%s2432 + $0x18] sm:$0xff]
                %2441 = vst [vmem:[%s2433 + $0x18] sm:$0xff] %v2440
                %v2442 = vld [vmem:[%s2432 + $0x20] sm:$0xff]
                %2443 = vst [vmem:[%s2433 + $0x20] sm:$0xff] %v2442
                %v2444 = vld [vmem:[%s2432 + $0x28] sm:$0xff]
                %2445 = vst [vmem:[%s2433 + $0x28] sm:$0xff] %v2444
                %v2446 = vld [vmem:[%s2432 + $0x30] sm:$0xff]
                %2447 = vst [vmem:[%s2433 + $0x30] sm:$0xff] %v2446
                %v2448 = vld [vmem:[%s2432 + $0x38] sm:$0xff]
                %2449 = vst [vmem:[%s2433 + $0x38] sm:$0xff] %v2448
                %v2450 = vld [vmem:[%s2432 + $0x40] sm:$0xff]
                %2451 = vst [vmem:[%s2433 + $0x40] sm:$0xff] %v2450
                %v2452 = vld [vmem:[%s2432 + $0x48] sm:$0xff]
                %2453 = vst [vmem:[%s2433 + $0x48] sm:$0xff] %v2452
                %v2454 = vld [vmem:[%s2432 + $0x50] sm:$0xff]
                %2455 = vst [vmem:[%s2433 + $0x50] sm:$0xff] %v2454
                %v2456 = vld [vmem:[%s2432 + $0x58] sm:$0xff]
                %2457 = vst [vmem:[%s2433 + $0x58] sm:$0xff] %v2456
                %v2458 = vld [vmem:[%s2432 + $0x60] sm:$0xff]
                %2459 = vst [vmem:[%s2433 + $0x60] sm:$0xff] %v2458
                %v2460 = vld [vmem:[%s2432 + $0x68] sm:$0xff]
                %2461 = vst [vmem:[%s2433 + $0x68] sm:$0xff] %v2460
                %v2462 = vld [vmem:[%s2432 + $0x70] sm:$0xff]
                %2463 = vst [vmem:[%s2433 + $0x70] sm:$0xff] %v2462
                %v2464 = vld [vmem:[%s2432 + $0x78] sm:$0xff]
                %2465 = vst [vmem:[%s2433 + $0x78] sm:$0xff] %v2464
                %s2466 = sadd.s32 1, %s2431
                %p2467 = scmp.ge.s32.totalorder %s2466, %s2424
                %s2468 = scalar_select %p2467, 0, %s2466
                %s2469 = smul.u32 %s2468, 128
                %s2470 = smul.u32 %s2468, 128
                %s2471 = scalar_lea.vmem %s2382, %s2469 [#allocation4]
                %s2472 = scalar_lea.vmem %s2415, %s2470
              $region109: #{contrast_vae_forward.1} parent=103 // loop_footer
                %s2428 = sadd.s32 %s2426, 1
              $region110: #{contrast_vae_forward.1} parent=103 // loop_footer_branch
                %2425 = sbr.rel target = $region106
              $region111: #{contrast_vae_forward.1} parent=103 // loop_exit
                _
              %s2473 = sshrl.u32 %s2411, 4
              %s2474 = sand.u32 %s2411, 15
              %s2475 = smul.u32 %s2473, 16
              %s2476 = smul.u32 8, %s2475
              %s2477 = scalar_lea.vmem %s2382, %s2476 [#allocation4]
              %s2478 = smul.u32 8, %s2475
              %s2479 = scalar_lea.vmem %s2415, %s2478
              // While loop
              $region112: #{contrast_vae_forward.1} parent=103 // loop_pre_header
                _
              $region113: #{contrast_vae_forward.1} parent=103 // loop_header
                %s2481 = sphi 0, %s2483
                %p2482 = scmp.ge.s32.totalorder %s2481, %s2474
                %s2486 = sphi 0, %s2493
                %s2487 = sphi %s2477, %s2496
                %s2488 = sphi %s2479, %s2497
              $region114: #{contrast_vae_forward.1} parent=103 // loop_header_branch
                %2485 = sbr.rel (%p2482) target = $region118
              $region115: #{contrast_vae_forward.1} parent=103 // loop_body
                %v2489 = vld [vmem:[%s2487] sm:$0xff]
                %2490 = vst [vmem:[%s2488] sm:$0xff] %v2489
                %s2491 = sadd.s32 1, %s2486
                %p2492 = scmp.ge.s32.totalorder %s2491, %s2474
                %s2493 = scalar_select %p2492, 0, %s2491
                %s2494 = smul.u32 %s2493, 8
                %s2495 = smul.u32 %s2493, 8
                %s2496 = scalar_lea.vmem %s2477, %s2494 [#allocation4]
                %s2497 = scalar_lea.vmem %s2479, %s2495
              $region116: #{contrast_vae_forward.1} parent=103 // loop_footer
                %s2483 = sadd.s32 %s2481, 1
              $region117: #{contrast_vae_forward.1} parent=103 // loop_footer_branch
                %2480 = sbr.rel target = $region113
              $region118: #{contrast_vae_forward.1} parent=103 // loop_exit
                _
            $region104: #{contrast_vae_forward.1} parent=95 // pred_fallthru
              _
          $region96: #{contrast_vae_forward.1} parent=91 // pred_fallthru
            _
          %2576 = vnop
        $region92: #{contrast_vae_forward.1} parent=83 // pred_fallthru
          _
      $region84: #{contrast_vae_forward.1} parent=5 // pred_fallthru
        _
      %p2577 = scmp.le.s32.totalorder 2, %s27
      // Predicated region
      $region141: #{contrast_vae_forward.1} parent=5 // pred_check
        %p2578 = pneg %p2577
      $region142: #{contrast_vae_forward.1} parent=5 // pred_check_branch
        %2580 = sbr.rel (%p2578) target = $region144
      $region143: #{contrast_vae_forward.1} parent=5 // pred_region
        %s2581 = ssub.s32 %s27, 2
        // Predicated region
        $region145: #{contrast_vae_forward.1} parent=143 // pred_check
          %p2582 = pneg %p402
        $region146: #{contrast_vae_forward.1} parent=143 // pred_check_branch
          %2584 = sbr.rel (%p2582) target = $region148
        $region147: #{contrast_vae_forward.1} parent=143 // pred_region
          %s2585 = sand.u32 %s387, 1
          %s2586 = scalar_lea.sflag [#allocation3], %s2585
          %s2587 = sand.u32 %s387, 1
          %s2588 = smul.addr %s2587, 128
          %s2589 = scalar_lea.vmem [#allocation2], %s2588
          %2590 = dma.done %s2586, 2048
        $region148: #{contrast_vae_forward.1} parent=143 // pred_fallthru
          _
        // Predicated region
        $region149: #{contrast_vae_forward.1} parent=143 // pred_check
          %p2591 = pneg %p428
        $region150: #{contrast_vae_forward.1} parent=143 // pred_check_branch
          %2593 = sbr.rel (%p2591) target = $region152
        $region151: #{contrast_vae_forward.1} parent=143 // pred_region
          %s2594 = sand.u32 %s413, 1
          %s2595 = sand.u32 %s413, 1
          %s2596 = smul.addr %s2595, 128
          %s2597 = scalar_lea.vmem [#allocation4], %s2596
        $region152: #{contrast_vae_forward.1} parent=143 // pred_fallthru
          _
      $region144: #{contrast_vae_forward.1} parent=5 // pred_fallthru
        _
    $region6: #{contrast_vae_forward.1} parent=1 // loop_footer
      %s31 = sadd.s32 1, %s27
    $region7: #{contrast_vae_forward.1} parent=1 // loop_footer_branch
      %26 = sbr.rel target = $region3
    $region8: #{contrast_vae_forward.1} parent=1 // loop_exit
      _
    %2598 = vsyncpa [#allocation3], 1
    %s2599 = scalar_lea.sflag [#allocation3], 1
    %2600 = vsyncpa %s2599, 1

</llo_original>
